<compile_context>
chip_gen: v7x
topology: tpu7x:2x2x1
jax: 0.10.0
libtpu: 0.0.40
codegen_flags: <defaults>
</compile_context>

<pallas_src>
import functools

import numpy as np
import jax
import jax.numpy as jnp
from jax.experimental import pallas as pl
from jax.experimental.pallas import tpu as pltpu

SEP_LEVELS = int(2.65 * 1000)   # 2650
SEQ = 5
FEAT = 300
HID = 128
GATES = 4 * HID                 # 512, PyTorch gate order i, f, g, o
FEAT_PAD = 384                  # 300 -> 3 * 128 lanes


def net_kernel(x_ref, emb_ref, wlin_ref, blin_ref, wih_ref, whh_ref,
               bf_ref, bb_ref, wout_ref, bout_ref, out_ref):
    tb = x_ref.shape[1]              # examples per grid step (multiple of 8)
    wdt = wlin_ref.dtype             # MXU operand dtype (f32 or bf16)

    x = x_ref[...]                                           # (SEQ, TB, 384) f32
    x_flat = x.reshape(SEQ * tb, FEAT_PAD)

    # ---- Linear(300 -> 300) + ReLU over all SEQ*TB rows at once -------------------
    after = jnp.dot(x_flat.astype(wdt), wlin_ref[...],
                    preferred_element_type=jnp.float32) + blin_ref[...]
    after = jnp.maximum(after, 0.0).reshape(SEQ, tb, FEAT_PAD)

    # ---- attention = after_linear * emb ; softmax over the sequence axis (axis 0) --
    attention = after * emb_ref[...][None, :, :]             # (SEQ, TB, 384)
    m = jnp.max(attention, axis=0, keepdims=True)
    e = jnp.exp(attention - m)
    s = jnp.sum(e, axis=0, keepdims=True)
    attn = e * pl.reciprocal(s)                              # exact reciprocal
    final_state = x * attn                                   # padded lanes stay 0

    # ---- fused input projection for both LSTM directions: (SEQ*TB,384)@(384,1024) --
    xg = jnp.dot(final_state.reshape(SEQ * tb, FEAT_PAD).astype(wdt), wih_ref[...],
                 preferred_element_type=jnp.float32).reshape(SEQ, tb, 2 * GATES)
    xg_f = xg[:, :, :GATES] + bf_ref[...]                    # (SEQ, TB, 512)
    xg_b = xg[:, :, GATES:] + bb_ref[...]                    # (SEQ, TB, 512)

    whh = whh_ref[...]                                       # (256, 1024) block-diagonal
    h = jnp.zeros((tb, 2 * HID), jnp.float32)                # [h_fwd | h_bwd]
    c_f = jnp.zeros((tb, HID), jnp.float32)
    c_b = jnp.zeros((tb, HID), jnp.float32)

    # ---- batched bidirectional recurrence: ONE matmul per timestep -----------------
    for t in range(SEQ):                                     # static unroll, SEQ = 5
        hh = jnp.dot(h.astype(wdt), whh,
                     preferred_element_type=jnp.float32)     # (TB, 1024)
        g_f = xg_f[t] + hh[:, :GATES]                        # fwd step t
        g_b = xg_b[SEQ - 1 - t] + hh[:, GATES:]              # bwd step SEQ-1-t

        i_f = jax.nn.sigmoid(g_f[:, 0:HID])
        f_f = jax.nn.sigmoid(g_f[:, HID:2 * HID])
        gg_f = jnp.tanh(g_f[:, 2 * HID:3 * HID])
        o_f = jax.nn.sigmoid(g_f[:, 3 * HID:])
        i_b = jax.nn.sigmoid(g_b[:, 0:HID])
        f_b = jax.nn.sigmoid(g_b[:, HID:2 * HID])
        gg_b = jnp.tanh(g_b[:, 2 * HID:3 * HID])
        o_b = jax.nn.sigmoid(g_b[:, 3 * HID:])

        c_f = f_f * c_f + i_f * gg_f
        c_b = f_b * c_b + i_b * gg_b
        h = jnp.concatenate([o_f * jnp.tanh(c_f), o_b * jnp.tanh(c_b)], axis=1)

    # ---- longterm = (c_n[fwd] + c_n[bwd]) / 2 ; Linear(128 -> 1), lane-dense out ---
    longterm = (c_f + c_b) * 0.5                             # (TB, 128)
    pred = jax.lax.dot_general(                              # (1,128).(TB,128)^T -> (1,TB)
        wout_ref[...], longterm,
        dimension_numbers=(((1,), (1,)), ((), ())),
        preferred_element_type=jnp.float32) + bout_ref[...]
    out_ref[...] = pred.reshape(1, 1, tb)


def _round_up(n, m):
    return ((n + m - 1) // m) * m


@functools.partial(jax.jit, static_argnames=("tb",))
def _net_pallas_batch(xs, levels, packed, tb):
    """xs: (B, 5, 300) f32; levels: (B,) int32; returns (B,) f32 predictions."""
    B = xs.shape[0]
    b_pad = _round_up(max(B, 1), tb)
    n_blk = b_pad // tb

    # Sequence-major, lane-padded activations: (SEQ, B_pad, FEAT_PAD).
    x_seq = jnp.zeros((SEQ, b_pad, FEAT_PAD), jnp.float32)
    x_seq = x_seq.at[:, :B, :FEAT].set(jnp.transpose(xs.astype(jnp.float32), (1, 0, 2)))

    # Embedding gather hoisted out of the kernel (tiny XLA gather, keeps kernel batched).
    levels = jnp.clip(levels.astype(jnp.int32), 0, SEP_LEVELS - 1)
    emb_g = jnp.zeros((b_pad, FEAT_PAD), jnp.float32)
    emb_g = emb_g.at[:B].set(packed["emb_table"][levels])

    grid_spec = pltpu.PrefetchScalarGridSpec(
        num_scalar_prefetch=0,
        grid=(n_blk,),
        in_specs=[
            pl.BlockSpec((SEQ, tb, FEAT_PAD), lambda b: (0, b, 0)),    # x (seq-major)
            pl.BlockSpec((tb, FEAT_PAD), lambda b: (b, 0)),            # gathered emb rows
            pl.BlockSpec((FEAT_PAD, FEAT_PAD), lambda b: (0, 0)),      # w_lin   (resident)
            pl.BlockSpec((1, FEAT_PAD), lambda b: (0, 0)),             # b_lin
            pl.BlockSpec((FEAT_PAD, 2 * GATES), lambda b: (0, 0)),     # w_ih fused fwd|bwd
            pl.BlockSpec((2 * HID, 2 * GATES), lambda b: (0, 0)),      # w_hh block-diagonal
            pl.BlockSpec((1, GATES), lambda b: (0, 0)),                # b fwd (b_ih+b_hh)
            pl.BlockSpec((1, GATES), lambda b: (0, 0)),                # b bwd (b_ih+b_hh)
            pl.BlockSpec((1, HID), lambda b: (0, 0)),                  # w_out row
            pl.BlockSpec((1, 1), lambda b: (0, 0)),                    # b_out
        ],
        out_specs=pl.BlockSpec((1, 1, tb), lambda b: (b, 0, 0)),
    )

    out = pl.pallas_call(
        net_kernel,
        out_shape=jax.ShapeDtypeStruct((n_blk, 1, tb), jnp.float32),
        grid_spec=grid_spec,
        compiler_params=pltpu.CompilerParams(dimension_semantics=("parallel",)),
    )(x_seq, emb_g, packed["w_lin"], packed["b_lin"], packed["w_ih"],
      packed["w_hh"], packed["b_f"], packed["b_b"], packed["w_out"], packed["b_out"])
    return out.reshape(b_pad)[:B]


def previous_y_to_level(previous_y):
    # Mirrors the PyTorch glue exactly: int(round(previous_y, 3) * 1000)
    # (intentionally reproduces its truncation behavior).
    return int(round(previous_y, 3) * 1000)


def net_forward_batch(xs, levels, packed, tb=None):
    xs = jnp.asarray(xs, jnp.float32)
    levels = jnp.asarray(levels, jnp.int32)
    if tb is None:
        # Fill MXU rows; keep grid length >= 2 for large B so both v7x TCs get work.
        tb = min(128, _round_up(int(xs.shape[0]), 8))
    return _net_pallas_batch(xs, levels, packed, tb)


def net_forward(x, previous_y, packed):
    """Single-example forward mirroring Net.forward(x, previous_y); no recompiles
    for distinct previous_y values (level is a traced array)."""
    levels = [max(0, min(SEP_LEVELS - 1, previous_y_to_level(previous_y)))]
    return net_forward_batch(jnp.asarray(x)[None], levels, packed)[0]


def init_params(key):
    """Logical (PyTorch-equivalent) params: weights pre-transposed to (in, out);
    b_f / b_b stand for (b_ih + b_hh) per direction, pre-summed; gate order i,f,g,o."""
    ks = jax.random.split(key, 11)
    scale = 0.05
    return {
        "w_lin": scale * jax.random.normal(ks[0], (FEAT, FEAT), jnp.float32),
        "b_lin": scale * jax.random.normal(ks[1], (1, FEAT), jnp.float32),
        "emb_table": scale * jax.random.normal(ks[2], (SEP_LEVELS, FEAT), jnp.float32),
        "w_ih_f": scale * jax.random.normal(ks[3], (FEAT, GATES), jnp.float32),
        "w_hh_f": scale * jax.random.normal(ks[4], (HID, GATES), jnp.float32),
        "b_f": scale * jax.random.normal(ks[5], (1, GATES), jnp.float32),
        "w_ih_b": scale * jax.random.normal(ks[6], (FEAT, GATES), jnp.float32),
        "w_hh_b": scale * jax.random.normal(ks[7], (HID, GATES), jnp.float32),
        "b_b": scale * jax.random.normal(ks[8], (1, GATES), jnp.float32),
        "w_out": scale * jax.random.normal(ks[9], (HID, 1), jnp.float32),
        "b_out": scale * jax.random.normal(ks[10], (1, 1), jnp.float32),
    }


def pack_params(p, matmul_dtype=jnp.float32):
    """Pad to hardware tiles (300->384), fuse the two LSTM input projections into one
    (384, 1024) matrix and the two recurrent matrices into one block-diagonal
    (256, 1024) matrix. `matmul_dtype` (f32 or bf16) applies to MXU operands only."""
    f32 = jnp.float32
    w_lin = jnp.zeros((FEAT_PAD, FEAT_PAD), f32).at[:FEAT, :FEAT].set(p["w_lin"])
    b_lin = jnp.zeros((1, FEAT_PAD), f32).at[:, :FEAT].set(p["b_lin"])
    emb = jnp.zeros((SEP_LEVELS, FEAT_PAD), f32).at[:, :FEAT].set(p["emb_table"])
    w_ih = jnp.zeros((FEAT_PAD, 2 * GATES), f32)
    w_ih = w_ih.at[:FEAT, :GATES].set(p["w_ih_f"]).at[:FEAT, GATES:].set(p["w_ih_b"])
    w_hh = jnp.zeros((2 * HID, 2 * GATES), f32)
    w_hh = w_hh.at[:HID, :GATES].set(p["w_hh_f"]).at[HID:, GATES:].set(p["w_hh_b"])
    return {
        "w_lin": w_lin.astype(matmul_dtype),
        "b_lin": b_lin,
        "emb_table": emb,
        "w_ih": w_ih.astype(matmul_dtype),
        "w_hh": w_hh.astype(matmul_dtype),
        "b_f": p["b_f"].astype(f32),
        "b_b": p["b_b"].astype(f32),
        "w_out": p["w_out"].T.astype(f32),     # (1, 128) row -> lane-dense output dot
        "b_out": p["b_out"].astype(f32),
    }


def net_reference(x, level, p):
    """Pure-JAX reference of Net.forward (unpadded), for correctness checking."""
    after_linear = jax.nn.relu(x @ p["w_lin"] + p["b_lin"])
    attention = after_linear * p["emb_table"][level][None, :]
    attn_softmax = jax.nn.softmax(attention, axis=0)
    final_state = x * attn_softmax

    def run_dir(w_ih, w_hh, bias, reverse):
        h = jnp.zeros((1, HID), jnp.float32)
        c = jnp.zeros((1, HID), jnp.float32)
        order = range(SEQ - 1, -1, -1) if reverse else range(SEQ)
        for t in order:
            g = final_state[t:t + 1] @ w_ih + h @ w_hh + bias
            i = jax.nn.sigmoid(g[:, 0:HID])
            f = jax.nn.sigmoid(g[:, HID:2 * HID])
            gg = jnp.tanh(g[:, 2 * HID:3 * HID])
            o = jax.nn.sigmoid(g[:, 3 * HID:4 * HID])
            c = f * c + i * gg
            h = o * jnp.tanh(c)
        return c

    c_f = run_dir(p["w_ih_f"], p["w_hh_f"], p["b_f"], False)
    c_b = run_dir(p["w_ih_b"], p["w_hh_b"], p["b_b"], True)
    longterm = (c_f + c_b) * 0.5
    return (longterm @ p["w_out"] + p["b_out"])[0, 0]


if __name__ == "__main__":
    key = jax.random.PRNGKey(0)
    pkey, xkey = jax.random.split(key)
    logical = init_params(pkey)
    packed_f32 = pack_params(logical, jnp.float32)
    packed_bf16 = pack_params(logical, jnp.bfloat16)   # v6e/v7x MXU configuration

    B = 12                                             # exercises padding + 2 grid blocks
    xs = jax.random.normal(xkey, (B, SEQ, FEAT), jnp.float32)   # (B, 5, 300) slabs
    prev_ys = [0.0, 1.234, 2.649, 0.5, 0.001, 2.0, 1.0, 0.75, 0.123, 0.456, 1.999, 2.5]
    levels = [max(0, min(SEP_LEVELS - 1, previous_y_to_level(y))) for y in prev_ys]

    out = net_forward_batch(xs, levels, packed_f32, tb=8)
    out = jax.block_until_ready(out)
    assert out.shape == (B,) and out.dtype == jnp.float32

    ref = jnp.stack([net_reference(xs[i], levels[i], logical) for i in range(B)])
    np.testing.assert_allclose(np.asarray(out), np.asarray(ref), rtol=5e-2, atol=5e-3)

    # bf16 MXU-operand variant (perf configuration for v6e/v7x); looser tolerance.
    out_bf16 = jax.block_until_ready(net_forward_batch(xs, levels, packed_bf16, tb=8))
    np.testing.assert_allclose(np.asarray(out_bf16), np.asarray(ref), rtol=2e-1, atol=5e-2)

    # Single-example path mirroring Net.forward(x, previous_y).
    single = jax.block_until_ready(net_forward(xs[0], 1.234, packed_f32))

    print("KERNEL_OK")
</pallas_src>

<mosaic_0001>
module attributes {stable_mosaic.version = 11 : i64} {
  func.func @net_kernel(%arg0: i32, %arg1: memref<5x8x384xf32, #tpu.memory_space<vmem>>, %arg2: memref<8x384xf32, #tpu.memory_space<vmem>>, %arg3: memref<384x384xf32, #tpu.memory_space<vmem>>, %arg4: memref<1x384xf32, #tpu.memory_space<vmem>>, %arg5: memref<384x1024xf32, #tpu.memory_space<vmem>>, %arg6: memref<256x1024xf32, #tpu.memory_space<vmem>>, %arg7: memref<1x512xf32, #tpu.memory_space<vmem>>, %arg8: memref<1x512xf32, #tpu.memory_space<vmem>>, %arg9: memref<1x128xf32, #tpu.memory_space<vmem>>, %arg10: memref<1x1xf32, #tpu.memory_space<vmem>>, %arg11: memref<1x1x8xf32, #tpu.memory_space<vmem>>) attributes {dimension_semantics = [#tpu.dimension_semantics<parallel>], iteration_bounds = array<i64: 2>, scalar_prefetch = 0 : i64, scratch_operands = 0 : i64, tpu.core_type = #tpu.core_type<tc>, window_params = [{transform_indices = @transform_0, window_bounds = array<i64: 5, 8, 384>}, {transform_indices = @transform_1, window_bounds = array<i64: 8, 384>}, {pipeline_mode = #tpu.pipeline_mode<synchronous>, transform_indices = @transform_2, window_bounds = array<i64: 384, 384>}, {pipeline_mode = #tpu.pipeline_mode<synchronous>, transform_indices = @transform_3, window_bounds = array<i64: 1, 384>}, {pipeline_mode = #tpu.pipeline_mode<synchronous>, transform_indices = @transform_4, window_bounds = array<i64: 384, 1024>}, {pipeline_mode = #tpu.pipeline_mode<synchronous>, transform_indices = @transform_5, window_bounds = array<i64: 256, 1024>}, {pipeline_mode = #tpu.pipeline_mode<synchronous>, transform_indices = @transform_6, window_bounds = array<i64: 1, 512>}, {pipeline_mode = #tpu.pipeline_mode<synchronous>, transform_indices = @transform_7, window_bounds = array<i64: 1, 512>}, {pipeline_mode = #tpu.pipeline_mode<synchronous>, transform_indices = @transform_8, window_bounds = array<i64: 1, 128>}, {pipeline_mode = #tpu.pipeline_mode<synchronous>, transform_indices = @transform_9, window_bounds = array<i64: 1, 1>}, {transform_indices = @transform_10, window_bounds = array<i64: 1, 1, 8>}]} {
    %c0 = arith.constant 0 : index
    %c0_0 = arith.constant 0 : index
    %c0_1 = arith.constant 0 : index
    %0 = vector.load %arg1[%c0, %c0_0, %c0_1] : memref<5x8x384xf32, #tpu.memory_space<vmem>>, vector<5x8x384xf32>
    %1 = vector.shape_cast %0 : vector<5x8x384xf32> to vector<40x384xf32>
    %c0_2 = arith.constant 0 : index
    %c0_3 = arith.constant 0 : index
    %2 = vector.load %arg3[%c0_2, %c0_3] : memref<384x384xf32, #tpu.memory_space<vmem>>, vector<384x384xf32>
    %cst = arith.constant dense<0.000000e+00> : vector<40x384xf32>
    %3 = tpu.matmul %1, %2, %cst {dimension_numbers = #tpu.dot_dimension_numbers<[1], [0], [0], [1], [0, 0, 1, 1], [], []>} : vector<40x384xf32>, vector<384x384xf32>, vector<40x384xf32> -> vector<40x384xf32>
    %c0_4 = arith.constant 0 : index
    %c0_5 = arith.constant 0 : index
    %4 = vector.load %arg4[%c0_4, %c0_5] : memref<1x384xf32, #tpu.memory_space<vmem>>, vector<1x384xf32>
    %5 = vector.broadcast %4 : vector<1x384xf32> to vector<40x384xf32>
    %6 = arith.addf %3, %5 : vector<40x384xf32>
    %cst_6 = arith.constant 0.000000e+00 : f32
    %7 = vector.broadcast %cst_6 : f32 to vector<40x384xf32>
    %8 = arith.maximumf %6, %7 : vector<40x384xf32>
    %9 = vector.shape_cast %8 : vector<40x384xf32> to vector<5x8x384xf32>
    %c0_7 = arith.constant 0 : index
    %c0_8 = arith.constant 0 : index
    %10 = vector.load %arg2[%c0_7, %c0_8] : memref<8x384xf32, #tpu.memory_space<vmem>>, vector<8x384xf32>
    %11 = vector.shape_cast %10 : vector<8x384xf32> to vector<1x8x384xf32>
    %12 = vector.broadcast %11 : vector<1x8x384xf32> to vector<5x8x384xf32>
    %13 = arith.mulf %9, %12 : vector<5x8x384xf32>
    %cst_9 = arith.constant dense<0xFF800000> : vector<8x384xf32>
    %14 = vector.multi_reduction <maximumf>, %13, %cst_9 [0] : vector<5x8x384xf32> to vector<8x384xf32>
    %15 = vector.shape_cast %14 : vector<8x384xf32> to vector<1x8x384xf32>
    %16 = vector.broadcast %15 : vector<1x8x384xf32> to vector<5x8x384xf32>
    %17 = arith.subf %13, %16 : vector<5x8x384xf32>
    %18 = math.exp %17 : vector<5x8x384xf32>
    %cst_10 = arith.constant dense<0.000000e+00> : vector<8x384xf32>
    %19 = vector.multi_reduction <add>, %18, %cst_10 [0] : vector<5x8x384xf32> to vector<8x384xf32>
    %20 = vector.shape_cast %19 : vector<8x384xf32> to vector<1x8x384xf32>
    %21 = tpu.reciprocal %20 : vector<1x8x384xf32> -> vector<1x8x384xf32>
    %22 = vector.broadcast %21 : vector<1x8x384xf32> to vector<5x8x384xf32>
    %23 = arith.mulf %18, %22 : vector<5x8x384xf32>
    %24 = arith.mulf %0, %23 : vector<5x8x384xf32>
    %25 = vector.shape_cast %24 : vector<5x8x384xf32> to vector<40x384xf32>
    %c0_11 = arith.constant 0 : index
    %c0_12 = arith.constant 0 : index
    %26 = vector.load %arg5[%c0_11, %c0_12] : memref<384x1024xf32, #tpu.memory_space<vmem>>, vector<384x1024xf32>
    %cst_13 = arith.constant dense<0.000000e+00> : vector<40x1024xf32>
    %27 = tpu.matmul %25, %26, %cst_13 {dimension_numbers = #tpu.dot_dimension_numbers<[1], [0], [0], [1], [0, 0, 1, 1], [], []>} : vector<40x384xf32>, vector<384x1024xf32>, vector<40x1024xf32> -> vector<40x1024xf32>
    %28 = vector.shape_cast %27 : vector<40x1024xf32> to vector<5x8x1024xf32>
    %29 = vector.extract_strided_slice %28 {offsets = [0, 0, 0], sizes = [5, 8, 512], strides = [1, 1, 1]} : vector<5x8x1024xf32> to vector<5x8x512xf32>
    %c0_14 = arith.constant 0 : index
    %c0_15 = arith.constant 0 : index
    %30 = vector.load %arg7[%c0_14, %c0_15] : memref<1x512xf32, #tpu.memory_space<vmem>>, vector<1x512xf32>
    %31 = vector.shape_cast %30 : vector<1x512xf32> to vector<1x1x512xf32>
    %32 = vector.broadcast %31 : vector<1x1x512xf32> to vector<5x8x512xf32>
    %33 = arith.addf %29, %32 : vector<5x8x512xf32>
    %34 = vector.extract_strided_slice %28 {offsets = [0, 0, 512], sizes = [5, 8, 512], strides = [1, 1, 1]} : vector<5x8x1024xf32> to vector<5x8x512xf32>
    %c0_16 = arith.constant 0 : index
    %c0_17 = arith.constant 0 : index
    %35 = vector.load %arg8[%c0_16, %c0_17] : memref<1x512xf32, #tpu.memory_space<vmem>>, vector<1x512xf32>
    %36 = vector.shape_cast %35 : vector<1x512xf32> to vector<1x1x512xf32>
    %37 = vector.broadcast %36 : vector<1x1x512xf32> to vector<5x8x512xf32>
    %38 = arith.addf %34, %37 : vector<5x8x512xf32>
    %c0_18 = arith.constant 0 : index
    %c0_19 = arith.constant 0 : index
    %39 = vector.load %arg6[%c0_18, %c0_19] : memref<256x1024xf32, #tpu.memory_space<vmem>>, vector<256x1024xf32>
    %cst_20 = arith.constant 0.000000e+00 : f32
    %40 = vector.broadcast %cst_20 : f32 to vector<8x256xf32>
    %cst_21 = arith.constant 0.000000e+00 : f32
    %41 = vector.broadcast %cst_21 : f32 to vector<8x128xf32>
    %cst_22 = arith.constant 0.000000e+00 : f32
    %42 = vector.broadcast %cst_22 : f32 to vector<8x128xf32>
    %cst_23 = arith.constant dense<0.000000e+00> : vector<8x1024xf32>
    %43 = tpu.matmul %40, %39, %cst_23 {dimension_numbers = #tpu.dot_dimension_numbers<[1], [0], [0], [1], [0, 0, 1, 1], [], []>} : vector<8x256xf32>, vector<256x1024xf32>, vector<8x1024xf32> -> vector<8x1024xf32>
    %44 = vector.extract_strided_slice %33 {offsets = [0, 0, 0], sizes = [1, 8, 512], strides = [1, 1, 1]} : vector<5x8x512xf32> to vector<1x8x512xf32>
    %45 = vector.shape_cast %44 : vector<1x8x512xf32> to vector<8x512xf32>
    %46 = vector.extract_strided_slice %43 {offsets = [0, 0], sizes = [8, 512], strides = [1, 1]} : vector<8x1024xf32> to vector<8x512xf32>
    %47 = arith.addf %45, %46 : vector<8x512xf32>
    %48 = vector.extract_strided_slice %38 {offsets = [4, 0, 0], sizes = [1, 8, 512], strides = [1, 1, 1]} : vector<5x8x512xf32> to vector<1x8x512xf32>
    %49 = vector.shape_cast %48 : vector<1x8x512xf32> to vector<8x512xf32>
    %50 = vector.extract_strided_slice %43 {offsets = [0, 512], sizes = [8, 512], strides = [1, 1]} : vector<8x1024xf32> to vector<8x512xf32>
    %51 = arith.addf %49, %50 : vector<8x512xf32>
    %52 = vector.extract_strided_slice %47 {offsets = [0, 0], sizes = [8, 128], strides = [1, 1]} : vector<8x512xf32> to vector<8x128xf32>
    %53 = arith.negf %52 : vector<8x128xf32>
    %54 = math.exp %53 : vector<8x128xf32>
    %cst_24 = arith.constant 1.000000e+00 : f32
    %55 = vector.broadcast %cst_24 : f32 to vector<8x128xf32>
    %56 = arith.addf %55, %54 : vector<8x128xf32>
    %57 = arith.divf %55, %56 : vector<8x128xf32>
    %58 = vector.extract_strided_slice %47 {offsets = [0, 128], sizes = [8, 128], strides = [1, 1]} : vector<8x512xf32> to vector<8x128xf32>
    %59 = arith.negf %58 : vector<8x128xf32>
    %60 = math.exp %59 : vector<8x128xf32>
    %cst_25 = arith.constant 1.000000e+00 : f32
    %61 = vector.broadcast %cst_25 : f32 to vector<8x128xf32>
    %62 = arith.addf %61, %60 : vector<8x128xf32>
    %63 = arith.divf %61, %62 : vector<8x128xf32>
    %64 = vector.extract_strided_slice %47 {offsets = [0, 256], sizes = [8, 128], strides = [1, 1]} : vector<8x512xf32> to vector<8x128xf32>
    %65 = math.tanh %64 : vector<8x128xf32>
    %66 = vector.extract_strided_slice %47 {offsets = [0, 384], sizes = [8, 128], strides = [1, 1]} : vector<8x512xf32> to vector<8x128xf32>
    %67 = arith.negf %66 : vector<8x128xf32>
    %68 = math.exp %67 : vector<8x128xf32>
    %cst_26 = arith.constant 1.000000e+00 : f32
    %69 = vector.broadcast %cst_26 : f32 to vector<8x128xf32>
    %70 = arith.addf %69, %68 : vector<8x128xf32>
    %71 = arith.divf %69, %70 : vector<8x128xf32>
    %72 = vector.extract_strided_slice %51 {offsets = [0, 0], sizes = [8, 128], strides = [1, 1]} : vector<8x512xf32> to vector<8x128xf32>
    %73 = arith.negf %72 : vector<8x128xf32>
    %74 = math.exp %73 : vector<8x128xf32>
    %cst_27 = arith.constant 1.000000e+00 : f32
    %75 = vector.broadcast %cst_27 : f32 to vector<8x128xf32>
    %76 = arith.addf %75, %74 : vector<8x128xf32>
    %77 = arith.divf %75, %76 : vector<8x128xf32>
    %78 = vector.extract_strided_slice %51 {offsets = [0, 128], sizes = [8, 128], strides = [1, 1]} : vector<8x512xf32> to vector<8x128xf32>
    %79 = arith.negf %78 : vector<8x128xf32>
    %80 = math.exp %79 : vector<8x128xf32>
    %cst_28 = arith.constant 1.000000e+00 : f32
    %81 = vector.broadcast %cst_28 : f32 to vector<8x128xf32>
    %82 = arith.addf %81, %80 : vector<8x128xf32>
    %83 = arith.divf %81, %82 : vector<8x128xf32>
    %84 = vector.extract_strided_slice %51 {offsets = [0, 256], sizes = [8, 128], strides = [1, 1]} : vector<8x512xf32> to vector<8x128xf32>
    %85 = math.tanh %84 : vector<8x128xf32>
    %86 = vector.extract_strided_slice %51 {offsets = [0, 384], sizes = [8, 128], strides = [1, 1]} : vector<8x512xf32> to vector<8x128xf32>
    %87 = arith.negf %86 : vector<8x128xf32>
    %88 = math.exp %87 : vector<8x128xf32>
    %cst_29 = arith.constant 1.000000e+00 : f32
    %89 = vector.broadcast %cst_29 : f32 to vector<8x128xf32>
    %90 = arith.addf %89, %88 : vector<8x128xf32>
    %91 = arith.divf %89, %90 : vector<8x128xf32>
    %92 = arith.mulf %63, %41 : vector<8x128xf32>
    %93 = arith.mulf %57, %65 : vector<8x128xf32>
    %94 = arith.addf %92, %93 : vector<8x128xf32>
    %95 = arith.mulf %83, %42 : vector<8x128xf32>
    %96 = arith.mulf %77, %85 : vector<8x128xf32>
    %97 = arith.addf %95, %96 : vector<8x128xf32>
    %98 = math.tanh %94 : vector<8x128xf32>
    %99 = arith.mulf %71, %98 : vector<8x128xf32>
    %100 = math.tanh %97 : vector<8x128xf32>
    %101 = arith.mulf %91, %100 : vector<8x128xf32>
    %102 = tpu.concatenate %99, %101 in 1 : vector<8x128xf32>, vector<8x128xf32> -> vector<8x256xf32>
    %cst_30 = arith.constant dense<0.000000e+00> : vector<8x1024xf32>
    %103 = tpu.matmul %102, %39, %cst_30 {dimension_numbers = #tpu.dot_dimension_numbers<[1], [0], [0], [1], [0, 0, 1, 1], [], []>} : vector<8x256xf32>, vector<256x1024xf32>, vector<8x1024xf32> -> vector<8x1024xf32>
    %104 = vector.extract_strided_slice %33 {offsets = [1, 0, 0], sizes = [1, 8, 512], strides = [1, 1, 1]} : vector<5x8x512xf32> to vector<1x8x512xf32>
    %105 = vector.shape_cast %104 : vector<1x8x512xf32> to vector<8x512xf32>
    %106 = vector.extract_strided_slice %103 {offsets = [0, 0], sizes = [8, 512], strides = [1, 1]} : vector<8x1024xf32> to vector<8x512xf32>
    %107 = arith.addf %105, %106 : vector<8x512xf32>
    %108 = vector.extract_strided_slice %38 {offsets = [3, 0, 0], sizes = [1, 8, 512], strides = [1, 1, 1]} : vector<5x8x512xf32> to vector<1x8x512xf32>
    %109 = vector.shape_cast %108 : vector<1x8x512xf32> to vector<8x512xf32>
    %110 = vector.extract_strided_slice %103 {offsets = [0, 512], sizes = [8, 512], strides = [1, 1]} : vector<8x1024xf32> to vector<8x512xf32>
    %111 = arith.addf %109, %110 : vector<8x512xf32>
    %112 = vector.extract_strided_slice %107 {offsets = [0, 0], sizes = [8, 128], strides = [1, 1]} : vector<8x512xf32> to vector<8x128xf32>
    %113 = arith.negf %112 : vector<8x128xf32>
    %114 = math.exp %113 : vector<8x128xf32>
    %cst_31 = arith.constant 1.000000e+00 : f32
    %115 = vector.broadcast %cst_31 : f32 to vector<8x128xf32>
    %116 = arith.addf %115, %114 : vector<8x128xf32>
    %117 = arith.divf %115, %116 : vector<8x128xf32>
    %118 = vector.extract_strided_slice %107 {offsets = [0, 128], sizes = [8, 128], strides = [1, 1]} : vector<8x512xf32> to vector<8x128xf32>
    %119 = arith.negf %118 : vector<8x128xf32>
    %120 = math.exp %119 : vector<8x128xf32>
    %cst_32 = arith.constant 1.000000e+00 : f32
    %121 = vector.broadcast %cst_32 : f32 to vector<8x128xf32>
    %122 = arith.addf %121, %120 : vector<8x128xf32>
    %123 = arith.divf %121, %122 : vector<8x128xf32>
    %124 = vector.extract_strided_slice %107 {offsets = [0, 256], sizes = [8, 128], strides = [1, 1]} : vector<8x512xf32> to vector<8x128xf32>
    %125 = math.tanh %124 : vector<8x128xf32>
    %126 = vector.extract_strided_slice %107 {offsets = [0, 384], sizes = [8, 128], strides = [1, 1]} : vector<8x512xf32> to vector<8x128xf32>
    %127 = arith.negf %126 : vector<8x128xf32>
    %128 = math.exp %127 : vector<8x128xf32>
    %cst_33 = arith.constant 1.000000e+00 : f32
    %129 = vector.broadcast %cst_33 : f32 to vector<8x128xf32>
    %130 = arith.addf %129, %128 : vector<8x128xf32>
    %131 = arith.divf %129, %130 : vector<8x128xf32>
    %132 = vector.extract_strided_slice %111 {offsets = [0, 0], sizes = [8, 128], strides = [1, 1]} : vector<8x512xf32> to vector<8x128xf32>
    %133 = arith.negf %132 : vector<8x128xf32>
    %134 = math.exp %133 : vector<8x128xf32>
    %cst_34 = arith.constant 1.000000e+00 : f32
    %135 = vector.broadcast %cst_34 : f32 to vector<8x128xf32>
    %136 = arith.addf %135, %134 : vector<8x128xf32>
    %137 = arith.divf %135, %136 : vector<8x128xf32>
    %138 = vector.extract_strided_slice %111 {offsets = [0, 128], sizes = [8, 128], strides = [1, 1]} : vector<8x512xf32> to vector<8x128xf32>
    %139 = arith.negf %138 : vector<8x128xf32>
    %140 = math.exp %139 : vector<8x128xf32>
    %cst_35 = arith.constant 1.000000e+00 : f32
    %141 = vector.broadcast %cst_35 : f32 to vector<8x128xf32>
    %142 = arith.addf %141, %140 : vector<8x128xf32>
    %143 = arith.divf %141, %142 : vector<8x128xf32>
    %144 = vector.extract_strided_slice %111 {offsets = [0, 256], sizes = [8, 128], strides = [1, 1]} : vector<8x512xf32> to vector<8x128xf32>
    %145 = math.tanh %144 : vector<8x128xf32>
    %146 = vector.extract_strided_slice %111 {offsets = [0, 384], sizes = [8, 128], strides = [1, 1]} : vector<8x512xf32> to vector<8x128xf32>
    %147 = arith.negf %146 : vector<8x128xf32>
    %148 = math.exp %147 : vector<8x128xf32>
    %cst_36 = arith.constant 1.000000e+00 : f32
    %149 = vector.broadcast %cst_36 : f32 to vector<8x128xf32>
    %150 = arith.addf %149, %148 : vector<8x128xf32>
    %151 = arith.divf %149, %150 : vector<8x128xf32>
    %152 = arith.mulf %123, %94 : vector<8x128xf32>
    %153 = arith.mulf %117, %125 : vector<8x128xf32>
    %154 = arith.addf %152, %153 : vector<8x128xf32>
    %155 = arith.mulf %143, %97 : vector<8x128xf32>
    %156 = arith.mulf %137, %145 : vector<8x128xf32>
    %157 = arith.addf %155, %156 : vector<8x128xf32>
    %158 = math.tanh %154 : vector<8x128xf32>
    %159 = arith.mulf %131, %158 : vector<8x128xf32>
    %160 = math.tanh %157 : vector<8x128xf32>
    %161 = arith.mulf %151, %160 : vector<8x128xf32>
    %162 = tpu.concatenate %159, %161 in 1 : vector<8x128xf32>, vector<8x128xf32> -> vector<8x256xf32>
    %cst_37 = arith.constant dense<0.000000e+00> : vector<8x1024xf32>
    %163 = tpu.matmul %162, %39, %cst_37 {dimension_numbers = #tpu.dot_dimension_numbers<[1], [0], [0], [1], [0, 0, 1, 1], [], []>} : vector<8x256xf32>, vector<256x1024xf32>, vector<8x1024xf32> -> vector<8x1024xf32>
    %164 = vector.extract_strided_slice %33 {offsets = [2, 0, 0], sizes = [1, 8, 512], strides = [1, 1, 1]} : vector<5x8x512xf32> to vector<1x8x512xf32>
    %165 = vector.shape_cast %164 : vector<1x8x512xf32> to vector<8x512xf32>
    %166 = vector.extract_strided_slice %163 {offsets = [0, 0], sizes = [8, 512], strides = [1, 1]} : vector<8x1024xf32> to vector<8x512xf32>
    %167 = arith.addf %165, %166 : vector<8x512xf32>
    %168 = vector.extract_strided_slice %38 {offsets = [2, 0, 0], sizes = [1, 8, 512], strides = [1, 1, 1]} : vector<5x8x512xf32> to vector<1x8x512xf32>
    %169 = vector.shape_cast %168 : vector<1x8x512xf32> to vector<8x512xf32>
    %170 = vector.extract_strided_slice %163 {offsets = [0, 512], sizes = [8, 512], strides = [1, 1]} : vector<8x1024xf32> to vector<8x512xf32>
    %171 = arith.addf %169, %170 : vector<8x512xf32>
    %172 = vector.extract_strided_slice %167 {offsets = [0, 0], sizes = [8, 128], strides = [1, 1]} : vector<8x512xf32> to vector<8x128xf32>
    %173 = arith.negf %172 : vector<8x128xf32>
    %174 = math.exp %173 : vector<8x128xf32>
    %cst_38 = arith.constant 1.000000e+00 : f32
    %175 = vector.broadcast %cst_38 : f32 to vector<8x128xf32>
    %176 = arith.addf %175, %174 : vector<8x128xf32>
    %177 = arith.divf %175, %176 : vector<8x128xf32>
    %178 = vector.extract_strided_slice %167 {offsets = [0, 128], sizes = [8, 128], strides = [1, 1]} : vector<8x512xf32> to vector<8x128xf32>
    %179 = arith.negf %178 : vector<8x128xf32>
    %180 = math.exp %179 : vector<8x128xf32>
    %cst_39 = arith.constant 1.000000e+00 : f32
    %181 = vector.broadcast %cst_39 : f32 to vector<8x128xf32>
    %182 = arith.addf %181, %180 : vector<8x128xf32>
    %183 = arith.divf %181, %182 : vector<8x128xf32>
    %184 = vector.extract_strided_slice %167 {offsets = [0, 256], sizes = [8, 128], strides = [1, 1]} : vector<8x512xf32> to vector<8x128xf32>
    %185 = math.tanh %184 : vector<8x128xf32>
    %186 = vector.extract_strided_slice %167 {offsets = [0, 384], sizes = [8, 128], strides = [1, 1]} : vector<8x512xf32> to vector<8x128xf32>
    %187 = arith.negf %186 : vector<8x128xf32>
    %188 = math.exp %187 : vector<8x128xf32>
    %cst_40 = arith.constant 1.000000e+00 : f32
    %189 = vector.broadcast %cst_40 : f32 to vector<8x128xf32>
    %190 = arith.addf %189, %188 : vector<8x128xf32>
    %191 = arith.divf %189, %190 : vector<8x128xf32>
    %192 = vector.extract_strided_slice %171 {offsets = [0, 0], sizes = [8, 128], strides = [1, 1]} : vector<8x512xf32> to vector<8x128xf32>
    %193 = arith.negf %192 : vector<8x128xf32>
    %194 = math.exp %193 : vector<8x128xf32>
    %cst_41 = arith.constant 1.000000e+00 : f32
    %195 = vector.broadcast %cst_41 : f32 to vector<8x128xf32>
    %196 = arith.addf %195, %194 : vector<8x128xf32>
    %197 = arith.divf %195, %196 : vector<8x128xf32>
    %198 = vector.extract_strided_slice %171 {offsets = [0, 128], sizes = [8, 128], strides = [1, 1]} : vector<8x512xf32> to vector<8x128xf32>
    %199 = arith.negf %198 : vector<8x128xf32>
    %200 = math.exp %199 : vector<8x128xf32>
    %cst_42 = arith.constant 1.000000e+00 : f32
    %201 = vector.broadcast %cst_42 : f32 to vector<8x128xf32>
    %202 = arith.addf %201, %200 : vector<8x128xf32>
    %203 = arith.divf %201, %202 : vector<8x128xf32>
    %204 = vector.extract_strided_slice %171 {offsets = [0, 256], sizes = [8, 128], strides = [1, 1]} : vector<8x512xf32> to vector<8x128xf32>
    %205 = math.tanh %204 : vector<8x128xf32>
    %206 = vector.extract_strided_slice %171 {offsets = [0, 384], sizes = [8, 128], strides = [1, 1]} : vector<8x512xf32> to vector<8x128xf32>
    %207 = arith.negf %206 : vector<8x128xf32>
    %208 = math.exp %207 : vector<8x128xf32>
    %cst_43 = arith.constant 1.000000e+00 : f32
    %209 = vector.broadcast %cst_43 : f32 to vector<8x128xf32>
    %210 = arith.addf %209, %208 : vector<8x128xf32>
    %211 = arith.divf %209, %210 : vector<8x128xf32>
    %212 = arith.mulf %183, %154 : vector<8x128xf32>
    %213 = arith.mulf %177, %185 : vector<8x128xf32>
    %214 = arith.addf %212, %213 : vector<8x128xf32>
    %215 = arith.mulf %203, %157 : vector<8x128xf32>
    %216 = arith.mulf %197, %205 : vector<8x128xf32>
    %217 = arith.addf %215, %216 : vector<8x128xf32>
    %218 = math.tanh %214 : vector<8x128xf32>
    %219 = arith.mulf %191, %218 : vector<8x128xf32>
    %220 = math.tanh %217 : vector<8x128xf32>
    %221 = arith.mulf %211, %220 : vector<8x128xf32>
    %222 = tpu.concatenate %219, %221 in 1 : vector<8x128xf32>, vector<8x128xf32> -> vector<8x256xf32>
    %cst_44 = arith.constant dense<0.000000e+00> : vector<8x1024xf32>
    %223 = tpu.matmul %222, %39, %cst_44 {dimension_numbers = #tpu.dot_dimension_numbers<[1], [0], [0], [1], [0, 0, 1, 1], [], []>} : vector<8x256xf32>, vector<256x1024xf32>, vector<8x1024xf32> -> vector<8x1024xf32>
    %224 = vector.extract_strided_slice %33 {offsets = [3, 0, 0], sizes = [1, 8, 512], strides = [1, 1, 1]} : vector<5x8x512xf32> to vector<1x8x512xf32>
    %225 = vector.shape_cast %224 : vector<1x8x512xf32> to vector<8x512xf32>
    %226 = vector.extract_strided_slice %223 {offsets = [0, 0], sizes = [8, 512], strides = [1, 1]} : vector<8x1024xf32> to vector<8x512xf32>
    %227 = arith.addf %225, %226 : vector<8x512xf32>
    %228 = vector.extract_strided_slice %38 {offsets = [1, 0, 0], sizes = [1, 8, 512], strides = [1, 1, 1]} : vector<5x8x512xf32> to vector<1x8x512xf32>
    %229 = vector.shape_cast %228 : vector<1x8x512xf32> to vector<8x512xf32>
    %230 = vector.extract_strided_slice %223 {offsets = [0, 512], sizes = [8, 512], strides = [1, 1]} : vector<8x1024xf32> to vector<8x512xf32>
    %231 = arith.addf %229, %230 : vector<8x512xf32>
    %232 = vector.extract_strided_slice %227 {offsets = [0, 0], sizes = [8, 128], strides = [1, 1]} : vector<8x512xf32> to vector<8x128xf32>
    %233 = arith.negf %232 : vector<8x128xf32>
    %234 = math.exp %233 : vector<8x128xf32>
    %cst_45 = arith.constant 1.000000e+00 : f32
    %235 = vector.broadcast %cst_45 : f32 to vector<8x128xf32>
    %236 = arith.addf %235, %234 : vector<8x128xf32>
    %237 = arith.divf %235, %236 : vector<8x128xf32>
    %238 = vector.extract_strided_slice %227 {offsets = [0, 128], sizes = [8, 128], strides = [1, 1]} : vector<8x512xf32> to vector<8x128xf32>
    %239 = arith.negf %238 : vector<8x128xf32>
    %240 = math.exp %239 : vector<8x128xf32>
    %cst_46 = arith.constant 1.000000e+00 : f32
    %241 = vector.broadcast %cst_46 : f32 to vector<8x128xf32>
    %242 = arith.addf %241, %240 : vector<8x128xf32>
    %243 = arith.divf %241, %242 : vector<8x128xf32>
    %244 = vector.extract_strided_slice %227 {offsets = [0, 256], sizes = [8, 128], strides = [1, 1]} : vector<8x512xf32> to vector<8x128xf32>
    %245 = math.tanh %244 : vector<8x128xf32>
    %246 = vector.extract_strided_slice %227 {offsets = [0, 384], sizes = [8, 128], strides = [1, 1]} : vector<8x512xf32> to vector<8x128xf32>
    %247 = arith.negf %246 : vector<8x128xf32>
    %248 = math.exp %247 : vector<8x128xf32>
    %cst_47 = arith.constant 1.000000e+00 : f32
    %249 = vector.broadcast %cst_47 : f32 to vector<8x128xf32>
    %250 = arith.addf %249, %248 : vector<8x128xf32>
    %251 = arith.divf %249, %250 : vector<8x128xf32>
    %252 = vector.extract_strided_slice %231 {offsets = [0, 0], sizes = [8, 128], strides = [1, 1]} : vector<8x512xf32> to vector<8x128xf32>
    %253 = arith.negf %252 : vector<8x128xf32>
    %254 = math.exp %253 : vector<8x128xf32>
    %cst_48 = arith.constant 1.000000e+00 : f32
    %255 = vector.broadcast %cst_48 : f32 to vector<8x128xf32>
    %256 = arith.addf %255, %254 : vector<8x128xf32>
    %257 = arith.divf %255, %256 : vector<8x128xf32>
    %258 = vector.extract_strided_slice %231 {offsets = [0, 128], sizes = [8, 128], strides = [1, 1]} : vector<8x512xf32> to vector<8x128xf32>
    %259 = arith.negf %258 : vector<8x128xf32>
    %260 = math.exp %259 : vector<8x128xf32>
    %cst_49 = arith.constant 1.000000e+00 : f32
    %261 = vector.broadcast %cst_49 : f32 to vector<8x128xf32>
    %262 = arith.addf %261, %260 : vector<8x128xf32>
    %263 = arith.divf %261, %262 : vector<8x128xf32>
    %264 = vector.extract_strided_slice %231 {offsets = [0, 256], sizes = [8, 128], strides = [1, 1]} : vector<8x512xf32> to vector<8x128xf32>
    %265 = math.tanh %264 : vector<8x128xf32>
    %266 = vector.extract_strided_slice %231 {offsets = [0, 384], sizes = [8, 128], strides = [1, 1]} : vector<8x512xf32> to vector<8x128xf32>
    %267 = arith.negf %266 : vector<8x128xf32>
    %268 = math.exp %267 : vector<8x128xf32>
    %cst_50 = arith.constant 1.000000e+00 : f32
    %269 = vector.broadcast %cst_50 : f32 to vector<8x128xf32>
    %270 = arith.addf %269, %268 : vector<8x128xf32>
    %271 = arith.divf %269, %270 : vector<8x128xf32>
    %272 = arith.mulf %243, %214 : vector<8x128xf32>
    %273 = arith.mulf %237, %245 : vector<8x128xf32>
    %274 = arith.addf %272, %273 : vector<8x128xf32>
    %275 = arith.mulf %263, %217 : vector<8x128xf32>
    %276 = arith.mulf %257, %265 : vector<8x128xf32>
    %277 = arith.addf %275, %276 : vector<8x128xf32>
    %278 = math.tanh %274 : vector<8x128xf32>
    %279 = arith.mulf %251, %278 : vector<8x128xf32>
    %280 = math.tanh %277 : vector<8x128xf32>
    %281 = arith.mulf %271, %280 : vector<8x128xf32>
    %282 = tpu.concatenate %279, %281 in 1 : vector<8x128xf32>, vector<8x128xf32> -> vector<8x256xf32>
    %cst_51 = arith.constant dense<0.000000e+00> : vector<8x1024xf32>
    %283 = tpu.matmul %282, %39, %cst_51 {dimension_numbers = #tpu.dot_dimension_numbers<[1], [0], [0], [1], [0, 0, 1, 1], [], []>} : vector<8x256xf32>, vector<256x1024xf32>, vector<8x1024xf32> -> vector<8x1024xf32>
    %284 = vector.extract_strided_slice %33 {offsets = [4, 0, 0], sizes = [1, 8, 512], strides = [1, 1, 1]} : vector<5x8x512xf32> to vector<1x8x512xf32>
    %285 = vector.shape_cast %284 : vector<1x8x512xf32> to vector<8x512xf32>
    %286 = vector.extract_strided_slice %283 {offsets = [0, 0], sizes = [8, 512], strides = [1, 1]} : vector<8x1024xf32> to vector<8x512xf32>
    %287 = arith.addf %285, %286 : vector<8x512xf32>
    %288 = vector.extract_strided_slice %38 {offsets = [0, 0, 0], sizes = [1, 8, 512], strides = [1, 1, 1]} : vector<5x8x512xf32> to vector<1x8x512xf32>
    %289 = vector.shape_cast %288 : vector<1x8x512xf32> to vector<8x512xf32>
    %290 = vector.extract_strided_slice %283 {offsets = [0, 512], sizes = [8, 512], strides = [1, 1]} : vector<8x1024xf32> to vector<8x512xf32>
    %291 = arith.addf %289, %290 : vector<8x512xf32>
    %292 = vector.extract_strided_slice %287 {offsets = [0, 0], sizes = [8, 128], strides = [1, 1]} : vector<8x512xf32> to vector<8x128xf32>
    %293 = arith.negf %292 : vector<8x128xf32>
    %294 = math.exp %293 : vector<8x128xf32>
    %cst_52 = arith.constant 1.000000e+00 : f32
    %295 = vector.broadcast %cst_52 : f32 to vector<8x128xf32>
    %296 = arith.addf %295, %294 : vector<8x128xf32>
    %297 = arith.divf %295, %296 : vector<8x128xf32>
    %298 = vector.extract_strided_slice %287 {offsets = [0, 128], sizes = [8, 128], strides = [1, 1]} : vector<8x512xf32> to vector<8x128xf32>
    %299 = arith.negf %298 : vector<8x128xf32>
    %300 = math.exp %299 : vector<8x128xf32>
    %cst_53 = arith.constant 1.000000e+00 : f32
    %301 = vector.broadcast %cst_53 : f32 to vector<8x128xf32>
    %302 = arith.addf %301, %300 : vector<8x128xf32>
    %303 = arith.divf %301, %302 : vector<8x128xf32>
    %304 = vector.extract_strided_slice %287 {offsets = [0, 256], sizes = [8, 128], strides = [1, 1]} : vector<8x512xf32> to vector<8x128xf32>
    %305 = math.tanh %304 : vector<8x128xf32>
    %306 = vector.extract_strided_slice %291 {offsets = [0, 0], sizes = [8, 128], strides = [1, 1]} : vector<8x512xf32> to vector<8x128xf32>
    %307 = arith.negf %306 : vector<8x128xf32>
    %308 = math.exp %307 : vector<8x128xf32>
    %cst_54 = arith.constant 1.000000e+00 : f32
    %309 = vector.broadcast %cst_54 : f32 to vector<8x128xf32>
    %310 = arith.addf %309, %308 : vector<8x128xf32>
    %311 = arith.divf %309, %310 : vector<8x128xf32>
    %312 = vector.extract_strided_slice %291 {offsets = [0, 128], sizes = [8, 128], strides = [1, 1]} : vector<8x512xf32> to vector<8x128xf32>
    %313 = arith.negf %312 : vector<8x128xf32>
    %314 = math.exp %313 : vector<8x128xf32>
    %cst_55 = arith.constant 1.000000e+00 : f32
    %315 = vector.broadcast %cst_55 : f32 to vector<8x128xf32>
    %316 = arith.addf %315, %314 : vector<8x128xf32>
    %317 = arith.divf %315, %316 : vector<8x128xf32>
    %318 = vector.extract_strided_slice %291 {offsets = [0, 256], sizes = [8, 128], strides = [1, 1]} : vector<8x512xf32> to vector<8x128xf32>
    %319 = math.tanh %318 : vector<8x128xf32>
    %320 = arith.mulf %303, %274 : vector<8x128xf32>
    %321 = arith.mulf %297, %305 : vector<8x128xf32>
    %322 = arith.addf %320, %321 : vector<8x128xf32>
    %323 = arith.mulf %317, %277 : vector<8x128xf32>
    %324 = arith.mulf %311, %319 : vector<8x128xf32>
    %325 = arith.addf %323, %324 : vector<8x128xf32>
    %326 = arith.addf %322, %325 : vector<8x128xf32>
    %cst_56 = arith.constant 5.000000e-01 : f32
    %327 = vector.broadcast %cst_56 : f32 to vector<8x128xf32>
    %328 = arith.mulf %326, %327 : vector<8x128xf32>
    %c0_57 = arith.constant 0 : index
    %c0_58 = arith.constant 0 : index
    %329 = vector.load %arg9[%c0_57, %c0_58] : memref<1x128xf32, #tpu.memory_space<vmem>>, vector<1x128xf32>
    %cst_59 = arith.constant dense<0.000000e+00> : vector<1x8xf32>
    %330 = tpu.matmul %329, %328, %cst_59 {dimension_numbers = #tpu.dot_dimension_numbers<[1], [1], [0], [0], [0, 0, 1, 0], [], []>} : vector<1x128xf32>, vector<8x128xf32>, vector<1x8xf32> -> vector<1x8xf32>
    %c0_60 = arith.constant 0 : index
    %c0_61 = arith.constant 0 : index
    %331 = vector.load %arg10[%c0_60, %c0_61] : memref<1x1xf32, #tpu.memory_space<vmem>>, vector<1x1xf32>
    %332 = vector.broadcast %331 : vector<1x1xf32> to vector<1x8xf32>
    %333 = arith.addf %330, %332 : vector<1x8xf32>
    %334 = vector.shape_cast %333 : vector<1x8xf32> to vector<1x1x8xf32>
    %c0_62 = arith.constant 0 : index
    %c0_63 = arith.constant 0 : index
    %c0_64 = arith.constant 0 : index
    %335 = vector.load %arg11[%c0_62, %c0_63, %c0_64] : memref<1x1x8xf32, #tpu.memory_space<vmem>>, vector<1x1x8xf32>
    tpu.vector_store %arg11[%c0_62, %c0_63, %c0_64], %334 {strides = array<i32>} : memref<1x1x8xf32, #tpu.memory_space<vmem>>, vector<1x1x8xf32>,
    return
  }
  func.func @transform_0(%arg0: i32) -> (i32, i32, i32) {
    %c0_i32 = arith.constant 0 : i32
    %c0_i32_0 = arith.constant 0 : i32
    %c0_i32_1 = arith.constant 0 : i32
    return %c0_i32, %arg0, %c0_i32_0 : i32, i32, i32
  }
  func.func @transform_1(%arg0: i32) -> (i32, i32) {
    %c0_i32 = arith.constant 0 : i32
    %c0_i32_0 = arith.constant 0 : i32
    return %arg0, %c0_i32 : i32, i32
  }
  func.func @transform_2(%arg0: i32) -> (i32, i32) {
    %c0_i32 = arith.constant 0 : i32
    %c0_i32_0 = arith.constant 0 : i32
    %c0_i32_1 = arith.constant 0 : i32
    return %c0_i32, %c0_i32_0 : i32, i32
  }
  func.func @transform_3(%arg0: i32) -> (i32, i32) {
    %c0_i32 = arith.constant 0 : i32
    %c0_i32_0 = arith.constant 0 : i32
    %c0_i32_1 = arith.constant 0 : i32
    return %c0_i32, %c0_i32_0 : i32, i32
  }
  func.func @transform_4(%arg0: i32) -> (i32, i32) {
    %c0_i32 = arith.constant 0 : i32
    %c0_i32_0 = arith.constant 0 : i32
    %c0_i32_1 = arith.constant 0 : i32
    return %c0_i32, %c0_i32_0 : i32, i32
  }
  func.func @transform_5(%arg0: i32) -> (i32, i32) {
    %c0_i32 = arith.constant 0 : i32
    %c0_i32_0 = arith.constant 0 : i32
    %c0_i32_1 = arith.constant 0 : i32
    return %c0_i32, %c0_i32_0 : i32, i32
  }
  func.func @transform_6(%arg0: i32) -> (i32, i32) {
    %c0_i32 = arith.constant 0 : i32
    %c0_i32_0 = arith.constant 0 : i32
    %c0_i32_1 = arith.constant 0 : i32
    return %c0_i32, %c0_i32_0 : i32, i32
  }
  func.func @transform_7(%arg0: i32) -> (i32, i32) {
    %c0_i32 = arith.constant 0 : i32
    %c0_i32_0 = arith.constant 0 : i32
    %c0_i32_1 = arith.constant 0 : i32
    return %c0_i32, %c0_i32_0 : i32, i32
  }
  func.func @transform_8(%arg0: i32) -> (i32, i32) {
    %c0_i32 = arith.constant 0 : i32
    %c0_i32_0 = arith.constant 0 : i32
    %c0_i32_1 = arith.constant 0 : i32
    return %c0_i32, %c0_i32_0 : i32, i32
  }
  func.func @transform_9(%arg0: i32) -> (i32, i32) {
    %c0_i32 = arith.constant 0 : i32
    %c0_i32_0 = arith.constant 0 : i32
    %c0_i32_1 = arith.constant 0 : i32
    return %c0_i32, %c0_i32_0 : i32, i32
  }
  func.func @transform_10(%arg0: i32) -> (i32, i32, i32) {
    %c0_i32 = arith.constant 0 : i32
    %c0_i32_0 = arith.constant 0 : i32
    %c0_i32_1 = arith.constant 0 : i32
    return %arg0, %c0_i32, %c0_i32_0 : i32, i32, i32
  }
}

</mosaic_0001>

<llo_original>
// kernel: _net_pallas_batch.1
$region0: #{_net_pallas_batch.1}
  #allocation0 [shape = 'u32[]', space=smem, size = 0x4, offset = 0x4, fixed_abs, tag = 'smem constant byte address 0x4 - core index']
  #allocation1 [shape = 'u32[144,128]{1,0:T(1,128)}', space=vmem, size = 0x12000, scoped, tag = 'internal scratch']
  #allocation2 [shape = 'f32[1,1]{1,0:T(1,128)S(1)}', space=vmem, size = 0x200, scoped, tag = 'scoped memory for _net_pallas_batch.1']
  %s0 = inlined_call_operand.vmem [shape: f32[5,16,384], index: 0, kind: input, shape index: {}]
  %s1 = inlined_call_operand.vmem [shape: f32[16,384], index: 1, kind: input, shape index: {}]
  %s2 = inlined_call_operand.hbm [shape: f32[384,384], index: 2, kind: input, shape index: {}]
  %s3 = inlined_call_operand.hbm [shape: f32[1,384], index: 3, kind: input, shape index: {}]
  %s4 = inlined_call_operand.hbm [shape: f32[384,1024], index: 4, kind: input, shape index: {}]
  %s5 = inlined_call_operand.hbm [shape: f32[256,1024], index: 5, kind: input, shape index: {}]
  %s6 = inlined_call_operand.hbm [shape: f32[1,512], index: 6, kind: input, shape index: {}]
  %s7 = inlined_call_operand.hbm [shape: f32[1,512], index: 7, kind: input, shape index: {}]
  %s8 = inlined_call_operand.hbm [shape: f32[1,128], index: 8, kind: input, shape index: {}]
  %s9 = inlined_call_operand.<no memory space> [shape: f32[1,1], index: 9, kind: input, shape index: {}]
  %s10 = inlined_call_operand.vmem [shape: f32[2,1,8], index: 10, kind: output, shape index: {}]
  %s11 = sld [smem:[#allocation0]]
  $region124: #{_net_pallas_batch.1} parent=0
    _
  %s13 = ssub.s32 1, %s11
  %s14 = scalar_select 0, %s13, %s11
  %v15 = vstv %s9
  %16 = vst [vmem:[#allocation2] sm:$0x1] %v15
  $region1: #{_net_pallas_batch.1} parent=0
    #allocation3 [shape = 'u8[122880]{0}', space=vmem, size = 0x1e000, scoped, tag = 'input window, operand 0']
    #allocation4 [shape = 'u8[589824]{0}', space=vmem, size = 0x90000, scoped, tag = 'input window, operand 2, single buffered']
    #allocation5 [shape = 's32[2]{0}', space=sflag, size = 0x8, scoped, tag = 'scoped memory for _net_pallas_batch.1']
    #allocation6 [shape = 'u8[1536]{0}', space=vmem, size = 0x800, scoped, tag = 'input window, operand 3, single buffered']
    #allocation7 [shape = 's32[1]{0}', space=sflag, size = 0x4, scoped, tag = 'scoped memory for _net_pallas_batch.1']
    #allocation8 [shape = 'u8[1572864]{0}', space=vmem, size = 0x180000, scoped, tag = 'input window, operand 4, single buffered']
    #allocation9 [shape = 'u8[1048576]{0}', space=vmem, size = 0x100000, scoped, tag = 'input window, operand 5, single buffered']
    #allocation10 [shape = 's32[1]{0}', space=sflag, size = 0x4, scoped, tag = 'scoped memory for _net_pallas_batch.1']
    #allocation11 [shape = 'u8[2048]{0}', space=vmem, size = 0x800, scoped, tag = 'input window, operand 6, single buffered']
    #allocation12 [shape = 'u8[2048]{0}', space=vmem, size = 0x800, scoped, tag = 'input window, operand 7, single buffered']
    #allocation13 [shape = 's32[1]{0}', space=sflag, size = 0x4, scoped, tag = 'scoped memory for _net_pallas_batch.1']
    #allocation14 [shape = 'u8[512]{0}', space=vmem, size = 0x400, scoped, tag = 'input window, operand 8, single buffered']
    %17 = vsyncpa [#allocation5], 0
    %18 = vsyncpa [#allocation7], 0
    %19 = vsyncpa [#allocation10], 0
    %20 = vsyncpa [#allocation13], 0
    loop: start=0, step=1, limit=4
    $region2: #{_net_pallas_batch.1} parent=1 // loop_pre_header
      _
    $region3: #{_net_pallas_batch.1} parent=1 // loop_header
      %s22 = sphi 0, %s26
      %p23 = scmp.ge.s32.totalorder %s22, 4
      %s32 = sphi 0, %s34
      %s35 = sphi 0, %s32
      %s36 = sphi 0, %s35
      %s52 = sphi 0, %s36
      %s58 = sphi 0, %s60
      %s61 = sphi 0, %s58
      %s62 = sphi 0, %s61
      %s78 = sphi 0, %s62
      %s82 = sphi 0, %s82
      %s84 = sphi 0, %s82
      %s85 = sphi 0, %s84
      %s99 = sphi 0, %s85
      %s103 = sphi 0, %s103
      %s105 = sphi 0, %s103
      %s106 = sphi 0, %s105
      %s120 = sphi 0, %s106
      %s124 = sphi 0, %s124
      %s126 = sphi 0, %s124
      %s127 = sphi 0, %s126
      %s141 = sphi 0, %s127
      %s145 = sphi 0, %s145
      %s147 = sphi 0, %s145
      %s148 = sphi 0, %s147
      %s162 = sphi 0, %s148
      %s166 = sphi 0, %s166
      %s168 = sphi 0, %s166
      %s169 = sphi 0, %s168
      %s183 = sphi 0, %s169
      %s187 = sphi 0, %s187
      %s189 = sphi 0, %s187
      %s190 = sphi 0, %s189
      %s204 = sphi 0, %s190
      %s208 = sphi 0, %s208
      %s210 = sphi 0, %s208
      %s211 = sphi 0, %s210
      %s225 = sphi 0, %s211
      %s229 = sphi 0, %s229
      %s231 = sphi 0, %s229
      %s232 = sphi 0, %s231
      %s246 = sphi 0, %s232
      %s252 = sphi 0, %s254
      %s255 = sphi 0, %s252
      %s256 = sphi 0, %s255
      %s272 = sphi 0, %s256
    $region4: #{_net_pallas_batch.1} parent=1 // loop_header_branch
      %25 = sbr.rel (%p23) target = $region8
    $region5: #{_net_pallas_batch.1} parent=1 // loop_body
      %s27 = ssub.s32 %s22, 1
      %s28 = ssub.s32 %s22, 2
      %s29 = sadd.s32 %s22, 1
      %s30 = ssub.s32 %s22, %s29
      %p31 = scmp.eq.s32.totalorder %s30, 0
      %s33 = sadd.s32 %s32, 1
      %s34 = scalar_select %p31, %s32, %s33
      %p37 = pneg %p31
      %p38 = scmp.eq.s32.totalorder %s22, 1
      %p39 = por %p37, %p38
      %p40 = scmp.ne.s32.totalorder %s32, %s35
      %p41 = scmp.eq.s32.totalorder %s22, 0
      %p42 = por %p40, %p41
      %p43 = scmp.ne.s32.totalorder %s32, %s35
      %p44 = scmp.eq.s32.totalorder %s27, 1
      %p45 = por %p43, %p44
      %p46 = scmp.ne.s32.totalorder %s35, %s36
      %p47 = scmp.eq.s32.totalorder %s27, 0
      %p48 = por %p46, %p47
      %p49 = scmp.ne.s32.totalorder %s35, %s36
      %p50 = scmp.eq.s32.totalorder %s28, 1
      %p51 = por %p49, %p50
      %p53 = scmp.ne.s32.totalorder %s36, %s52
      %p54 = scmp.eq.s32.totalorder %s28, 0
      %p55 = por %p53, %p54
      %s56 = ssub.s32 %s22, %s29
      %p57 = scmp.eq.s32.totalorder %s56, 0
      %s59 = sadd.s32 %s58, 1
      %s60 = scalar_select %p57, %s58, %s59
      %p63 = pneg %p57
      %p64 = scmp.eq.s32.totalorder %s22, 1
      %p65 = por %p63, %p64
      %p66 = scmp.ne.s32.totalorder %s58, %s61
      %p67 = scmp.eq.s32.totalorder %s22, 0
      %p68 = por %p66, %p67
      %p69 = scmp.ne.s32.totalorder %s58, %s61
      %p70 = scmp.eq.s32.totalorder %s27, 1
      %p71 = por %p69, %p70
      %p72 = scmp.ne.s32.totalorder %s61, %s62
      %p73 = scmp.eq.s32.totalorder %s27, 0
      %p74 = por %p72, %p73
      %p75 = scmp.ne.s32.totalorder %s61, %s62
      %p76 = scmp.eq.s32.totalorder %s28, 1
      %p77 = por %p75, %p76
      %p79 = scmp.ne.s32.totalorder %s62, %s78
      %p80 = scmp.eq.s32.totalorder %s28, 0
      %p81 = por %p79, %p80
      %s83 = sadd.s32 %s82, 1
      %p86 = scmp.eq.s32.totalorder %s22, 1
      %p87 = scmp.ne.s32.totalorder %s82, %s84
      %p88 = scmp.eq.s32.totalorder %s22, 0
      %p89 = por %p87, %p88
      %p90 = scmp.ne.s32.totalorder %s82, %s84
      %p91 = scmp.eq.s32.totalorder %s27, 1
      %p92 = por %p90, %p91
      %p93 = scmp.ne.s32.totalorder %s84, %s85
      %p94 = scmp.eq.s32.totalorder %s27, 0
      %p95 = por %p93, %p94
      %p96 = scmp.ne.s32.totalorder %s84, %s85
      %p97 = scmp.eq.s32.totalorder %s28, 1
      %p98 = por %p96, %p97
      %p100 = scmp.ne.s32.totalorder %s85, %s99
      %p101 = scmp.eq.s32.totalorder %s28, 0
      %p102 = por %p100, %p101
      %s104 = sadd.s32 %s103, 1
      %p107 = scmp.eq.s32.totalorder %s22, 1
      %p108 = scmp.ne.s32.totalorder %s103, %s105
      %p109 = scmp.eq.s32.totalorder %s22, 0
      %p110 = por %p108, %p109
      %p111 = scmp.ne.s32.totalorder %s103, %s105
      %p112 = scmp.eq.s32.totalorder %s27, 1
      %p113 = por %p111, %p112
      %p114 = scmp.ne.s32.totalorder %s105, %s106
      %p115 = scmp.eq.s32.totalorder %s27, 0
      %p116 = por %p114, %p115
      %p117 = scmp.ne.s32.totalorder %s105, %s106
      %p118 = scmp.eq.s32.totalorder %s28, 1
      %p119 = por %p117, %p118
      %p121 = scmp.ne.s32.totalorder %s106, %s120
      %p122 = scmp.eq.s32.totalorder %s28, 0
      %p123 = por %p121, %p122
      %s125 = sadd.s32 %s124, 1
      %p128 = scmp.eq.s32.totalorder %s22, 1
      %p129 = scmp.ne.s32.totalorder %s124, %s126
      %p130 = scmp.eq.s32.totalorder %s22, 0
      %p131 = por %p129, %p130
      %p132 = scmp.ne.s32.totalorder %s124, %s126
      %p133 = scmp.eq.s32.totalorder %s27, 1
      %p134 = por %p132, %p133
      %p135 = scmp.ne.s32.totalorder %s126, %s127
      %p136 = scmp.eq.s32.totalorder %s27, 0
      %p137 = por %p135, %p136
      %p138 = scmp.ne.s32.totalorder %s126, %s127
      %p139 = scmp.eq.s32.totalorder %s28, 1
      %p140 = por %p138, %p139
      %p142 = scmp.ne.s32.totalorder %s127, %s141
      %p143 = scmp.eq.s32.totalorder %s28, 0
      %p144 = por %p142, %p143
      %s146 = sadd.s32 %s145, 1
      %p149 = scmp.eq.s32.totalorder %s22, 1
      %p150 = scmp.ne.s32.totalorder %s145, %s147
      %p151 = scmp.eq.s32.totalorder %s22, 0
      %p152 = por %p150, %p151
      %p153 = scmp.ne.s32.totalorder %s145, %s147
      %p154 = scmp.eq.s32.totalorder %s27, 1
      %p155 = por %p153, %p154
      %p156 = scmp.ne.s32.totalorder %s147, %s148
      %p157 = scmp.eq.s32.totalorder %s27, 0
      %p158 = por %p156, %p157
      %p159 = scmp.ne.s32.totalorder %s147, %s148
      %p160 = scmp.eq.s32.totalorder %s28, 1
      %p161 = por %p159, %p160
      %p163 = scmp.ne.s32.totalorder %s148, %s162
      %p164 = scmp.eq.s32.totalorder %s28, 0
      %p165 = por %p163, %p164
      %s167 = sadd.s32 %s166, 1
      %p170 = scmp.eq.s32.totalorder %s22, 1
      %p171 = scmp.ne.s32.totalorder %s166, %s168
      %p172 = scmp.eq.s32.totalorder %s22, 0
      %p173 = por %p171, %p172
      %p174 = scmp.ne.s32.totalorder %s166, %s168
      %p175 = scmp.eq.s32.totalorder %s27, 1
      %p176 = por %p174, %p175
      %p177 = scmp.ne.s32.totalorder %s168, %s169
      %p178 = scmp.eq.s32.totalorder %s27, 0
      %p179 = por %p177, %p178
      %p180 = scmp.ne.s32.totalorder %s168, %s169
      %p181 = scmp.eq.s32.totalorder %s28, 1
      %p182 = por %p180, %p181
      %p184 = scmp.ne.s32.totalorder %s169, %s183
      %p185 = scmp.eq.s32.totalorder %s28, 0
      %p186 = por %p184, %p185
      %s188 = sadd.s32 %s187, 1
      %p191 = scmp.eq.s32.totalorder %s22, 1
      %p192 = scmp.ne.s32.totalorder %s187, %s189
      %p193 = scmp.eq.s32.totalorder %s22, 0
      %p194 = por %p192, %p193
      %p195 = scmp.ne.s32.totalorder %s187, %s189
      %p196 = scmp.eq.s32.totalorder %s27, 1
      %p197 = por %p195, %p196
      %p198 = scmp.ne.s32.totalorder %s189, %s190
      %p199 = scmp.eq.s32.totalorder %s27, 0
      %p200 = por %p198, %p199
      %p201 = scmp.ne.s32.totalorder %s189, %s190
      %p202 = scmp.eq.s32.totalorder %s28, 1
      %p203 = por %p201, %p202
      %p205 = scmp.ne.s32.totalorder %s190, %s204
      %p206 = scmp.eq.s32.totalorder %s28, 0
      %p207 = por %p205, %p206
      %s209 = sadd.s32 %s208, 1
      %p212 = scmp.eq.s32.totalorder %s22, 1
      %p213 = scmp.ne.s32.totalorder %s208, %s210
      %p214 = scmp.eq.s32.totalorder %s22, 0
      %p215 = por %p213, %p214
      %p216 = scmp.ne.s32.totalorder %s208, %s210
      %p217 = scmp.eq.s32.totalorder %s27, 1
      %p218 = por %p216, %p217
      %p219 = scmp.ne.s32.totalorder %s210, %s211
      %p220 = scmp.eq.s32.totalorder %s27, 0
      %p221 = por %p219, %p220
      %p222 = scmp.ne.s32.totalorder %s210, %s211
      %p223 = scmp.eq.s32.totalorder %s28, 1
      %p224 = por %p222, %p223
      %p226 = scmp.ne.s32.totalorder %s211, %s225
      %p227 = scmp.eq.s32.totalorder %s28, 0
      %p228 = por %p226, %p227
      %s230 = sadd.s32 %s229, 1
      %p233 = scmp.eq.s32.totalorder %s22, 1
      %p234 = scmp.ne.s32.totalorder %s229, %s231
      %p235 = scmp.eq.s32.totalorder %s22, 0
      %p236 = por %p234, %p235
      %p237 = scmp.ne.s32.totalorder %s229, %s231
      %p238 = scmp.eq.s32.totalorder %s27, 1
      %p239 = por %p237, %p238
      %p240 = scmp.ne.s32.totalorder %s231, %s232
      %p241 = scmp.eq.s32.totalorder %s27, 0
      %p242 = por %p240, %p241
      %p243 = scmp.ne.s32.totalorder %s231, %s232
      %p244 = scmp.eq.s32.totalorder %s28, 1
      %p245 = por %p243, %p244
      %p247 = scmp.ne.s32.totalorder %s232, %s246
      %p248 = scmp.eq.s32.totalorder %s28, 0
      %p249 = por %p247, %p248
      %s250 = ssub.s32 %s22, %s29
      %p251 = scmp.eq.s32.totalorder %s250, 0
      %s253 = sadd.s32 %s252, 1
      %s254 = scalar_select %p251, %s252, %s253
      %p257 = pneg %p251
      %p258 = scmp.eq.s32.totalorder %s22, 1
      %p259 = por %p257, %p258
      %p260 = scmp.ne.s32.totalorder %s252, %s255
      %p261 = scmp.eq.s32.totalorder %s22, 0
      %p262 = por %p260, %p261
      %p263 = scmp.ne.s32.totalorder %s252, %s255
      %p264 = scmp.eq.s32.totalorder %s27, 1
      %p265 = por %p263, %p264
      %p266 = scmp.ne.s32.totalorder %s255, %s256
      %p267 = scmp.eq.s32.totalorder %s27, 0
      %p268 = por %p266, %p267
      %p269 = scmp.ne.s32.totalorder %s255, %s256
      %p270 = scmp.eq.s32.totalorder %s28, 1
      %p271 = por %p269, %p270
      %p273 = scmp.ne.s32.totalorder %s256, %s272
      %p274 = scmp.eq.s32.totalorder %s28, 0
      %p275 = por %p273, %p274
      %p276 = scmp.le.s32.totalorder 1, %s22
      %p277 = scmp.lt.s32.totalorder %s22, 3
      %p278 = pnand %p276, %p277
      %p279 = pneg %p278
      // Predicated region
      $region9: #{_net_pallas_batch.1} parent=5 // pred_check
        _
      $region10: #{_net_pallas_batch.1} parent=5 // pred_check_branch
        %281 = sbr.rel (%p278) target = $region12
      $region11: #{_net_pallas_batch.1} parent=5 // pred_region
        %s282 = ssub.s32 %s22, 1
        // Predicated region
        $region13: #{_net_pallas_batch.1} parent=11 // pred_check
          %p283 = pneg %p95
        $region14: #{_net_pallas_batch.1} parent=11 // pred_check_branch
          %285 = sbr.rel (%p283) target = $region16
        $region15: #{_net_pallas_batch.1} parent=11 // pred_region
          %s287 = ssub.s32 18432, 18432
          %288 = vsyncadd [#allocation5], %s287
          %s289 = sshll.u32 [#allocation4], 4
          %s290 = int_to_ptr.vmem [resolvable:$true] %s289
          %295 = dma.hbm_to_vmem [thread:$0]  %s2, 18432, %s290, [#allocation5], 384, 384, 24
        $region16: #{_net_pallas_batch.1} parent=11 // pred_fallthru
          _
        // Predicated region
        $region17: #{_net_pallas_batch.1} parent=11 // pred_check
          %p296 = pneg %p116
        $region18: #{_net_pallas_batch.1} parent=11 // pred_check_branch
          %298 = sbr.rel (%p296) target = $region20
        $region19: #{_net_pallas_batch.1} parent=11 // pred_region
          %s300 = ssub.s32 48, 48
          %301 = vsyncadd [#allocation7], %s300
          %s303 = sshll.u32 [#allocation6], 4
          %s304 = int_to_ptr.vmem [resolvable:$true] %s303
          %306 = dma.hbm_to_vmem [thread:$0]  %s3, 48, %s304, [#allocation7]
        $region20: #{_net_pallas_batch.1} parent=11 // pred_fallthru
          _
        // Predicated region
        $region21: #{_net_pallas_batch.1} parent=11 // pred_check
          %p307 = pneg %p137
        $region22: #{_net_pallas_batch.1} parent=11 // pred_check_branch
          %309 = sbr.rel (%p307) target = $region24
        $region23: #{_net_pallas_batch.1} parent=11 // pred_region
          %s311 = ssub.s32 49152, 49152
          %312 = vsyncadd [#allocation7], %s311
          %s313 = sshll.u32 [#allocation8], 4
          %s314 = int_to_ptr.vmem [resolvable:$true] %s313
          %319 = dma.hbm_to_vmem [thread:$0]  %s4, 49152, %s314, [#allocation7], 1024, 1024, 64
        $region24: #{_net_pallas_batch.1} parent=11 // pred_fallthru
          _
        // Predicated region
        $region25: #{_net_pallas_batch.1} parent=11 // pred_check
          %p320 = pneg %p158
        $region26: #{_net_pallas_batch.1} parent=11 // pred_check_branch
          %322 = sbr.rel (%p320) target = $region28
        $region27: #{_net_pallas_batch.1} parent=11 // pred_region
          %s324 = ssub.s32 32768, 32768
          %325 = vsyncadd [#allocation10], %s324
          %s326 = sshll.u32 [#allocation9], 4
          %s327 = int_to_ptr.vmem [resolvable:$true] %s326
          %332 = dma.hbm_to_vmem [thread:$0]  %s5, 32768, %s327, [#allocation10], 1024, 1024, 64
        $region28: #{_net_pallas_batch.1} parent=11 // pred_fallthru
          _
        // Predicated region
        $region29: #{_net_pallas_batch.1} parent=11 // pred_check
          %p333 = pneg %p179
        $region30: #{_net_pallas_batch.1} parent=11 // pred_check_branch
          %335 = sbr.rel (%p333) target = $region32
        $region31: #{_net_pallas_batch.1} parent=11 // pred_region
          %s337 = ssub.s32 64, 64
          %338 = vsyncadd [#allocation10], %s337
          %s340 = sshll.u32 [#allocation11], 4
          %s341 = int_to_ptr.vmem [resolvable:$true] %s340
          %343 = dma.hbm_to_vmem [thread:$0]  %s6, 64, %s341, [#allocation10]
        $region32: #{_net_pallas_batch.1} parent=11 // pred_fallthru
          _
        // Predicated region
        $region33: #{_net_pallas_batch.1} parent=11 // pred_check
          %p344 = pneg %p200
        $region34: #{_net_pallas_batch.1} parent=11 // pred_check_branch
          %346 = sbr.rel (%p344) target = $region36
        $region35: #{_net_pallas_batch.1} parent=11 // pred_region
          %s348 = ssub.s32 64, 64
          %349 = vsyncadd [#allocation13], %s348
          %s351 = sshll.u32 [#allocation12], 4
          %s352 = int_to_ptr.vmem [resolvable:$true] %s351
          %354 = dma.hbm_to_vmem [thread:$0]  %s7, 64, %s352, [#allocation13]
        $region36: #{_net_pallas_batch.1} parent=11 // pred_fallthru
          _
        // Predicated region
        $region37: #{_net_pallas_batch.1} parent=11 // pred_check
          %p355 = pneg %p221
        $region38: #{_net_pallas_batch.1} parent=11 // pred_check_branch
          %357 = sbr.rel (%p355) target = $region40
        $region39: #{_net_pallas_batch.1} parent=11 // pred_region
          %s359 = ssub.s32 16, 16
          %360 = vsyncadd [#allocation13], %s359
          %s362 = sshll.u32 [#allocation14], 4
          %s363 = int_to_ptr.vmem [resolvable:$true] %s362
          %365 = dma.hbm_to_vmem [thread:$0]  %s8, 16, %s363, [#allocation13]
        $region40: #{_net_pallas_batch.1} parent=11 // pred_fallthru
          _
        // Predicated region
        $region41: #{_net_pallas_batch.1} parent=11 // pred_check
          %p366 = pneg %p242
        $region42: #{_net_pallas_batch.1} parent=11 // pred_check_branch
          %368 = sbr.rel (%p366) target = $region44
        $region43: #{_net_pallas_batch.1} parent=11 // pred_region
          _
        $region44: #{_net_pallas_batch.1} parent=11 // pred_fallthru
          _
      $region12: #{_net_pallas_batch.1} parent=5 // pred_fallthru
        _
      %p369 = scmp.lt.s32.totalorder %s22, 2
      // Predicated region
      $region45: #{_net_pallas_batch.1} parent=5 // pred_check
        %p370 = pneg %p369
      $region46: #{_net_pallas_batch.1} parent=5 // pred_check_branch
        %372 = sbr.rel (%p370) target = $region48
      $region47: #{_net_pallas_batch.1} parent=5 // pred_region
        // Predicated region
        $region49: #{_net_pallas_batch.1} parent=47 // pred_check
          %p373 = pneg %p42
        $region50: #{_net_pallas_batch.1} parent=47 // pred_check_branch
          %375 = sbr.rel (%p373) target = $region52
        $region51: #{_net_pallas_batch.1} parent=47 // pred_region
          %s376 = sand.u32 %s32, 1
          %s377 = sand.u32 %s32, 1
          %s378 = smul.addr %s377, 120
          %s379 = scalar_lea.vmem [#allocation3], %s378
          %s380 = smul.addr %s22, 3
          %s381 = smul.addr %s380, 8
          %s382 = scalar_lea.vmem %s0, %s381
          // Predicated region
          $region53: #{_net_pallas_batch.1} parent=51 // pred_check
            _
          $region54: #{_net_pallas_batch.1} parent=51 // pred_check_branch
            %384 = sbr.rel (0) target = $region56
          $region55: #{_net_pallas_batch.1} parent=51 // pred_region
            // Predicated region
            $region57: #{_net_pallas_batch.1} parent=55 // pred_check
              _
            $region58: #{_net_pallas_batch.1} parent=55 // pred_check_branch
              %386 = sbr.rel (0) target = $region60
            $region59: #{_net_pallas_batch.1} parent=55 // pred_region
              loop: start=0, step=1, limit=1
              $region61: #{_net_pallas_batch.1} parent=59 // loop_pre_header
                _
              $region62: #{_net_pallas_batch.1} parent=59 // loop_header
                %s388 = sphi 0, %s392
                %p389 = scmp.ge.s32.totalorder %s388, 1
                %s393 = sphi %s382, %s382
                %s394 = sphi %s379, %s379
              $region63: #{_net_pallas_batch.1} parent=59 // loop_header_branch
                %391 = sbr.rel (%p389) target = $region67
              $region64: #{_net_pallas_batch.1} parent=59 // loop_body
                %v395 = vld [vmem:[%s393] sm:$0xff]
                %396 = vst [vmem:[%s394] sm:$0xff] %v395
                %v397 = vld [vmem:[%s393 + $0x8] sm:$0xff]
                %398 = vst [vmem:[%s394 + $0x8] sm:$0xff] %v397
                %v399 = vld [vmem:[%s393 + $0x10] sm:$0xff]
                %400 = vst [vmem:[%s394 + $0x10] sm:$0xff] %v399
                %v401 = vld [vmem:[%s393 + $0x30] sm:$0xff]
                %402 = vst [vmem:[%s394 + $0x18] sm:$0xff] %v401
                %v403 = vld [vmem:[%s393 + $0x38] sm:$0xff]
                %404 = vst [vmem:[%s394 + $0x20] sm:$0xff] %v403
                %v405 = vld [vmem:[%s393 + $0x40] sm:$0xff]
                %406 = vst [vmem:[%s394 + $0x28] sm:$0xff] %v405
                %v407 = vld [vmem:[%s393 + $0x60] sm:$0xff]
                %408 = vst [vmem:[%s394 + $0x30] sm:$0xff] %v407
                %v409 = vld [vmem:[%s393 + $0x68] sm:$0xff]
                %410 = vst [vmem:[%s394 + $0x38] sm:$0xff] %v409
                %v411 = vld [vmem:[%s393 + $0x70] sm:$0xff]
                %412 = vst [vmem:[%s394 + $0x40] sm:$0xff] %v411
                %v413 = vld [vmem:[%s393 + $0x90] sm:$0xff]
                %414 = vst [vmem:[%s394 + $0x48] sm:$0xff] %v413
                %v415 = vld [vmem:[%s393 + $0x98] sm:$0xff]
                %416 = vst [vmem:[%s394 + $0x50] sm:$0xff] %v415
                %v417 = vld [vmem:[%s393 + $0xa0] sm:$0xff]
                %418 = vst [vmem:[%s394 + $0x58] sm:$0xff] %v417
                %v419 = vld [vmem:[%s393 + $0xc0] sm:$0xff]
                %420 = vst [vmem:[%s394 + $0x60] sm:$0xff] %v419
                %v421 = vld [vmem:[%s393 + $0xc8] sm:$0xff]
                %422 = vst [vmem:[%s394 + $0x68] sm:$0xff] %v421
                %v423 = vld [vmem:[%s393 + $0xd0] sm:$0xff]
                %424 = vst [vmem:[%s394 + $0x70] sm:$0xff] %v423
              $region65: #{_net_pallas_batch.1} parent=59 // loop_footer
                %s392 = sadd.s32 1, %s388
              $region66: #{_net_pallas_batch.1} parent=59 // loop_footer_branch
                %387 = sbr.rel target = $region62
              $region67: #{_net_pallas_batch.1} parent=59 // loop_exit
                _
            $region60: #{_net_pallas_batch.1} parent=55 // pred_fallthru
              _
            // Predicated region
            $region68: #{_net_pallas_batch.1} parent=55 // pred_check
              _
            $region69: #{_net_pallas_batch.1} parent=55 // pred_check_branch
              %426 = sbr.rel target = $region71
            $region70: #{_net_pallas_batch.1} parent=55 // pred_region
              _
            $region71: #{_net_pallas_batch.1} parent=55 // pred_fallthru
              _
          $region56: #{_net_pallas_batch.1} parent=51 // pred_fallthru
            _
          %427 = vnop
        $region52: #{_net_pallas_batch.1} parent=47 // pred_fallthru
          _
        // Predicated region
        $region72: #{_net_pallas_batch.1} parent=47 // pred_check
          %p428 = pneg %p68
        $region73: #{_net_pallas_batch.1} parent=47 // pred_check_branch
          %430 = sbr.rel (%p428) target = $region75
        $region74: #{_net_pallas_batch.1} parent=47 // pred_region
          %p431 = scmp.lt.s32.totalorder %s22, 1
          %s432 = scalar_select %p431, %s22, 1
          %s433 = smul.addr %s432, 3
          %s434 = smul.addr %s433, 8
          %s435 = scalar_lea.vmem %s1, %s434
        $region75: #{_net_pallas_batch.1} parent=47 // pred_fallthru
          _
      $region48: #{_net_pallas_batch.1} parent=5 // pred_fallthru
        _
      %p436 = scmp.le.s32.totalorder 1, %s22
      %p437 = scmp.lt.s32.totalorder %s22, 3
      %p438 = pnand %p436, %p437
      %p439 = pneg %p438
      // Predicated region
      $region76: #{_net_pallas_batch.1} parent=5 // pred_check
        _
      $region77: #{_net_pallas_batch.1} parent=5 // pred_check_branch
        %441 = sbr.rel (%p438) target = $region79
      $region78: #{_net_pallas_batch.1} parent=5 // pred_region
        %s442 = ssub.s32 %s22, 1
        %s443 = sand.u32 %s35, 1
        %s444 = sand.u32 %s35, 1
        %s445 = smul.addr %s444, 120
        %s446 = scalar_lea.vmem [#allocation3], %s445
        // Predicated region
        $region80: #{_net_pallas_batch.1} parent=78 // pred_check
          %p447 = pneg %p48
        $region81: #{_net_pallas_batch.1} parent=78 // pred_check_branch
          %449 = sbr.rel (%p447) target = $region83
        $region82: #{_net_pallas_batch.1} parent=78 // pred_region
          _
        $region83: #{_net_pallas_batch.1} parent=78 // pred_fallthru
          _
        // Predicated region
        $region84: #{_net_pallas_batch.1} parent=78 // pred_check
          %p450 = pneg %p95
        $region85: #{_net_pallas_batch.1} parent=78 // pred_check_branch
          %452 = sbr.rel (%p450) target = $region87
        $region86: #{_net_pallas_batch.1} parent=78 // pred_region
          %453 = dma.done [#allocation5], 18432
        $region87: #{_net_pallas_batch.1} parent=78 // pred_fallthru
          _
        // Predicated region
        $region88: #{_net_pallas_batch.1} parent=78 // pred_check
          %p454 = pneg %p116
        $region89: #{_net_pallas_batch.1} parent=78 // pred_check_branch
          %456 = sbr.rel (%p454) target = $region91
        $region90: #{_net_pallas_batch.1} parent=78 // pred_region
          %457 = dma.done [#allocation7], 48
        $region91: #{_net_pallas_batch.1} parent=78 // pred_fallthru
          _
        // Predicated region
        $region92: #{_net_pallas_batch.1} parent=78 // pred_check
          %p458 = pneg %p137
        $region93: #{_net_pallas_batch.1} parent=78 // pred_check_branch
          %460 = sbr.rel (%p458) target = $region95
        $region94: #{_net_pallas_batch.1} parent=78 // pred_region
          %461 = dma.done [#allocation7], 49152
        $region95: #{_net_pallas_batch.1} parent=78 // pred_fallthru
          _
        // Predicated region
        $region96: #{_net_pallas_batch.1} parent=78 // pred_check
          %p462 = pneg %p158
        $region97: #{_net_pallas_batch.1} parent=78 // pred_check_branch
          %464 = sbr.rel (%p462) target = $region99
        $region98: #{_net_pallas_batch.1} parent=78 // pred_region
          %465 = dma.done [#allocation10], 32768
        $region99: #{_net_pallas_batch.1} parent=78 // pred_fallthru
          _
        // Predicated region
        $region100: #{_net_pallas_batch.1} parent=78 // pred_check
          %p466 = pneg %p179
        $region101: #{_net_pallas_batch.1} parent=78 // pred_check_branch
          %468 = sbr.rel (%p466) target = $region103
        $region102: #{_net_pallas_batch.1} parent=78 // pred_region
          %469 = dma.done [#allocation10], 64
        $region103: #{_net_pallas_batch.1} parent=78 // pred_fallthru
          _
        // Predicated region
        $region104: #{_net_pallas_batch.1} parent=78 // pred_check
          %p470 = pneg %p200
        $region105: #{_net_pallas_batch.1} parent=78 // pred_check_branch
          %472 = sbr.rel (%p470) target = $region107
        $region106: #{_net_pallas_batch.1} parent=78 // pred_region
          %473 = dma.done [#allocation13], 64
        $region107: #{_net_pallas_batch.1} parent=78 // pred_fallthru
          _
        // Predicated region
        $region108: #{_net_pallas_batch.1} parent=78 // pred_check
          %p474 = pneg %p221
        $region109: #{_net_pallas_batch.1} parent=78 // pred_check_branch
          %476 = sbr.rel (%p474) target = $region111
        $region110: #{_net_pallas_batch.1} parent=78 // pred_region
          %477 = dma.done [#allocation13], 16
        $region111: #{_net_pallas_batch.1} parent=78 // pred_fallthru
          _
        %s478 = sand.u32 %s35, 1
        %s479 = sand.u32 %s35, 1
        %s480 = smul.addr %s479, 120
        %s481 = scalar_lea.vmem [#allocation3], %s480
        %p482 = pneg %p48
        %p483 = pneg %p45
        %p484 = scmp.lt.s32.totalorder %s27, 1
        %s485 = scalar_select %p484, %s27, 1
        %s486 = smul.addr %s485, 3
        %s487 = smul.addr %s486, 8
        %s488 = scalar_lea.vmem %s1, %s487
        %p489 = pneg %p74
        %p490 = pneg %p71
        %p491 = pneg %p95
        %p492 = pneg %p92
        %p493 = pneg %p116
        %p494 = pneg %p113
        %p495 = pneg %p137
        %p496 = pneg %p134
        %p497 = pneg %p158
        %p498 = pneg %p155
        %p499 = pneg %p179
        %p500 = pneg %p176
        %p501 = pneg %p200
        %p502 = pneg %p197
        %p503 = pneg %p221
        %p504 = pneg %p218
        %p505 = pneg %p242
        %p506 = pneg %p239
        %p507 = pneg %p268
        %p508 = pneg %p265
        %p509 = scmp.lt.s32.totalorder %s27, 1
        %s510 = scalar_select %p509, %s27, 1
        %s511 = scalar_lea.vmem %s10, %s510
        %p512 = scmp.lt.s32.totalorder %s27, 1
        %s513 = scalar_select %p512, %s27, 1
        %s514 = smul.addr %s513, 3
        %s515 = smul.addr %s514, 8
        %s516 = scalar_lea.vmem %s1, %s515
        %p517 = scmp.lt.s32.totalorder %s27, 1
        %s518 = scalar_select %p517, %s27, 1
        %s519 = scalar_lea.vmem %s10, %s518
        %v520 = vld [vmem:[%s446] sm:$0xff]
        %v521 = vld [vmem:[%s446 + $0x8] sm:$0xff]
        %v522 = vld [vmem:[%s446 + $0x10] sm:$0xff]
        %v523 = vld [vmem:[%s446 + $0x18] sm:$0xff]
        %v524 = vld [vmem:[%s446 + $0x20] sm:$0xff]
        %v525 = vld [vmem:[%s446 + $0x28] sm:$0xff]
        %v526 = vld [vmem:[%s446 + $0x30] sm:$0xff]
        %v527 = vld [vmem:[%s446 + $0x38] sm:$0xff]
        %v528 = vld [vmem:[%s446 + $0x40] sm:$0xff]
        %v529 = vld [vmem:[%s446 + $0x48] sm:$0xff]
        %v530 = vld [vmem:[%s446 + $0x50] sm:$0xff]
        %v531 = vld [vmem:[%s446 + $0x58] sm:$0xff]
        %v532 = vld [vmem:[%s446 + $0x60] sm:$0xff]
        %v533 = vld [vmem:[%s446 + $0x68] sm:$0xff]
        %v534 = vld [vmem:[%s446 + $0x70] sm:$0xff]
        %v535 = vld [vmem:[#allocation4] sm:$0xff]
        %v536 = vld [vmem:[#allocation4 + $0x8] sm:$0xff]
        %v537 = vld [vmem:[#allocation4 + $0x10] sm:$0xff]
        %v538 = vld [vmem:[#allocation4 + $0x18] sm:$0xff]
        %v539 = vld [vmem:[#allocation4 + $0x20] sm:$0xff]
        %v540 = vld [vmem:[#allocation4 + $0x28] sm:$0xff]
        %v541 = vld [vmem:[#allocation4 + $0x30] sm:$0xff]
        %v542 = vld [vmem:[#allocation4 + $0x38] sm:$0xff]
        %v543 = vld [vmem:[#allocation4 + $0x40] sm:$0xff]
        %v544 = vld [vmem:[#allocation4 + $0x48] sm:$0xff]
        %v545 = vld [vmem:[#allocation4 + $0x50] sm:$0xff]
        %v546 = vld [vmem:[#allocation4 + $0x58] sm:$0xff]
        %v547 = vld [vmem:[#allocation4 + $0x60] sm:$0xff]
        %v548 = vld [vmem:[#allocation4 + $0x68] sm:$0xff]
        %v549 = vld [vmem:[#allocation4 + $0x70] sm:$0xff]
        %v550 = vld [vmem:[#allocation4 + $0x78] sm:$0xff]
        %v551 = vld [vmem:[#allocation4 + $0x80] sm:$0xff]
        %v552 = vld [vmem:[#allocation4 + $0x88] sm:$0xff]
        %v553 = vld [vmem:[#allocation4 + $0x90] sm:$0xff]
        %v554 = vld [vmem:[#allocation4 + $0x98] sm:$0xff]
        %v555 = vld [vmem:[#allocation4 + $0xa0] sm:$0xff]
        %v556 = vld [vmem:[#allocation4 + $0xa8] sm:$0xff]
        %v557 = vld [vmem:[#allocation4 + $0xb0] sm:$0xff]
        %v558 = vld [vmem:[#allocation4 + $0xb8] sm:$0xff]
        %v559 = vld [vmem:[#allocation4 + $0xc0] sm:$0xff]
        %v560 = vld [vmem:[#allocation4 + $0xc8] sm:$0xff]
        %v561 = vld [vmem:[#allocation4 + $0xd0] sm:$0xff]
        %v562 = vld [vmem:[#allocation4 + $0xd8] sm:$0xff]
        %v563 = vld [vmem:[#allocation4 + $0xe0] sm:$0xff]
        %v564 = vld [vmem:[#allocation4 + $0xe8] sm:$0xff]
        %v565 = vld [vmem:[#allocation4 + $0xf0] sm:$0xff]
        %v566 = vld [vmem:[#allocation4 + $0xf8] sm:$0xff]
        %v567 = vld [vmem:[#allocation4 + $0x100] sm:$0xff]
        %v568 = vld [vmem:[#allocation4 + $0x108] sm:$0xff]
        %v569 = vld [vmem:[#allocation4 + $0x110] sm:$0xff]
        %v570 = vld [vmem:[#allocation4 + $0x118] sm:$0xff]
        %v571 = vld [vmem:[#allocation4 + $0x120] sm:$0xff]
        %v572 = vld [vmem:[#allocation4 + $0x128] sm:$0xff]
        %v573 = vld [vmem:[#allocation4 + $0x130] sm:$0xff]
        %v574 = vld [vmem:[#allocation4 + $0x138] sm:$0xff]
        %v575 = vld [vmem:[#allocation4 + $0x140] sm:$0xff]
        %v576 = vld [vmem:[#allocation4 + $0x148] sm:$0xff]
        %v577 = vld [vmem:[#allocation4 + $0x150] sm:$0xff]
        %v578 = vld [vmem:[#allocation4 + $0x158] sm:$0xff]
        %v579 = vld [vmem:[#allocation4 + $0x160] sm:$0xff]
        %v580 = vld [vmem:[#allocation4 + $0x168] sm:$0xff]
        %v581 = vld [vmem:[#allocation4 + $0x170] sm:$0xff]
        %v582 = vld [vmem:[#allocation4 + $0x178] sm:$0xff]
        %v583 = vld [vmem:[#allocation4 + $0x180] sm:$0xff]
        %v584 = vld [vmem:[#allocation4 + $0x188] sm:$0xff]
        %v585 = vld [vmem:[#allocation4 + $0x190] sm:$0xff]
        %v586 = vld [vmem:[#allocation4 + $0x198] sm:$0xff]
        %v587 = vld [vmem:[#allocation4 + $0x1a0] sm:$0xff]
        %v588 = vld [vmem:[#allocation4 + $0x1a8] sm:$0xff]
        %v589 = vld [vmem:[#allocation4 + $0x1b0] sm:$0xff]
        %v590 = vld [vmem:[#allocation4 + $0x1b8] sm:$0xff]
        %v591 = vld [vmem:[#allocation4 + $0x1c0] sm:$0xff]
        %v592 = vld [vmem:[#allocation4 + $0x1c8] sm:$0xff]
        %v593 = vld [vmem:[#allocation4 + $0x1d0] sm:$0xff]
        %v594 = vld [vmem:[#allocation4 + $0x1d8] sm:$0xff]
        %v595 = vld [vmem:[#allocation4 + $0x1e0] sm:$0xff]
        %v596 = vld [vmem:[#allocation4 + $0x1e8] sm:$0xff]
        %v597 = vld [vmem:[#allocation4 + $0x1f0] sm:$0xff]
        %v598 = vld [vmem:[#allocation4 + $0x1f8] sm:$0xff]
        %v599 = vld [vmem:[#allocation4 + $0x200] sm:$0xff]
        %v600 = vld [vmem:[#allocation4 + $0x208] sm:$0xff]
        %v601 = vld [vmem:[#allocation4 + $0x210] sm:$0xff]
        %v602 = vld [vmem:[#allocation4 + $0x218] sm:$0xff]
        %v603 = vld [vmem:[#allocation4 + $0x220] sm:$0xff]
        %v604 = vld [vmem:[#allocation4 + $0x228] sm:$0xff]
        %v605 = vld [vmem:[#allocation4 + $0x230] sm:$0xff]
        %v606 = vld [vmem:[#allocation4 + $0x238] sm:$0xff]
        %v607 = vld [vmem:[#allocation4 + $0x240] sm:$0xff]
        %v608 = vld [vmem:[#allocation4 + $0x248] sm:$0xff]
        %v609 = vld [vmem:[#allocation4 + $0x250] sm:$0xff]
        %v610 = vld [vmem:[#allocation4 + $0x258] sm:$0xff]
        %v611 = vld [vmem:[#allocation4 + $0x260] sm:$0xff]
        %v612 = vld [vmem:[#allocation4 + $0x268] sm:$0xff]
        %v613 = vld [vmem:[#allocation4 + $0x270] sm:$0xff]
        %v614 = vld [vmem:[#allocation4 + $0x278] sm:$0xff]
        %v615 = vld [vmem:[#allocation4 + $0x280] sm:$0xff]
        %v616 = vld [vmem:[#allocation4 + $0x288] sm:$0xff]
        %v617 = vld [vmem:[#allocation4 + $0x290] sm:$0xff]
        %v618 = vld [vmem:[#allocation4 + $0x298] sm:$0xff]
        %v619 = vld [vmem:[#allocation4 + $0x2a0] sm:$0xff]
        %v620 = vld [vmem:[#allocation4 + $0x2a8] sm:$0xff]
        %v621 = vld [vmem:[#allocation4 + $0x2b0] sm:$0xff]
        %v622 = vld [vmem:[#allocation4 + $0x2b8] sm:$0xff]
        %v623 = vld [vmem:[#allocation4 + $0x2c0] sm:$0xff]
        %v624 = vld [vmem:[#allocation4 + $0x2c8] sm:$0xff]
        %v625 = vld [vmem:[#allocation4 + $0x2d0] sm:$0xff]
        %v626 = vld [vmem:[#allocation4 + $0x2d8] sm:$0xff]
        %v627 = vld [vmem:[#allocation4 + $0x2e0] sm:$0xff]
        %v628 = vld [vmem:[#allocation4 + $0x2e8] sm:$0xff]
        %v629 = vld [vmem:[#allocation4 + $0x2f0] sm:$0xff]
        %v630 = vld [vmem:[#allocation4 + $0x2f8] sm:$0xff]
        %v631 = vld [vmem:[#allocation4 + $0x300] sm:$0xff]
        %v632 = vld [vmem:[#allocation4 + $0x308] sm:$0xff]
        %v633 = vld [vmem:[#allocation4 + $0x310] sm:$0xff]
        %v634 = vld [vmem:[#allocation4 + $0x318] sm:$0xff]
        %v635 = vld [vmem:[#allocation4 + $0x320] sm:$0xff]
        %v636 = vld [vmem:[#allocation4 + $0x328] sm:$0xff]
        %v637 = vld [vmem:[#allocation4 + $0x330] sm:$0xff]
        %v638 = vld [vmem:[#allocation4 + $0x338] sm:$0xff]
        %v639 = vld [vmem:[#allocation4 + $0x340] sm:$0xff]
        %v640 = vld [vmem:[#allocation4 + $0x348] sm:$0xff]
        %v641 = vld [vmem:[#allocation4 + $0x350] sm:$0xff]
        %v642 = vld [vmem:[#allocation4 + $0x358] sm:$0xff]
        %v643 = vld [vmem:[#allocation4 + $0x360] sm:$0xff]
        %v644 = vld [vmem:[#allocation4 + $0x368] sm:$0xff]
        %v645 = vld [vmem:[#allocation4 + $0x370] sm:$0xff]
        %v646 = vld [vmem:[#allocation4 + $0x378] sm:$0xff]
        %v647 = vld [vmem:[#allocation4 + $0x380] sm:$0xff]
        %v648 = vld [vmem:[#allocation4 + $0x388] sm:$0xff]
        %v649 = vld [vmem:[#allocation4 + $0x390] sm:$0xff]
        %v650 = vld [vmem:[#allocation4 + $0x398] sm:$0xff]
        %v651 = vld [vmem:[#allocation4 + $0x3a0] sm:$0xff]
        %v652 = vld [vmem:[#allocation4 + $0x3a8] sm:$0xff]
        %v653 = vld [vmem:[#allocation4 + $0x3b0] sm:$0xff]
        %v654 = vld [vmem:[#allocation4 + $0x3b8] sm:$0xff]
        %v655 = vld [vmem:[#allocation4 + $0x3c0] sm:$0xff]
        %v656 = vld [vmem:[#allocation4 + $0x3c8] sm:$0xff]
        %v657 = vld [vmem:[#allocation4 + $0x3d0] sm:$0xff]
        %v658 = vld [vmem:[#allocation4 + $0x3d8] sm:$0xff]
        %v659 = vld [vmem:[#allocation4 + $0x3e0] sm:$0xff]
        %v660 = vld [vmem:[#allocation4 + $0x3e8] sm:$0xff]
        %v661 = vld [vmem:[#allocation4 + $0x3f0] sm:$0xff]
        %v662 = vld [vmem:[#allocation4 + $0x3f8] sm:$0xff]
        %v663 = vld [vmem:[#allocation4 + $0x400] sm:$0xff]
        %v664 = vld [vmem:[#allocation4 + $0x408] sm:$0xff]
        %v665 = vld [vmem:[#allocation4 + $0x410] sm:$0xff]
        %v666 = vld [vmem:[#allocation4 + $0x418] sm:$0xff]
        %v667 = vld [vmem:[#allocation4 + $0x420] sm:$0xff]
        %v668 = vld [vmem:[#allocation4 + $0x428] sm:$0xff]
        %v669 = vld [vmem:[#allocation4 + $0x430] sm:$0xff]
        %v670 = vld [vmem:[#allocation4 + $0x438] sm:$0xff]
        %v671 = vld [vmem:[#allocation4 + $0x440] sm:$0xff]
        %v672 = vld [vmem:[#allocation4 + $0x448] sm:$0xff]
        %v673 = vld [vmem:[#allocation4 + $0x450] sm:$0xff]
        %v674 = vld [vmem:[#allocation4 + $0x458] sm:$0xff]
        %v675 = vld [vmem:[#allocation4 + $0x460] sm:$0xff]
        %v676 = vld [vmem:[#allocation4 + $0x468] sm:$0xff]
        %v677 = vld [vmem:[#allocation4 + $0x470] sm:$0xff]
        %v678 = vld [vmem:[#allocation4 + $0x478] sm:$0xff]
        %v679 = vld [vmem:[#allocation6] sm:$0x7]
        %v681 = vlaneseq
        %v682 = vshrl.u32 %v681, 7
        %v683 = vsub.s32 0, %v682
        %v684 = vrot.slane %v679, %v683
        %v685 = vlaneseq
        %v686 = vshrl.u32 %v685, 7
        %v687 = vsub.s32 1, %v686
        %v688 = vrot.slane %v679, %v687
        %v689 = vlaneseq
        %v690 = vshrl.u32 %v689, 7
        %v691 = vsub.s32 2, %v690
        %v692 = vrot.slane %v679, %v691
        %696 = vmatprep.subr.mxu0 %v536
        %697 = vmatpush1.msra.mxu0 %v535
        %698 = vmatprep.subr.mxu0 %v539
        %699 = vmatpush1.msra.mxu0 %v538
        %700 = vmatprep.subr.mxu0 %v542
        %701 = vmatpush1.msra.mxu0 %v541
        %702 = vmatprep.subr.mxu0 %v545
        %703 = vmatpush1.msra.mxu0 %v544
        %704 = vmatprep.subr.mxu0 %v548
        %705 = vmatpush1.msra.mxu0 %v547
        %706 = vmatprep.subr.mxu0 %v551
        %707 = vmatpush1.msra.mxu0 %v550
        %708 = vmatprep.subr.mxu0 %v554
        %709 = vmatpush1.msra.mxu0 %v553
        %710 = vmatprep.subr.mxu0 %v557
        %711 = vmatpush1.msra.mxu0 %v556
        %712 = vmatprep.subr.mxu0 %v560
        %713 = vmatpush1.msra.mxu0 %v559
        %714 = vmatprep.subr.mxu0 %v563
        %715 = vmatpush1.msra.mxu0 %v562
        %716 = vmatprep.subr.mxu0 %v566
        %717 = vmatpush1.msra.mxu0 %v565
        %718 = vmatprep.subr.mxu0 %v569
        %719 = vmatpush1.msra.mxu0 %v568
        %720 = vmatprep.subr.mxu0 %v572
        %721 = vmatpush1.msra.mxu0 %v571
        %722 = vmatprep.subr.mxu0 %v575
        %723 = vmatpush1.msra.mxu0 %v574
        %724 = vmatprep.subr.mxu0 %v578
        %725 = vmatpush1.msra.mxu0 %v577
        %726 = vmatprep.subr.mxu0 %v581
        %727 = vmatpush1.msra.mxu0 %v580
        %728 = vmatprep.subr.mxu0 %v584
        %729 = vmatpush1.msra.mxu0 %v583
        %730 = vmatprep.subr.mxu0 %v587
        %731 = vmatpush1.msra.mxu0 %v586
        %732 = vmatprep.subr.mxu0 %v590
        %733 = vmatpush1.msra.mxu0 %v589
        %734 = vmatprep.subr.mxu0 %v593
        %735 = vmatpush1.msra.mxu0 %v592
        %736 = vmatprep.subr.mxu0 %v596
        %737 = vmatpush1.msra.mxu0 %v595
        %738 = vmatprep.subr.mxu0 %v599
        %739 = vmatpush1.msra.mxu0 %v598
        %740 = vmatprep.subr.mxu0 %v602
        %741 = vmatpush1.msra.mxu0 %v601
        %742 = vmatprep.subr.mxu0 %v605
        %743 = vmatpush1.msra.mxu0 %v604
        %744 = vmatprep.subr.mxu0 %v608
        %745 = vmatpush1.msra.mxu0 %v607
        %746 = vmatprep.subr.mxu0 %v611
        %747 = vmatpush1.msra.mxu0 %v610
        %748 = vmatprep.subr.mxu0 %v614
        %749 = vmatpush1.msra.mxu0 %v613
        %750 = vmatprep.subr.mxu0 %v617
        %751 = vmatpush1.msra.mxu0 %v616
        %752 = vmatprep.subr.mxu0 %v620
        %753 = vmatpush1.msra.mxu0 %v619
        %754 = vmatprep.subr.mxu0 %v623
        %755 = vmatpush1.msra.mxu0 %v622
        %756 = vmatprep.subr.mxu0 %v626
        %757 = vmatpush1.msra.mxu0 %v625
        %758 = vmatprep.subr.mxu0 %v629
        %759 = vmatpush1.msra.mxu0 %v628
        %760 = vmatprep.mubr.f32.mxu0 %v521
        %761 = vmatmul.mubr.f32.gmra.mrb[0].mxu0 %v520
        %v762 = vpop.f32.mrb[0].mxu0
        %v763 = vadd.f32 %v684, %v762
        %v764 = vpop.f32.mrb[0].mxu0
        %v765 = vadd.f32 %v688, %v764
        %766 = vmatprep.mubr.f32.mxu0 %v524
        %767 = vmatmul.mubr.f32.gmra.mrb[0].mxu0 %v523
        %v768 = vpop.f32.mrb[0].mxu0
        %v769 = vadd.f32 %v684, %v768
        %v770 = vpop.f32.mrb[0].mxu0
        %v771 = vadd.f32 %v688, %v770
        %772 = vmatprep.mubr.f32.mxu0 %v527
        %773 = vmatmul.mubr.f32.gmra.mrb[0].mxu0 %v526
        %v774 = vpop.f32.mrb[0].mxu0
        %v775 = vadd.f32 %v684, %v774
        %v776 = vpop.f32.mrb[0].mxu0
        %v777 = vadd.f32 %v688, %v776
        %778 = vmatprep.mubr.f32.mxu0 %v530
        %779 = vmatmul.mubr.f32.gmra.mrb[0].mxu0 %v529
        %v780 = vpop.f32.mrb[0].mxu0
        %v781 = vadd.f32 %v684, %v780
        %v782 = vpop.f32.mrb[0].mxu0
        %v783 = vadd.f32 %v688, %v782
        %784 = vmatprep.mubr.f32.mxu0 %v533
        %785 = vmatmul.mubr.f32.gmra.mrb[0].mxu0 %v532
        %v786 = vpop.f32.mrb[0].mxu0
        %v787 = vadd.f32 %v684, %v786
        %v788 = vpop.f32.mrb[0].mxu0
        %v789 = vadd.f32 %v688, %v788
        %790 = vdwg.mxu0
        %791 = vmatprep.subr.mxu0 %v632
        %792 = vmatpush1.msra.mxu0 %v631
        %793 = vmatprep.subr.mxu0 %v635
        %794 = vmatpush1.msra.mxu0 %v634
        %795 = vmatprep.subr.mxu0 %v638
        %796 = vmatpush1.msra.mxu0 %v637
        %797 = vmatprep.subr.mxu0 %v641
        %798 = vmatpush1.msra.mxu0 %v640
        %799 = vmatprep.subr.mxu0 %v644
        %800 = vmatpush1.msra.mxu0 %v643
        %801 = vmatprep.subr.mxu0 %v647
        %802 = vmatpush1.msra.mxu0 %v646
        %803 = vmatprep.subr.mxu0 %v650
        %804 = vmatpush1.msra.mxu0 %v649
        %805 = vmatprep.subr.mxu0 %v653
        %806 = vmatpush1.msra.mxu0 %v652
        %807 = vmatprep.subr.mxu0 %v656
        %808 = vmatpush1.msra.mxu0 %v655
        %809 = vmatprep.subr.mxu0 %v659
        %810 = vmatpush1.msra.mxu0 %v658
        %811 = vmatprep.subr.mxu0 %v662
        %812 = vmatpush1.msra.mxu0 %v661
        %813 = vmatprep.subr.mxu0 %v665
        %814 = vmatpush1.msra.mxu0 %v664
        %815 = vmatprep.subr.mxu0 %v668
        %816 = vmatpush1.msra.mxu0 %v667
        %817 = vmatprep.subr.mxu0 %v671
        %818 = vmatpush1.msra.mxu0 %v670
        %819 = vmatprep.subr.mxu0 %v674
        %820 = vmatpush1.msra.mxu0 %v673
        %821 = vmatprep.subr.mxu0 %v677
        %822 = vmatpush1.msra.mxu0 %v676
        %823 = vmatprep.subr.mxu0 0.0
        %824 = vmatpush1.msra.mxu0 0.0
        %825 = vmatprep.subr.mxu0 0.0
        %826 = vmatpush1.msra.mxu0 0.0
        %827 = vmatprep.subr.mxu0 0.0
        %828 = vmatpush1.msra.mxu0 0.0
        %829 = vmatprep.subr.mxu0 0.0
        %830 = vmatpush1.msra.mxu0 0.0
        %831 = vmatprep.subr.mxu0 0.0
        %832 = vmatpush1.msra.mxu0 0.0
        %833 = vmatprep.subr.mxu0 0.0
        %834 = vmatpush1.msra.mxu0 0.0
        %835 = vmatprep.subr.mxu0 0.0
        %836 = vmatpush1.msra.mxu0 0.0
        %837 = vmatprep.subr.mxu0 0.0
        %838 = vmatpush1.msra.mxu0 0.0
        %839 = vmatprep.subr.mxu0 0.0
        %840 = vmatpush1.msra.mxu0 0.0
        %841 = vmatprep.subr.mxu0 0.0
        %842 = vmatpush1.msra.mxu0 0.0
        %843 = vmatprep.subr.mxu0 0.0
        %844 = vmatpush1.msra.mxu0 0.0
        %845 = vmatprep.subr.mxu0 0.0
        %846 = vmatpush1.msra.mxu0 0.0
        %847 = vmatprep.subr.mxu0 0.0
        %848 = vmatpush1.msra.mxu0 0.0
        %849 = vmatprep.subr.mxu0 0.0
        %850 = vmatpush1.msra.mxu0 0.0
        %851 = vmatprep.subr.mxu0 0.0
        %852 = vmatpush1.msra.mxu0 0.0
        %853 = vmatprep.subr.mxu0 0.0
        %854 = vmatpush1.msra.mxu0 0.0
        %855 = vmatprep.mubr.f32.mxu0 0.0
        %856 = vmatmul.mubr.f32.gmra.mrb[0].mxu0 %v522
        %v857 = vpop.f32.mrb[0].mxu0
        %v858 = vadd.f32 %v763, %v857
        %v859 = vpop.f32.mrb[0].mxu0
        %v860 = vadd.f32 %v765, %v859
        %861 = vmatprep.mubr.f32.mxu0 0.0
        %862 = vmatmul.mubr.f32.gmra.mrb[0].mxu0 %v525
        %v863 = vpop.f32.mrb[0].mxu0
        %v864 = vadd.f32 %v769, %v863
        %v865 = vpop.f32.mrb[0].mxu0
        %v866 = vadd.f32 %v771, %v865
        %867 = vmatprep.mubr.f32.mxu0 0.0
        %868 = vmatmul.mubr.f32.gmra.mrb[0].mxu0 %v528
        %v869 = vpop.f32.mrb[0].mxu0
        %v870 = vadd.f32 %v775, %v869
        %v871 = vpop.f32.mrb[0].mxu0
        %v872 = vadd.f32 %v777, %v871
        %873 = vmatprep.mubr.f32.mxu0 0.0
        %874 = vmatmul.mubr.f32.gmra.mrb[0].mxu0 %v531
        %v875 = vpop.f32.mrb[0].mxu0
        %v876 = vadd.f32 %v781, %v875
        %v877 = vpop.f32.mrb[0].mxu0
        %v878 = vadd.f32 %v783, %v877
        %879 = vmatprep.mubr.f32.mxu0 0.0
        %880 = vmatmul.mubr.f32.gmra.mrb[0].mxu0 %v534
        %v881 = vpop.f32.mrb[0].mxu0
        %v882 = vadd.f32 %v787, %v881
        %v883 = vpop.f32.mrb[0].mxu0
        %v884 = vadd.f32 %v789, %v883
        %885 = vdwg.mxu0
        %886 = vmatprep.subr.mxu0 0.0
        %887 = vmatpush1.msra.mxu0 %v537
        %888 = vmatprep.subr.mxu0 0.0
        %889 = vmatpush1.msra.mxu0 %v540
        %890 = vmatprep.subr.mxu0 0.0
        %891 = vmatpush1.msra.mxu0 %v543
        %892 = vmatprep.subr.mxu0 0.0
        %893 = vmatpush1.msra.mxu0 %v546
        %894 = vmatprep.subr.mxu0 0.0
        %895 = vmatpush1.msra.mxu0 %v549
        %896 = vmatprep.subr.mxu0 0.0
        %897 = vmatpush1.msra.mxu0 %v552
        %898 = vmatprep.subr.mxu0 0.0
        %899 = vmatpush1.msra.mxu0 %v555
        %900 = vmatprep.subr.mxu0 0.0
        %901 = vmatpush1.msra.mxu0 %v558
        %902 = vmatprep.subr.mxu0 0.0
        %903 = vmatpush1.msra.mxu0 %v561
        %904 = vmatprep.subr.mxu0 0.0
        %905 = vmatpush1.msra.mxu0 %v564
        %906 = vmatprep.subr.mxu0 0.0
        %907 = vmatpush1.msra.mxu0 %v567
        %908 = vmatprep.subr.mxu0 0.0
        %909 = vmatpush1.msra.mxu0 %v570
        %910 = vmatprep.subr.mxu0 0.0
        %911 = vmatpush1.msra.mxu0 %v573
        %912 = vmatprep.subr.mxu0 0.0
        %913 = vmatpush1.msra.mxu0 %v576
        %914 = vmatprep.subr.mxu0 0.0
        %915 = vmatpush1.msra.mxu0 %v579
        %916 = vmatprep.subr.mxu0 0.0
        %917 = vmatpush1.msra.mxu0 %v582
        %918 = vmatprep.subr.mxu0 0.0
        %919 = vmatpush1.msra.mxu0 %v585
        %920 = vmatprep.subr.mxu0 0.0
        %921 = vmatpush1.msra.mxu0 %v588
        %922 = vmatprep.subr.mxu0 0.0
        %923 = vmatpush1.msra.mxu0 %v591
        %924 = vmatprep.subr.mxu0 0.0
        %925 = vmatpush1.msra.mxu0 %v594
        %926 = vmatprep.subr.mxu0 0.0
        %927 = vmatpush1.msra.mxu0 %v597
        %928 = vmatprep.subr.mxu0 0.0
        %929 = vmatpush1.msra.mxu0 %v600
        %930 = vmatprep.subr.mxu0 0.0
        %931 = vmatpush1.msra.mxu0 %v603
        %932 = vmatprep.subr.mxu0 0.0
        %933 = vmatpush1.msra.mxu0 %v606
        %934 = vmatprep.subr.mxu0 0.0
        %935 = vmatpush1.msra.mxu0 %v609
        %936 = vmatprep.subr.mxu0 0.0
        %937 = vmatpush1.msra.mxu0 %v612
        %938 = vmatprep.subr.mxu0 0.0
        %939 = vmatpush1.msra.mxu0 %v615
        %940 = vmatprep.subr.mxu0 0.0
        %941 = vmatpush1.msra.mxu0 %v618
        %942 = vmatprep.subr.mxu0 0.0
        %943 = vmatpush1.msra.mxu0 %v621
        %944 = vmatprep.subr.mxu0 0.0
        %945 = vmatpush1.msra.mxu0 %v624
        %946 = vmatprep.subr.mxu0 0.0
        %947 = vmatpush1.msra.mxu0 %v627
        %948 = vmatprep.subr.mxu0 0.0
        %949 = vmatpush1.msra.mxu0 %v630
        %950 = vmatprep.mubr.f32.mxu0 %v521
        %951 = vmatmul.mubr.f32.gmra.mrb[0].mxu0 %v520
        %v952 = vpop.f32.mrb[0].mxu0
        %v953 = vadd.f32 %v692, %v952
        %v954 = vpop.f32.mrb[0].mxu0
        %955 = vmatprep.mubr.f32.mxu0 %v524
        %956 = vmatmul.mubr.f32.gmra.mrb[0].mxu0 %v523
        %v957 = vpop.f32.mrb[0].mxu0
        %v958 = vadd.f32 %v692, %v957
        %v959 = vpop.f32.mrb[0].mxu0
        %960 = vmatprep.mubr.f32.mxu0 %v527
        %961 = vmatmul.mubr.f32.gmra.mrb[0].mxu0 %v526
        %v962 = vpop.f32.mrb[0].mxu0
        %v963 = vadd.f32 %v692, %v962
        %v964 = vpop.f32.mrb[0].mxu0
        %965 = vmatprep.mubr.f32.mxu0 %v530
        %966 = vmatmul.mubr.f32.gmra.mrb[0].mxu0 %v529
        %v967 = vpop.f32.mrb[0].mxu0
        %v968 = vadd.f32 %v692, %v967
        %v969 = vpop.f32.mrb[0].mxu0
        %970 = vmatprep.mubr.f32.mxu0 %v533
        %971 = vmatmul.mubr.f32.gmra.mrb[0].mxu0 %v532
        %v972 = vpop.f32.mrb[0].mxu0
        %v973 = vadd.f32 %v692, %v972
        %v974 = vpop.f32.mrb[0].mxu0
        %975 = vdwg.mxu0
        %976 = vmatprep.subr.mxu0 0.0
        %977 = vmatpush1.msra.mxu0 %v633
        %978 = vmatprep.subr.mxu0 0.0
        %979 = vmatpush1.msra.mxu0 %v636
        %980 = vmatprep.subr.mxu0 0.0
        %981 = vmatpush1.msra.mxu0 %v639
        %982 = vmatprep.subr.mxu0 0.0
        %983 = vmatpush1.msra.mxu0 %v642
        %984 = vmatprep.subr.mxu0 0.0
        %985 = vmatpush1.msra.mxu0 %v645
        %986 = vmatprep.subr.mxu0 0.0
        %987 = vmatpush1.msra.mxu0 %v648
        %988 = vmatprep.subr.mxu0 0.0
        %989 = vmatpush1.msra.mxu0 %v651
        %990 = vmatprep.subr.mxu0 0.0
        %991 = vmatpush1.msra.mxu0 %v654
        %992 = vmatprep.subr.mxu0 0.0
        %993 = vmatpush1.msra.mxu0 %v657
        %994 = vmatprep.subr.mxu0 0.0
        %995 = vmatpush1.msra.mxu0 %v660
        %996 = vmatprep.subr.mxu0 0.0
        %997 = vmatpush1.msra.mxu0 %v663
        %998 = vmatprep.subr.mxu0 0.0
        %999 = vmatpush1.msra.mxu0 %v666
        %1000 = vmatprep.subr.mxu0 0.0
        %1001 = vmatpush1.msra.mxu0 %v669
        %1002 = vmatprep.subr.mxu0 0.0
        %1003 = vmatpush1.msra.mxu0 %v672
        %1004 = vmatprep.subr.mxu0 0.0
        %1005 = vmatpush1.msra.mxu0 %v675
        %1006 = vmatprep.subr.mxu0 0.0
        %1007 = vmatpush1.msra.mxu0 %v678
        %1008 = vmatprep.subr.mxu0 0.0
        %1009 = vmatpush1.msra.mxu0 0.0
        %1010 = vmatprep.subr.mxu0 0.0
        %1011 = vmatpush1.msra.mxu0 0.0
        %1012 = vmatprep.subr.mxu0 0.0
        %1013 = vmatpush1.msra.mxu0 0.0
        %1014 = vmatprep.subr.mxu0 0.0
        %1015 = vmatpush1.msra.mxu0 0.0
        %1016 = vmatprep.subr.mxu0 0.0
        %1017 = vmatpush1.msra.mxu0 0.0
        %1018 = vmatprep.subr.mxu0 0.0
        %1019 = vmatpush1.msra.mxu0 0.0
        %1020 = vmatprep.subr.mxu0 0.0
        %1021 = vmatpush1.msra.mxu0 0.0
        %1022 = vmatprep.subr.mxu0 0.0
        %1023 = vmatpush1.msra.mxu0 0.0
        %1024 = vmatprep.subr.mxu0 0.0
        %1025 = vmatpush1.msra.mxu0 0.0
        %1026 = vmatprep.subr.mxu0 0.0
        %1027 = vmatpush1.msra.mxu0 0.0
        %1028 = vmatprep.subr.mxu0 0.0
        %1029 = vmatpush1.msra.mxu0 0.0
        %1030 = vmatprep.subr.mxu0 0.0
        %1031 = vmatpush1.msra.mxu0 0.0
        %1032 = vmatprep.subr.mxu0 0.0
        %1033 = vmatpush1.msra.mxu0 0.0
        %1034 = vmatprep.subr.mxu0 0.0
        %1035 = vmatpush1.msra.mxu0 0.0
        %1036 = vmatprep.subr.mxu0 0.0
        %1037 = vmatpush1.msra.mxu0 0.0
        %1038 = vmatprep.subr.mxu0 0.0
        %1039 = vmatpush1.msra.mxu0 0.0
        %1040 = vmatprep.mubr.f32.mxu0 0.0
        %1041 = vmatmul.mubr.f32.gmra.mrb[0].mxu0 %v522
        %v1042 = vpop.f32.mrb[0].mxu0
        %v1043 = vadd.f32 %v953, %v1042
        %v1044 = vpop.f32.mrb[0].mxu0
        %1045 = vmatprep.mubr.f32.mxu0 0.0
        %1046 = vmatmul.mubr.f32.gmra.mrb[0].mxu0 %v525
        %v1047 = vpop.f32.mrb[0].mxu0
        %v1048 = vadd.f32 %v958, %v1047
        %v1049 = vpop.f32.mrb[0].mxu0
        %1050 = vmatprep.mubr.f32.mxu0 0.0
        %1051 = vmatmul.mubr.f32.gmra.mrb[0].mxu0 %v528
        %v1052 = vpop.f32.mrb[0].mxu0
        %v1053 = vadd.f32 %v963, %v1052
        %v1054 = vpop.f32.mrb[0].mxu0
        %1055 = vmatprep.mubr.f32.mxu0 0.0
        %1056 = vmatmul.mubr.f32.gmra.mrb[0].mxu0 %v531
        %v1057 = vpop.f32.mrb[0].mxu0
        %v1058 = vadd.f32 %v968, %v1057
        %v1059 = vpop.f32.mrb[0].mxu0
        %1060 = vmatprep.mubr.f32.mxu0 0.0
        %1061 = vmatmul.mubr.f32.gmra.mrb[0].mxu0 %v534
        %v1062 = vpop.f32.mrb[0].mxu0
        %v1063 = vadd.f32 %v973, %v1062
        %v1064 = vpop.f32.mrb[0].mxu0
        %1065 = vdwg.mxu0
        %v1066 = vmax.f32 %v858, 0.0
        %v1067 = vmax.f32 %v860, 0.0
        %v1068 = vmax.f32 %v1043, 0.0
        %v1069 = vmax.f32 %v864, 0.0
        %v1070 = vmax.f32 %v866, 0.0
        %v1071 = vmax.f32 %v1048, 0.0
        %v1072 = vmax.f32 %v870, 0.0
        %v1073 = vmax.f32 %v872, 0.0
        %v1074 = vmax.f32 %v1053, 0.0
        %v1075 = vmax.f32 %v876, 0.0
        %v1076 = vmax.f32 %v878, 0.0
        %v1077 = vmax.f32 %v1058, 0.0
        %v1078 = vmax.f32 %v882, 0.0
        %v1079 = vmax.f32 %v884, 0.0
        %v1080 = vmax.f32 %v1063, 0.0
        %v1081 = vld [vmem:[%s516] sm:$0xff]
        %v1082 = vld [vmem:[%s516 + $0x8] sm:$0xff]
        %v1083 = vld [vmem:[%s516 + $0x10] sm:$0xff]
        %v1084 = vmul.f32 %v1066, %v1081
        %v1085 = vmul.f32 %v1067, %v1082
        %v1086 = vmul.f32 %v1068, %v1083
        %v1087 = vmul.f32 %v1069, %v1081
        %v1088 = vmul.f32 %v1070, %v1082
        %v1089 = vmul.f32 %v1071, %v1083
        %v1090 = vmul.f32 %v1072, %v1081
        %v1091 = vmul.f32 %v1073, %v1082
        %v1092 = vmul.f32 %v1074, %v1083
        %v1093 = vmul.f32 %v1075, %v1081
        %v1094 = vmul.f32 %v1076, %v1082
        %v1095 = vmul.f32 %v1077, %v1083
        %v1096 = vmul.f32 %v1078, %v1081
        %v1097 = vmul.f32 %v1079, %v1082
        %v1098 = vmul.f32 %v1080, %v1083
        %v1099 = vmax.f32 %v1084, %v1090
        %v1100 = vmax.f32 %v1087, %v1093
        %v1101 = vmax.f32 %v1099, %v1096
        %v1102 = vmax.f32 %v1101, %v1100
        %v1103 = vmax.f32 %v1085, %v1091
        %v1104 = vmax.f32 %v1088, %v1094
        %v1105 = vmax.f32 %v1103, %v1097
        %v1106 = vmax.f32 %v1105, %v1104
        %v1107 = vmax.f32 %v1086, %v1092
        %v1108 = vmax.f32 %v1089, %v1095
        %v1109 = vmax.f32 %v1107, %v1098
        %v1110 = vmax.f32 %v1109, %v1108
        %v1111 = vsub.f32 %v1084, %v1102
        %v1112 = vsub.f32 %v1085, %v1106
        %v1113 = vsub.f32 %v1086, %v1110
        %v1114 = vsub.f32 %v1087, %v1102
        %v1115 = vsub.f32 %v1088, %v1106
        %v1116 = vsub.f32 %v1089, %v1110
        %v1117 = vsub.f32 %v1090, %v1102
        %v1118 = vsub.f32 %v1091, %v1106
        %v1119 = vsub.f32 %v1092, %v1110
        %v1120 = vsub.f32 %v1093, %v1102
        %v1121 = vsub.f32 %v1094, %v1106
        %v1122 = vsub.f32 %v1095, %v1110
        %v1123 = vsub.f32 %v1096, %v1102
        %v1124 = vsub.f32 %v1097, %v1106
        %v1125 = vsub.f32 %v1098, %v1110
        %v1126 = vmul.f32 %v1111, 1.442695
        %v1127 = vpow.pop %v1126
        %v1128 = vmul.f32 %v1112, 1.442695
        %v1129 = vpow.pop %v1128
        %v1130 = vmul.f32 %v1113, 1.442695
        %v1131 = vpow.pop %v1130
        %v1132 = vmul.f32 %v1114, 1.442695
        %v1133 = vpow.pop %v1132
        %v1134 = vmul.f32 %v1115, 1.442695
        %v1135 = vpow.pop %v1134
        %v1136 = vmul.f32 %v1116, 1.442695
        %v1137 = vpow.pop %v1136
        %v1138 = vmul.f32 %v1117, 1.442695
        %v1139 = vpow.pop %v1138
        %v1140 = vmul.f32 %v1118, 1.442695
        %v1141 = vpow.pop %v1140
        %v1142 = vmul.f32 %v1119, 1.442695
        %v1143 = vpow.pop %v1142
        %v1144 = vmul.f32 %v1120, 1.442695
        %v1145 = vpow.pop %v1144
        %v1146 = vmul.f32 %v1121, 1.442695
        %v1147 = vpow.pop %v1146
        %v1148 = vmul.f32 %v1122, 1.442695
        %v1149 = vpow.pop %v1148
        %v1150 = vmul.f32 %v1123, 1.442695
        %v1151 = vpow.pop %v1150
        %v1152 = vmul.f32 %v1124, 1.442695
        %v1153 = vpow.pop %v1152
        %v1154 = vmul.f32 %v1125, 1.442695
        %v1155 = vpow.pop %v1154
        %v1156 = vadd.f32 %v1127, %v1133
        %v1157 = vadd.f32 %v1156, %v1139
        %v1158 = vadd.f32 %v1157, %v1145
        %v1159 = vadd.f32 %v1158, %v1151
        %v1160 = vadd.f32 %v1129, %v1135
        %v1161 = vadd.f32 %v1160, %v1141
        %v1162 = vadd.f32 %v1161, %v1147
        %v1163 = vadd.f32 %v1162, %v1153
        %v1164 = vadd.f32 %v1131, %v1137
        %v1165 = vadd.f32 %v1164, %v1143
        %v1166 = vadd.f32 %v1165, %v1149
        %v1167 = vadd.f32 %v1166, %v1155
        %v1168 = vrcp.pop %v1159
        %v1169 = vrcp.pop %v1163
        %v1170 = vrcp.pop %v1167
        %v1171 = vmul.f32 %v1127, %v1168
        %v1172 = vmul.f32 %v1129, %v1169
        %v1173 = vmul.f32 %v1131, %v1170
        %v1174 = vmul.f32 %v1133, %v1168
        %v1175 = vmul.f32 %v1135, %v1169
        %v1176 = vmul.f32 %v1137, %v1170
        %v1177 = vmul.f32 %v1139, %v1168
        %v1178 = vmul.f32 %v1141, %v1169
        %v1179 = vmul.f32 %v1143, %v1170
        %v1180 = vmul.f32 %v1145, %v1168
        %v1181 = vmul.f32 %v1147, %v1169
        %v1182 = vmul.f32 %v1149, %v1170
        %v1183 = vmul.f32 %v1151, %v1168
        %v1184 = vmul.f32 %v1153, %v1169
        %v1185 = vmul.f32 %v1155, %v1170
        %v1186 = vmul.f32 %v520, %v1171
        %v1187 = vmul.f32 %v521, %v1172
        %v1188 = vmul.f32 %v522, %v1173
        %v1189 = vmul.f32 %v523, %v1174
        %v1190 = vmul.f32 %v524, %v1175
        %v1191 = vmul.f32 %v525, %v1176
        %v1192 = vmul.f32 %v526, %v1177
        %v1193 = vmul.f32 %v527, %v1178
        %v1194 = vmul.f32 %v528, %v1179
        %v1195 = vmul.f32 %v529, %v1180
        %v1196 = vmul.f32 %v530, %v1181
        %v1197 = vmul.f32 %v531, %v1182
        %v1198 = vmul.f32 %v532, %v1183
        %v1199 = vmul.f32 %v533, %v1184
        %v1200 = vmul.f32 %v534, %v1185
        %v1201 = vld [vmem:[#allocation8] sm:$0xff]
        %v1202 = vld [vmem:[#allocation8 + $0x8] sm:$0xff]
        %v1203 = vld [vmem:[#allocation8 + $0x10] sm:$0xff]
        %v1204 = vld [vmem:[#allocation8 + $0x18] sm:$0xff]
        %v1205 = vld [vmem:[#allocation8 + $0x20] sm:$0xff]
        %v1206 = vld [vmem:[#allocation8 + $0x28] sm:$0xff]
        %v1207 = vld [vmem:[#allocation8 + $0x30] sm:$0xff]
        %v1208 = vld [vmem:[#allocation8 + $0x38] sm:$0xff]
        %v1209 = vld [vmem:[#allocation8 + $0x40] sm:$0xff]
        %v1210 = vld [vmem:[#allocation8 + $0x48] sm:$0xff]
        %v1211 = vld [vmem:[#allocation8 + $0x50] sm:$0xff]
        %v1212 = vld [vmem:[#allocation8 + $0x58] sm:$0xff]
        %v1213 = vld [vmem:[#allocation8 + $0x60] sm:$0xff]
        %v1214 = vld [vmem:[#allocation8 + $0x68] sm:$0xff]
        %v1215 = vld [vmem:[#allocation8 + $0x70] sm:$0xff]
        %v1216 = vld [vmem:[#allocation8 + $0x78] sm:$0xff]
        %v1217 = vld [vmem:[#allocation8 + $0x80] sm:$0xff]
        %v1218 = vld [vmem:[#allocation8 + $0x88] sm:$0xff]
        %v1219 = vld [vmem:[#allocation8 + $0x90] sm:$0xff]
        %v1220 = vld [vmem:[#allocation8 + $0x98] sm:$0xff]
        %v1221 = vld [vmem:[#allocation8 + $0xa0] sm:$0xff]
        %v1222 = vld [vmem:[#allocation8 + $0xa8] sm:$0xff]
        %v1223 = vld [vmem:[#allocation8 + $0xb0] sm:$0xff]
        %v1224 = vld [vmem:[#allocation8 + $0xb8] sm:$0xff]
        %v1225 = vld [vmem:[#allocation8 + $0xc0] sm:$0xff]
        %v1226 = vld [vmem:[#allocation8 + $0xc8] sm:$0xff]
        %v1227 = vld [vmem:[#allocation8 + $0xd0] sm:$0xff]
        %v1228 = vld [vmem:[#allocation8 + $0xd8] sm:$0xff]
        %v1229 = vld [vmem:[#allocation8 + $0xe0] sm:$0xff]
        %v1230 = vld [vmem:[#allocation8 + $0xe8] sm:$0xff]
        %v1231 = vld [vmem:[#allocation8 + $0xf0] sm:$0xff]
        %v1232 = vld [vmem:[#allocation8 + $0xf8] sm:$0xff]
        %v1233 = vld [vmem:[#allocation8 + $0x100] sm:$0xff]
        %v1234 = vld [vmem:[#allocation8 + $0x108] sm:$0xff]
        %v1235 = vld [vmem:[#allocation8 + $0x110] sm:$0xff]
        %v1236 = vld [vmem:[#allocation8 + $0x118] sm:$0xff]
        %v1237 = vld [vmem:[#allocation8 + $0x120] sm:$0xff]
        %v1238 = vld [vmem:[#allocation8 + $0x128] sm:$0xff]
        %v1239 = vld [vmem:[#allocation8 + $0x130] sm:$0xff]
        %v1240 = vld [vmem:[#allocation8 + $0x138] sm:$0xff]
        %v1241 = vld [vmem:[#allocation8 + $0x140] sm:$0xff]
        %v1242 = vld [vmem:[#allocation8 + $0x148] sm:$0xff]
        %v1243 = vld [vmem:[#allocation8 + $0x150] sm:$0xff]
        %v1244 = vld [vmem:[#allocation8 + $0x158] sm:$0xff]
        %v1245 = vld [vmem:[#allocation8 + $0x160] sm:$0xff]
        %v1246 = vld [vmem:[#allocation8 + $0x168] sm:$0xff]
        %v1247 = vld [vmem:[#allocation8 + $0x170] sm:$0xff]
        %v1248 = vld [vmem:[#allocation8 + $0x178] sm:$0xff]
        %v1249 = vld [vmem:[#allocation8 + $0x180] sm:$0xff]
        %v1250 = vld [vmem:[#allocation8 + $0x188] sm:$0xff]
        %v1251 = vld [vmem:[#allocation8 + $0x190] sm:$0xff]
        %v1252 = vld [vmem:[#allocation8 + $0x198] sm:$0xff]
        %v1253 = vld [vmem:[#allocation8 + $0x1a0] sm:$0xff]
        %v1254 = vld [vmem:[#allocation8 + $0x1a8] sm:$0xff]
        %v1255 = vld [vmem:[#allocation8 + $0x1b0] sm:$0xff]
        %v1256 = vld [vmem:[#allocation8 + $0x1b8] sm:$0xff]
        %v1257 = vld [vmem:[#allocation8 + $0x1c0] sm:$0xff]
        %v1258 = vld [vmem:[#allocation8 + $0x1c8] sm:$0xff]
        %v1259 = vld [vmem:[#allocation8 + $0x1d0] sm:$0xff]
        %v1260 = vld [vmem:[#allocation8 + $0x1d8] sm:$0xff]
        %v1261 = vld [vmem:[#allocation8 + $0x1e0] sm:$0xff]
        %v1262 = vld [vmem:[#allocation8 + $0x1e8] sm:$0xff]
        %v1263 = vld [vmem:[#allocation8 + $0x1f0] sm:$0xff]
        %v1264 = vld [vmem:[#allocation8 + $0x1f8] sm:$0xff]
        %v1265 = vld [vmem:[#allocation8 + $0x200] sm:$0xff]
        %v1266 = vld [vmem:[#allocation8 + $0x208] sm:$0xff]
        %v1267 = vld [vmem:[#allocation8 + $0x210] sm:$0xff]
        %v1268 = vld [vmem:[#allocation8 + $0x218] sm:$0xff]
        %v1269 = vld [vmem:[#allocation8 + $0x220] sm:$0xff]
        %v1270 = vld [vmem:[#allocation8 + $0x228] sm:$0xff]
        %v1271 = vld [vmem:[#allocation8 + $0x230] sm:$0xff]
        %v1272 = vld [vmem:[#allocation8 + $0x238] sm:$0xff]
        %v1273 = vld [vmem:[#allocation8 + $0x240] sm:$0xff]
        %v1274 = vld [vmem:[#allocation8 + $0x248] sm:$0xff]
        %v1275 = vld [vmem:[#allocation8 + $0x250] sm:$0xff]
        %v1276 = vld [vmem:[#allocation8 + $0x258] sm:$0xff]
        %v1277 = vld [vmem:[#allocation8 + $0x260] sm:$0xff]
        %v1278 = vld [vmem:[#allocation8 + $0x268] sm:$0xff]
        %v1279 = vld [vmem:[#allocation8 + $0x270] sm:$0xff]
        %v1280 = vld [vmem:[#allocation8 + $0x278] sm:$0xff]
        %v1281 = vld [vmem:[#allocation8 + $0x280] sm:$0xff]
        %v1282 = vld [vmem:[#allocation8 + $0x288] sm:$0xff]
        %v1283 = vld [vmem:[#allocation8 + $0x290] sm:$0xff]
        %v1284 = vld [vmem:[#allocation8 + $0x298] sm:$0xff]
        %v1285 = vld [vmem:[#allocation8 + $0x2a0] sm:$0xff]
        %v1286 = vld [vmem:[#allocation8 + $0x2a8] sm:$0xff]
        %v1287 = vld [vmem:[#allocation8 + $0x2b0] sm:$0xff]
        %v1288 = vld [vmem:[#allocation8 + $0x2b8] sm:$0xff]
        %v1289 = vld [vmem:[#allocation8 + $0x2c0] sm:$0xff]
        %v1290 = vld [vmem:[#allocation8 + $0x2c8] sm:$0xff]
        %v1291 = vld [vmem:[#allocation8 + $0x2d0] sm:$0xff]
        %v1292 = vld [vmem:[#allocation8 + $0x2d8] sm:$0xff]
        %v1293 = vld [vmem:[#allocation8 + $0x2e0] sm:$0xff]
        %v1294 = vld [vmem:[#allocation8 + $0x2e8] sm:$0xff]
        %v1295 = vld [vmem:[#allocation8 + $0x2f0] sm:$0xff]
        %v1296 = vld [vmem:[#allocation8 + $0x2f8] sm:$0xff]
        %v1297 = vld [vmem:[#allocation8 + $0x300] sm:$0xff]
        %v1298 = vld [vmem:[#allocation8 + $0x308] sm:$0xff]
        %v1299 = vld [vmem:[#allocation8 + $0x310] sm:$0xff]
        %v1300 = vld [vmem:[#allocation8 + $0x318] sm:$0xff]
        %v1301 = vld [vmem:[#allocation8 + $0x320] sm:$0xff]
        %v1302 = vld [vmem:[#allocation8 + $0x328] sm:$0xff]
        %v1303 = vld [vmem:[#allocation8 + $0x330] sm:$0xff]
        %v1304 = vld [vmem:[#allocation8 + $0x338] sm:$0xff]
        %v1305 = vld [vmem:[#allocation8 + $0x340] sm:$0xff]
        %v1306 = vld [vmem:[#allocation8 + $0x348] sm:$0xff]
        %v1307 = vld [vmem:[#allocation8 + $0x350] sm:$0xff]
        %v1308 = vld [vmem:[#allocation8 + $0x358] sm:$0xff]
        %v1309 = vld [vmem:[#allocation8 + $0x360] sm:$0xff]
        %v1310 = vld [vmem:[#allocation8 + $0x368] sm:$0xff]
        %v1311 = vld [vmem:[#allocation8 + $0x370] sm:$0xff]
        %v1312 = vld [vmem:[#allocation8 + $0x378] sm:$0xff]
        %v1313 = vld [vmem:[#allocation8 + $0x380] sm:$0xff]
        %v1314 = vld [vmem:[#allocation8 + $0x388] sm:$0xff]
        %v1315 = vld [vmem:[#allocation8 + $0x390] sm:$0xff]
        %v1316 = vld [vmem:[#allocation8 + $0x398] sm:$0xff]
        %v1317 = vld [vmem:[#allocation8 + $0x3a0] sm:$0xff]
        %v1318 = vld [vmem:[#allocation8 + $0x3a8] sm:$0xff]
        %v1319 = vld [vmem:[#allocation8 + $0x3b0] sm:$0xff]
        %v1320 = vld [vmem:[#allocation8 + $0x3b8] sm:$0xff]
        %v1321 = vld [vmem:[#allocation8 + $0x3c0] sm:$0xff]
        %v1322 = vld [vmem:[#allocation8 + $0x3c8] sm:$0xff]
        %v1323 = vld [vmem:[#allocation8 + $0x3d0] sm:$0xff]
        %v1324 = vld [vmem:[#allocation8 + $0x3d8] sm:$0xff]
        %v1325 = vld [vmem:[#allocation8 + $0x3e0] sm:$0xff]
        %v1326 = vld [vmem:[#allocation8 + $0x3e8] sm:$0xff]
        %v1327 = vld [vmem:[#allocation8 + $0x3f0] sm:$0xff]
        %v1328 = vld [vmem:[#allocation8 + $0x3f8] sm:$0xff]
        %v1329 = vld [vmem:[#allocation8 + $0x400] sm:$0xff]
        %v1330 = vld [vmem:[#allocation8 + $0x408] sm:$0xff]
        %v1331 = vld [vmem:[#allocation8 + $0x410] sm:$0xff]
        %v1332 = vld [vmem:[#allocation8 + $0x418] sm:$0xff]
        %v1333 = vld [vmem:[#allocation8 + $0x420] sm:$0xff]
        %v1334 = vld [vmem:[#allocation8 + $0x428] sm:$0xff]
        %v1335 = vld [vmem:[#allocation8 + $0x430] sm:$0xff]
        %v1336 = vld [vmem:[#allocation8 + $0x438] sm:$0xff]
        %v1337 = vld [vmem:[#allocation8 + $0x440] sm:$0xff]
        %v1338 = vld [vmem:[#allocation8 + $0x448] sm:$0xff]
        %v1339 = vld [vmem:[#allocation8 + $0x450] sm:$0xff]
        %v1340 = vld [vmem:[#allocation8 + $0x458] sm:$0xff]
        %v1341 = vld [vmem:[#allocation8 + $0x460] sm:$0xff]
        %v1342 = vld [vmem:[#allocation8 + $0x468] sm:$0xff]
        %v1343 = vld [vmem:[#allocation8 + $0x470] sm:$0xff]
        %v1344 = vld [vmem:[#allocation8 + $0x478] sm:$0xff]
        %v1345 = vld [vmem:[#allocation8 + $0x480] sm:$0xff]
        %v1346 = vld [vmem:[#allocation8 + $0x488] sm:$0xff]
        %v1347 = vld [vmem:[#allocation8 + $0x490] sm:$0xff]
        %v1348 = vld [vmem:[#allocation8 + $0x498] sm:$0xff]
        %v1349 = vld [vmem:[#allocation8 + $0x4a0] sm:$0xff]
        %v1350 = vld [vmem:[#allocation8 + $0x4a8] sm:$0xff]
        %v1351 = vld [vmem:[#allocation8 + $0x4b0] sm:$0xff]
        %v1352 = vld [vmem:[#allocation8 + $0x4b8] sm:$0xff]
        %v1353 = vld [vmem:[#allocation8 + $0x4c0] sm:$0xff]
        %v1354 = vld [vmem:[#allocation8 + $0x4c8] sm:$0xff]
        %v1355 = vld [vmem:[#allocation8 + $0x4d0] sm:$0xff]
        %v1356 = vld [vmem:[#allocation8 + $0x4d8] sm:$0xff]
        %v1357 = vld [vmem:[#allocation8 + $0x4e0] sm:$0xff]
        %v1358 = vld [vmem:[#allocation8 + $0x4e8] sm:$0xff]
        %v1359 = vld [vmem:[#allocation8 + $0x4f0] sm:$0xff]
        %v1360 = vld [vmem:[#allocation8 + $0x4f8] sm:$0xff]
        %v1361 = vld [vmem:[#allocation8 + $0x500] sm:$0xff]
        %v1362 = vld [vmem:[#allocation8 + $0x508] sm:$0xff]
        %v1363 = vld [vmem:[#allocation8 + $0x510] sm:$0xff]
        %v1364 = vld [vmem:[#allocation8 + $0x518] sm:$0xff]
        %v1365 = vld [vmem:[#allocation8 + $0x520] sm:$0xff]
        %v1366 = vld [vmem:[#allocation8 + $0x528] sm:$0xff]
        %v1367 = vld [vmem:[#allocation8 + $0x530] sm:$0xff]
        %v1368 = vld [vmem:[#allocation8 + $0x538] sm:$0xff]
        %v1369 = vld [vmem:[#allocation8 + $0x540] sm:$0xff]
        %v1370 = vld [vmem:[#allocation8 + $0x548] sm:$0xff]
        %v1371 = vld [vmem:[#allocation8 + $0x550] sm:$0xff]
        %v1372 = vld [vmem:[#allocation8 + $0x558] sm:$0xff]
        %v1373 = vld [vmem:[#allocation8 + $0x560] sm:$0xff]
        %v1374 = vld [vmem:[#allocation8 + $0x568] sm:$0xff]
        %v1375 = vld [vmem:[#allocation8 + $0x570] sm:$0xff]
        %v1376 = vld [vmem:[#allocation8 + $0x578] sm:$0xff]
        %v1377 = vld [vmem:[#allocation8 + $0x580] sm:$0xff]
        %v1378 = vld [vmem:[#allocation8 + $0x588] sm:$0xff]
        %v1379 = vld [vmem:[#allocation8 + $0x590] sm:$0xff]
        %v1380 = vld [vmem:[#allocation8 + $0x598] sm:$0xff]
        %v1381 = vld [vmem:[#allocation8 + $0x5a0] sm:$0xff]
        %v1382 = vld [vmem:[#allocation8 + $0x5a8] sm:$0xff]
        %v1383 = vld [vmem:[#allocation8 + $0x5b0] sm:$0xff]
        %v1384 = vld [vmem:[#allocation8 + $0x5b8] sm:$0xff]
        %v1385 = vld [vmem:[#allocation8 + $0x5c0] sm:$0xff]
        %v1386 = vld [vmem:[#allocation8 + $0x5c8] sm:$0xff]
        %v1387 = vld [vmem:[#allocation8 + $0x5d0] sm:$0xff]
        %v1388 = vld [vmem:[#allocation8 + $0x5d8] sm:$0xff]
        %v1389 = vld [vmem:[#allocation8 + $0x5e0] sm:$0xff]
        %v1390 = vld [vmem:[#allocation8 + $0x5e8] sm:$0xff]
        %v1391 = vld [vmem:[#allocation8 + $0x5f0] sm:$0xff]
        %v1392 = vld [vmem:[#allocation8 + $0x5f8] sm:$0xff]
        %v1393 = vld [vmem:[#allocation8 + $0x600] sm:$0xff]
        %v1394 = vld [vmem:[#allocation8 + $0x608] sm:$0xff]
        %v1395 = vld [vmem:[#allocation8 + $0x610] sm:$0xff]
        %v1396 = vld [vmem:[#allocation8 + $0x618] sm:$0xff]
        %v1397 = vld [vmem:[#allocation8 + $0x620] sm:$0xff]
        %v1398 = vld [vmem:[#allocation8 + $0x628] sm:$0xff]
        %v1399 = vld [vmem:[#allocation8 + $0x630] sm:$0xff]
        %v1400 = vld [vmem:[#allocation8 + $0x638] sm:$0xff]
        %v1401 = vld [vmem:[#allocation8 + $0x640] sm:$0xff]
        %v1402 = vld [vmem:[#allocation8 + $0x648] sm:$0xff]
        %v1403 = vld [vmem:[#allocation8 + $0x650] sm:$0xff]
        %v1404 = vld [vmem:[#allocation8 + $0x658] sm:$0xff]
        %v1405 = vld [vmem:[#allocation8 + $0x660] sm:$0xff]
        %v1406 = vld [vmem:[#allocation8 + $0x668] sm:$0xff]
        %v1407 = vld [vmem:[#allocation8 + $0x670] sm:$0xff]
        %v1408 = vld [vmem:[#allocation8 + $0x678] sm:$0xff]
        %v1409 = vld [vmem:[#allocation8 + $0x680] sm:$0xff]
        %v1410 = vld [vmem:[#allocation8 + $0x688] sm:$0xff]
        %v1411 = vld [vmem:[#allocation8 + $0x690] sm:$0xff]
        %v1412 = vld [vmem:[#allocation8 + $0x698] sm:$0xff]
        %v1413 = vld [vmem:[#allocation8 + $0x6a0] sm:$0xff]
        %v1414 = vld [vmem:[#allocation8 + $0x6a8] sm:$0xff]
        %v1415 = vld [vmem:[#allocation8 + $0x6b0] sm:$0xff]
        %v1416 = vld [vmem:[#allocation8 + $0x6b8] sm:$0xff]
        %v1417 = vld [vmem:[#allocation8 + $0x6c0] sm:$0xff]
        %v1418 = vld [vmem:[#allocation8 + $0x6c8] sm:$0xff]
        %v1419 = vld [vmem:[#allocation8 + $0x6d0] sm:$0xff]
        %v1420 = vld [vmem:[#allocation8 + $0x6d8] sm:$0xff]
        %v1421 = vld [vmem:[#allocation8 + $0x6e0] sm:$0xff]
        %v1422 = vld [vmem:[#allocation8 + $0x6e8] sm:$0xff]
        %v1423 = vld [vmem:[#allocation8 + $0x6f0] sm:$0xff]
        %v1424 = vld [vmem:[#allocation8 + $0x6f8] sm:$0xff]
        %v1425 = vld [vmem:[#allocation8 + $0x700] sm:$0xff]
        %v1426 = vld [vmem:[#allocation8 + $0x708] sm:$0xff]
        %v1427 = vld [vmem:[#allocation8 + $0x710] sm:$0xff]
        %v1428 = vld [vmem:[#allocation8 + $0x718] sm:$0xff]
        %v1429 = vld [vmem:[#allocation8 + $0x720] sm:$0xff]
        %v1430 = vld [vmem:[#allocation8 + $0x728] sm:$0xff]
        %v1431 = vld [vmem:[#allocation8 + $0x730] sm:$0xff]
        %v1432 = vld [vmem:[#allocation8 + $0x738] sm:$0xff]
        %v1433 = vld [vmem:[#allocation8 + $0x740] sm:$0xff]
        %v1434 = vld [vmem:[#allocation8 + $0x748] sm:$0xff]
        %v1435 = vld [vmem:[#allocation8 + $0x750] sm:$0xff]
        %v1436 = vld [vmem:[#allocation8 + $0x758] sm:$0xff]
        %v1437 = vld [vmem:[#allocation8 + $0x760] sm:$0xff]
        %v1438 = vld [vmem:[#allocation8 + $0x768] sm:$0xff]
        %v1439 = vld [vmem:[#allocation8 + $0x770] sm:$0xff]
        %v1440 = vld [vmem:[#allocation8 + $0x778] sm:$0xff]
        %v1441 = vld [vmem:[#allocation8 + $0x780] sm:$0xff]
        %v1442 = vld [vmem:[#allocation8 + $0x788] sm:$0xff]
        %v1443 = vld [vmem:[#allocation8 + $0x790] sm:$0xff]
        %v1444 = vld [vmem:[#allocation8 + $0x798] sm:$0xff]
        %v1445 = vld [vmem:[#allocation8 + $0x7a0] sm:$0xff]
        %v1446 = vld [vmem:[#allocation8 + $0x7a8] sm:$0xff]
        %v1447 = vld [vmem:[#allocation8 + $0x7b0] sm:$0xff]
        %v1448 = vld [vmem:[#allocation8 + $0x7b8] sm:$0xff]
        %v1449 = vld [vmem:[#allocation8 + $0x7c0] sm:$0xff]
        %v1450 = vld [vmem:[#allocation8 + $0x7c8] sm:$0xff]
        %v1451 = vld [vmem:[#allocation8 + $0x7d0] sm:$0xff]
        %v1452 = vld [vmem:[#allocation8 + $0x7d8] sm:$0xff]
        %v1453 = vld [vmem:[#allocation8 + $0x7e0] sm:$0xff]
        %v1454 = vld [vmem:[#allocation8 + $0x7e8] sm:$0xff]
        %v1455 = vld [vmem:[#allocation8 + $0x7f0] sm:$0xff]
        %v1456 = vld [vmem:[#allocation8 + $0x7f8] sm:$0xff]
        %v1457 = vld [vmem:[#allocation8 + $0x800] sm:$0xff]
        %v1458 = vld [vmem:[#allocation8 + $0x808] sm:$0xff]
        %v1459 = vld [vmem:[#allocation8 + $0x810] sm:$0xff]
        %v1460 = vld [vmem:[#allocation8 + $0x818] sm:$0xff]
        %v1461 = vld [vmem:[#allocation8 + $0x820] sm:$0xff]
        %v1462 = vld [vmem:[#allocation8 + $0x828] sm:$0xff]
        %v1463 = vld [vmem:[#allocation8 + $0x830] sm:$0xff]
        %v1464 = vld [vmem:[#allocation8 + $0x838] sm:$0xff]
        %v1465 = vld [vmem:[#allocation8 + $0x840] sm:$0xff]
        %v1466 = vld [vmem:[#allocation8 + $0x848] sm:$0xff]
        %v1467 = vld [vmem:[#allocation8 + $0x850] sm:$0xff]
        %v1468 = vld [vmem:[#allocation8 + $0x858] sm:$0xff]
        %v1469 = vld [vmem:[#allocation8 + $0x860] sm:$0xff]
        %v1470 = vld [vmem:[#allocation8 + $0x868] sm:$0xff]
        %v1471 = vld [vmem:[#allocation8 + $0x870] sm:$0xff]
        %v1472 = vld [vmem:[#allocation8 + $0x878] sm:$0xff]
        %v1473 = vld [vmem:[#allocation8 + $0x880] sm:$0xff]
        %v1474 = vld [vmem:[#allocation8 + $0x888] sm:$0xff]
        %v1475 = vld [vmem:[#allocation8 + $0x890] sm:$0xff]
        %v1476 = vld [vmem:[#allocation8 + $0x898] sm:$0xff]
        %v1477 = vld [vmem:[#allocation8 + $0x8a0] sm:$0xff]
        %v1478 = vld [vmem:[#allocation8 + $0x8a8] sm:$0xff]
        %v1479 = vld [vmem:[#allocation8 + $0x8b0] sm:$0xff]
        %v1480 = vld [vmem:[#allocation8 + $0x8b8] sm:$0xff]
        %v1481 = vld [vmem:[#allocation8 + $0x8c0] sm:$0xff]
        %v1482 = vld [vmem:[#allocation8 + $0x8c8] sm:$0xff]
        %v1483 = vld [vmem:[#allocation8 + $0x8d0] sm:$0xff]
        %v1484 = vld [vmem:[#allocation8 + $0x8d8] sm:$0xff]
        %v1485 = vld [vmem:[#allocation8 + $0x8e0] sm:$0xff]
        %v1486 = vld [vmem:[#allocation8 + $0x8e8] sm:$0xff]
        %v1487 = vld [vmem:[#allocation8 + $0x8f0] sm:$0xff]
        %v1488 = vld [vmem:[#allocation8 + $0x8f8] sm:$0xff]
        %v1489 = vld [vmem:[#allocation8 + $0x900] sm:$0xff]
        %v1490 = vld [vmem:[#allocation8 + $0x908] sm:$0xff]
        %v1491 = vld [vmem:[#allocation8 + $0x910] sm:$0xff]
        %v1492 = vld [vmem:[#allocation8 + $0x918] sm:$0xff]
        %v1493 = vld [vmem:[#allocation8 + $0x920] sm:$0xff]
        %v1494 = vld [vmem:[#allocation8 + $0x928] sm:$0xff]
        %v1495 = vld [vmem:[#allocation8 + $0x930] sm:$0xff]
        %v1496 = vld [vmem:[#allocation8 + $0x938] sm:$0xff]
        %v1497 = vld [vmem:[#allocation8 + $0x940] sm:$0xff]
        %v1498 = vld [vmem:[#allocation8 + $0x948] sm:$0xff]
        %v1499 = vld [vmem:[#allocation8 + $0x950] sm:$0xff]
        %v1500 = vld [vmem:[#allocation8 + $0x958] sm:$0xff]
        %v1501 = vld [vmem:[#allocation8 + $0x960] sm:$0xff]
        %v1502 = vld [vmem:[#allocation8 + $0x968] sm:$0xff]
        %v1503 = vld [vmem:[#allocation8 + $0x970] sm:$0xff]
        %v1504 = vld [vmem:[#allocation8 + $0x978] sm:$0xff]
        %v1505 = vld [vmem:[#allocation8 + $0x980] sm:$0xff]
        %v1506 = vld [vmem:[#allocation8 + $0x988] sm:$0xff]
        %v1507 = vld [vmem:[#allocation8 + $0x990] sm:$0xff]
        %v1508 = vld [vmem:[#allocation8 + $0x998] sm:$0xff]
        %v1509 = vld [vmem:[#allocation8 + $0x9a0] sm:$0xff]
        %v1510 = vld [vmem:[#allocation8 + $0x9a8] sm:$0xff]
        %v1511 = vld [vmem:[#allocation8 + $0x9b0] sm:$0xff]
        %v1512 = vld [vmem:[#allocation8 + $0x9b8] sm:$0xff]
        %v1513 = vld [vmem:[#allocation8 + $0x9c0] sm:$0xff]
        %v1514 = vld [vmem:[#allocation8 + $0x9c8] sm:$0xff]
        %v1515 = vld [vmem:[#allocation8 + $0x9d0] sm:$0xff]
        %v1516 = vld [vmem:[#allocation8 + $0x9d8] sm:$0xff]
        %v1517 = vld [vmem:[#allocation8 + $0x9e0] sm:$0xff]
        %v1518 = vld [vmem:[#allocation8 + $0x9e8] sm:$0xff]
        %v1519 = vld [vmem:[#allocation8 + $0x9f0] sm:$0xff]
        %v1520 = vld [vmem:[#allocation8 + $0x9f8] sm:$0xff]
        %v1521 = vld [vmem:[#allocation8 + $0xa00] sm:$0xff]
        %v1522 = vld [vmem:[#allocation8 + $0xa08] sm:$0xff]
        %v1523 = vld [vmem:[#allocation8 + $0xa10] sm:$0xff]
        %v1524 = vld [vmem:[#allocation8 + $0xa18] sm:$0xff]
        %v1525 = vld [vmem:[#allocation8 + $0xa20] sm:$0xff]
        %v1526 = vld [vmem:[#allocation8 + $0xa28] sm:$0xff]
        %v1527 = vld [vmem:[#allocation8 + $0xa30] sm:$0xff]
        %v1528 = vld [vmem:[#allocation8 + $0xa38] sm:$0xff]
        %v1529 = vld [vmem:[#allocation8 + $0xa40] sm:$0xff]
        %v1530 = vld [vmem:[#allocation8 + $0xa48] sm:$0xff]
        %v1531 = vld [vmem:[#allocation8 + $0xa50] sm:$0xff]
        %v1532 = vld [vmem:[#allocation8 + $0xa58] sm:$0xff]
        %v1533 = vld [vmem:[#allocation8 + $0xa60] sm:$0xff]
        %v1534 = vld [vmem:[#allocation8 + $0xa68] sm:$0xff]
        %v1535 = vld [vmem:[#allocation8 + $0xa70] sm:$0xff]
        %v1536 = vld [vmem:[#allocation8 + $0xa78] sm:$0xff]
        %v1537 = vld [vmem:[#allocation8 + $0xa80] sm:$0xff]
        %v1538 = vld [vmem:[#allocation8 + $0xa88] sm:$0xff]
        %v1539 = vld [vmem:[#allocation8 + $0xa90] sm:$0xff]
        %v1540 = vld [vmem:[#allocation8 + $0xa98] sm:$0xff]
        %v1541 = vld [vmem:[#allocation8 + $0xaa0] sm:$0xff]
        %v1542 = vld [vmem:[#allocation8 + $0xaa8] sm:$0xff]
        %v1543 = vld [vmem:[#allocation8 + $0xab0] sm:$0xff]
        %v1544 = vld [vmem:[#allocation8 + $0xab8] sm:$0xff]
        %v1545 = vld [vmem:[#allocation8 + $0xac0] sm:$0xff]
        %v1546 = vld [vmem:[#allocation8 + $0xac8] sm:$0xff]
        %v1547 = vld [vmem:[#allocation8 + $0xad0] sm:$0xff]
        %v1548 = vld [vmem:[#allocation8 + $0xad8] sm:$0xff]
        %v1549 = vld [vmem:[#allocation8 + $0xae0] sm:$0xff]
        %v1550 = vld [vmem:[#allocation8 + $0xae8] sm:$0xff]
        %v1551 = vld [vmem:[#allocation8 + $0xaf0] sm:$0xff]
        %v1552 = vld [vmem:[#allocation8 + $0xaf8] sm:$0xff]
        %v1553 = vld [vmem:[#allocation8 + $0xb00] sm:$0xff]
        %v1554 = vld [vmem:[#allocation8 + $0xb08] sm:$0xff]
        %v1555 = vld [vmem:[#allocation8 + $0xb10] sm:$0xff]
        %v1556 = vld [vmem:[#allocation8 + $0xb18] sm:$0xff]
        %v1557 = vld [vmem:[#allocation8 + $0xb20] sm:$0xff]
        %v1558 = vld [vmem:[#allocation8 + $0xb28] sm:$0xff]
        %v1559 = vld [vmem:[#allocation8 + $0xb30] sm:$0xff]
        %v1560 = vld [vmem:[#allocation8 + $0xb38] sm:$0xff]
        %v1561 = vld [vmem:[#allocation8 + $0xb40] sm:$0xff]
        %v1562 = vld [vmem:[#allocation8 + $0xb48] sm:$0xff]
        %v1563 = vld [vmem:[#allocation8 + $0xb50] sm:$0xff]
        %v1564 = vld [vmem:[#allocation8 + $0xb58] sm:$0xff]
        %v1565 = vld [vmem:[#allocation8 + $0xb60] sm:$0xff]
        %v1566 = vld [vmem:[#allocation8 + $0xb68] sm:$0xff]
        %v1567 = vld [vmem:[#allocation8 + $0xb70] sm:$0xff]
        %v1568 = vld [vmem:[#allocation8 + $0xb78] sm:$0xff]
        %v1569 = vld [vmem:[#allocation8 + $0xb80] sm:$0xff]
        %v1570 = vld [vmem:[#allocation8 + $0xb88] sm:$0xff]
        %v1571 = vld [vmem:[#allocation8 + $0xb90] sm:$0xff]
        %v1572 = vld [vmem:[#allocation8 + $0xb98] sm:$0xff]
        %v1573 = vld [vmem:[#allocation8 + $0xba0] sm:$0xff]
        %v1574 = vld [vmem:[#allocation8 + $0xba8] sm:$0xff]
        %v1575 = vld [vmem:[#allocation8 + $0xbb0] sm:$0xff]
        %v1576 = vld [vmem:[#allocation8 + $0xbb8] sm:$0xff]
        %v1577 = vld [vmem:[#allocation8 + $0xbc0] sm:$0xff]
        %v1578 = vld [vmem:[#allocation8 + $0xbc8] sm:$0xff]
        %v1579 = vld [vmem:[#allocation8 + $0xbd0] sm:$0xff]
        %v1580 = vld [vmem:[#allocation8 + $0xbd8] sm:$0xff]
        %v1581 = vld [vmem:[#allocation8 + $0xbe0] sm:$0xff]
        %v1582 = vld [vmem:[#allocation8 + $0xbe8] sm:$0xff]
        %v1583 = vld [vmem:[#allocation8 + $0xbf0] sm:$0xff]
        %v1584 = vld [vmem:[#allocation8 + $0xbf8] sm:$0xff]
        %1585 = vmatprep.subr.mxu0 %v1202
        %1586 = vmatpush1.msra.mxu0 %v1201
        %1587 = vmatprep.subr.mxu0 %v1210
        %1588 = vmatpush1.msra.mxu0 %v1209
        %1589 = vmatprep.subr.mxu0 %v1218
        %1590 = vmatpush1.msra.mxu0 %v1217
        %1591 = vmatprep.subr.mxu0 %v1226
        %1592 = vmatpush1.msra.mxu0 %v1225
        %1593 = vmatprep.subr.mxu0 %v1234
        %1594 = vmatpush1.msra.mxu0 %v1233
        %1595 = vmatprep.subr.mxu0 %v1242
        %1596 = vmatpush1.msra.mxu0 %v1241
        %1597 = vmatprep.subr.mxu0 %v1250
        %1598 = vmatpush1.msra.mxu0 %v1249
        %1599 = vmatprep.subr.mxu0 %v1258
        %1600 = vmatpush1.msra.mxu0 %v1257
        %1601 = vmatprep.subr.mxu0 %v1266
        %1602 = vmatpush1.msra.mxu0 %v1265
        %1603 = vmatprep.subr.mxu0 %v1274
        %1604 = vmatpush1.msra.mxu0 %v1273
        %1605 = vmatprep.subr.mxu0 %v1282
        %1606 = vmatpush1.msra.mxu0 %v1281
        %1607 = vmatprep.subr.mxu0 %v1290
        %1608 = vmatpush1.msra.mxu0 %v1289
        %1609 = vmatprep.subr.mxu0 %v1298
        %1610 = vmatpush1.msra.mxu0 %v1297
        %1611 = vmatprep.subr.mxu0 %v1306
        %1612 = vmatpush1.msra.mxu0 %v1305
        %1613 = vmatprep.subr.mxu0 %v1314
        %1614 = vmatpush1.msra.mxu0 %v1313
        %1615 = vmatprep.subr.mxu0 %v1322
        %1616 = vmatpush1.msra.mxu0 %v1321
        %1617 = vmatprep.subr.mxu0 %v1330
        %1618 = vmatpush1.msra.mxu0 %v1329
        %1619 = vmatprep.subr.mxu0 %v1338
        %1620 = vmatpush1.msra.mxu0 %v1337
        %1621 = vmatprep.subr.mxu0 %v1346
        %1622 = vmatpush1.msra.mxu0 %v1345
        %1623 = vmatprep.subr.mxu0 %v1354
        %1624 = vmatpush1.msra.mxu0 %v1353
        %1625 = vmatprep.subr.mxu0 %v1362
        %1626 = vmatpush1.msra.mxu0 %v1361
        %1627 = vmatprep.subr.mxu0 %v1370
        %1628 = vmatpush1.msra.mxu0 %v1369
        %1629 = vmatprep.subr.mxu0 %v1378
        %1630 = vmatpush1.msra.mxu0 %v1377
        %1631 = vmatprep.subr.mxu0 %v1386
        %1632 = vmatpush1.msra.mxu0 %v1385
        %1633 = vmatprep.subr.mxu0 %v1394
        %1634 = vmatpush1.msra.mxu0 %v1393
        %1635 = vmatprep.subr.mxu0 %v1402
        %1636 = vmatpush1.msra.mxu0 %v1401
        %1637 = vmatprep.subr.mxu0 %v1410
        %1638 = vmatpush1.msra.mxu0 %v1409
        %1639 = vmatprep.subr.mxu0 %v1418
        %1640 = vmatpush1.msra.mxu0 %v1417
        %1641 = vmatprep.subr.mxu0 %v1426
        %1642 = vmatpush1.msra.mxu0 %v1425
        %1643 = vmatprep.subr.mxu0 %v1434
        %1644 = vmatpush1.msra.mxu0 %v1433
        %1645 = vmatprep.subr.mxu0 %v1442
        %1646 = vmatpush1.msra.mxu0 %v1441
        %1647 = vmatprep.subr.mxu0 %v1450
        %1648 = vmatpush1.msra.mxu0 %v1449
        %1649 = vmatprep.mubr.f32.mxu0 %v1187
        %1650 = vmatmul.mubr.f32.gmra.mrb[0].mxu0 %v1186
        %v1651 = vpop.f32.mrb[0].mxu0
        %v1652 = vadd.f32 0.0, %v1651
        %v1653 = vpop.f32.mrb[0].mxu0
        %v1654 = vadd.f32 0.0, %v1653
        %1655 = vmatprep.mubr.f32.mxu0 %v1190
        %1656 = vmatmul.mubr.f32.gmra.mrb[0].mxu0 %v1189
        %v1657 = vpop.f32.mrb[0].mxu0
        %v1658 = vadd.f32 0.0, %v1657
        %v1659 = vpop.f32.mrb[0].mxu0
        %v1660 = vadd.f32 0.0, %v1659
        %1661 = vmatprep.mubr.f32.mxu0 %v1193
        %1662 = vmatmul.mubr.f32.gmra.mrb[0].mxu0 %v1192
        %v1663 = vpop.f32.mrb[0].mxu0
        %v1664 = vadd.f32 0.0, %v1663
        %v1665 = vpop.f32.mrb[0].mxu0
        %v1666 = vadd.f32 0.0, %v1665
        %1667 = vmatprep.mubr.f32.mxu0 %v1196
        %1668 = vmatmul.mubr.f32.gmra.mrb[0].mxu0 %v1195
        %v1669 = vpop.f32.mrb[0].mxu0
        %v1670 = vadd.f32 0.0, %v1669
        %v1671 = vpop.f32.mrb[0].mxu0
        %v1672 = vadd.f32 0.0, %v1671
        %1673 = vmatprep.mubr.f32.mxu0 %v1199
        %1674 = vmatmul.mubr.f32.gmra.mrb[0].mxu0 %v1198
        %v1675 = vpop.f32.mrb[0].mxu0
        %v1676 = vadd.f32 0.0, %v1675
        %v1677 = vpop.f32.mrb[0].mxu0
        %v1678 = vadd.f32 0.0, %v1677
        %1679 = vdwg.mxu0
        %1680 = vmatprep.subr.mxu0 %v1458
        %1681 = vmatpush1.msra.mxu0 %v1457
        %1682 = vmatprep.subr.mxu0 %v1466
        %1683 = vmatpush1.msra.mxu0 %v1465
        %1684 = vmatprep.subr.mxu0 %v1474
        %1685 = vmatpush1.msra.mxu0 %v1473
        %1686 = vmatprep.subr.mxu0 %v1482
        %1687 = vmatpush1.msra.mxu0 %v1481
        %1688 = vmatprep.subr.mxu0 %v1490
        %1689 = vmatpush1.msra.mxu0 %v1489
        %1690 = vmatprep.subr.mxu0 %v1498
        %1691 = vmatpush1.msra.mxu0 %v1497
        %1692 = vmatprep.subr.mxu0 %v1506
        %1693 = vmatpush1.msra.mxu0 %v1505
        %1694 = vmatprep.subr.mxu0 %v1514
        %1695 = vmatpush1.msra.mxu0 %v1513
        %1696 = vmatprep.subr.mxu0 %v1522
        %1697 = vmatpush1.msra.mxu0 %v1521
        %1698 = vmatprep.subr.mxu0 %v1530
        %1699 = vmatpush1.msra.mxu0 %v1529
        %1700 = vmatprep.subr.mxu0 %v1538
        %1701 = vmatpush1.msra.mxu0 %v1537
        %1702 = vmatprep.subr.mxu0 %v1546
        %1703 = vmatpush1.msra.mxu0 %v1545
        %1704 = vmatprep.subr.mxu0 %v1554
        %1705 = vmatpush1.msra.mxu0 %v1553
        %1706 = vmatprep.subr.mxu0 %v1562
        %1707 = vmatpush1.msra.mxu0 %v1561
        %1708 = vmatprep.subr.mxu0 %v1570
        %1709 = vmatpush1.msra.mxu0 %v1569
        %1710 = vmatprep.subr.mxu0 %v1578
        %1711 = vmatpush1.msra.mxu0 %v1577
        %1712 = vmatprep.subr.mxu0 0.0
        %1713 = vmatpush1.msra.mxu0 0.0
        %1714 = vmatprep.subr.mxu0 0.0
        %1715 = vmatpush1.msra.mxu0 0.0
        %1716 = vmatprep.subr.mxu0 0.0
        %1717 = vmatpush1.msra.mxu0 0.0
        %1718 = vmatprep.subr.mxu0 0.0
        %1719 = vmatpush1.msra.mxu0 0.0
        %1720 = vmatprep.subr.mxu0 0.0
        %1721 = vmatpush1.msra.mxu0 0.0
        %1722 = vmatprep.subr.mxu0 0.0
        %1723 = vmatpush1.msra.mxu0 0.0
        %1724 = vmatprep.subr.mxu0 0.0
        %1725 = vmatpush1.msra.mxu0 0.0
        %1726 = vmatprep.subr.mxu0 0.0
        %1727 = vmatpush1.msra.mxu0 0.0
        %1728 = vmatprep.subr.mxu0 0.0
        %1729 = vmatpush1.msra.mxu0 0.0
        %1730 = vmatprep.subr.mxu0 0.0
        %1731 = vmatpush1.msra.mxu0 0.0
        %1732 = vmatprep.subr.mxu0 0.0
        %1733 = vmatpush1.msra.mxu0 0.0
        %1734 = vmatprep.subr.mxu0 0.0
        %1735 = vmatpush1.msra.mxu0 0.0
        %1736 = vmatprep.subr.mxu0 0.0
        %1737 = vmatpush1.msra.mxu0 0.0
        %1738 = vmatprep.subr.mxu0 0.0
        %1739 = vmatpush1.msra.mxu0 0.0
        %1740 = vmatprep.subr.mxu0 0.0
        %1741 = vmatpush1.msra.mxu0 0.0
        %1742 = vmatprep.subr.mxu0 0.0
        %1743 = vmatpush1.msra.mxu0 0.0
        %1744 = vmatprep.mubr.f32.mxu0 0.0
        %1745 = vmatmul.mubr.f32.gmra.mrb[0].mxu0 %v1188
        %v1746 = vpop.f32.mrb[0].mxu0
        %v1747 = vadd.f32 %v1652, %v1746
        %v1748 = vpop.f32.mrb[0].mxu0
        %v1749 = vadd.f32 %v1654, %v1748
        %1750 = vmatprep.mubr.f32.mxu0 0.0
        %1751 = vmatmul.mubr.f32.gmra.mrb[0].mxu0 %v1191
        %v1752 = vpop.f32.mrb[0].mxu0
        %v1753 = vadd.f32 %v1658, %v1752
        %v1754 = vpop.f32.mrb[0].mxu0
        %v1755 = vadd.f32 %v1660, %v1754
        %1756 = vmatprep.mubr.f32.mxu0 0.0
        %1757 = vmatmul.mubr.f32.gmra.mrb[0].mxu0 %v1194
        %v1758 = vpop.f32.mrb[0].mxu0
        %v1759 = vadd.f32 %v1664, %v1758
        %v1760 = vpop.f32.mrb[0].mxu0
        %v1761 = vadd.f32 %v1666, %v1760
        %1762 = vmatprep.mubr.f32.mxu0 0.0
        %1763 = vmatmul.mubr.f32.gmra.mrb[0].mxu0 %v1197
        %v1764 = vpop.f32.mrb[0].mxu0
        %v1765 = vadd.f32 %v1670, %v1764
        %v1766 = vpop.f32.mrb[0].mxu0
        %v1767 = vadd.f32 %v1672, %v1766
        %1768 = vmatprep.mubr.f32.mxu0 0.0
        %1769 = vmatmul.mubr.f32.gmra.mrb[0].mxu0 %v1200
        %v1770 = vpop.f32.mrb[0].mxu0
        %v1771 = vadd.f32 %v1676, %v1770
        %v1772 = vpop.f32.mrb[0].mxu0
        %v1773 = vadd.f32 %v1678, %v1772
        %1774 = vdwg.mxu0
        %1775 = vmatprep.subr.mxu0 %v1204
        %1776 = vmatpush1.msra.mxu0 %v1203
        %1777 = vmatprep.subr.mxu0 %v1212
        %1778 = vmatpush1.msra.mxu0 %v1211
        %1779 = vmatprep.subr.mxu0 %v1220
        %1780 = vmatpush1.msra.mxu0 %v1219
        %1781 = vmatprep.subr.mxu0 %v1228
        %1782 = vmatpush1.msra.mxu0 %v1227
        %1783 = vmatprep.subr.mxu0 %v1236
        %1784 = vmatpush1.msra.mxu0 %v1235
        %1785 = vmatprep.subr.mxu0 %v1244
        %1786 = vmatpush1.msra.mxu0 %v1243
        %1787 = vmatprep.subr.mxu0 %v1252
        %1788 = vmatpush1.msra.mxu0 %v1251
        %1789 = vmatprep.subr.mxu0 %v1260
        %1790 = vmatpush1.msra.mxu0 %v1259
        %1791 = vmatprep.subr.mxu0 %v1268
        %1792 = vmatpush1.msra.mxu0 %v1267
        %1793 = vmatprep.subr.mxu0 %v1276
        %1794 = vmatpush1.msra.mxu0 %v1275
        %1795 = vmatprep.subr.mxu0 %v1284
        %1796 = vmatpush1.msra.mxu0 %v1283
        %1797 = vmatprep.subr.mxu0 %v1292
        %1798 = vmatpush1.msra.mxu0 %v1291
        %1799 = vmatprep.subr.mxu0 %v1300
        %1800 = vmatpush1.msra.mxu0 %v1299
        %1801 = vmatprep.subr.mxu0 %v1308
        %1802 = vmatpush1.msra.mxu0 %v1307
        %1803 = vmatprep.subr.mxu0 %v1316
        %1804 = vmatpush1.msra.mxu0 %v1315
        %1805 = vmatprep.subr.mxu0 %v1324
        %1806 = vmatpush1.msra.mxu0 %v1323
        %1807 = vmatprep.subr.mxu0 %v1332
        %1808 = vmatpush1.msra.mxu0 %v1331
        %1809 = vmatprep.subr.mxu0 %v1340
        %1810 = vmatpush1.msra.mxu0 %v1339
        %1811 = vmatprep.subr.mxu0 %v1348
        %1812 = vmatpush1.msra.mxu0 %v1347
        %1813 = vmatprep.subr.mxu0 %v1356
        %1814 = vmatpush1.msra.mxu0 %v1355
        %1815 = vmatprep.subr.mxu0 %v1364
        %1816 = vmatpush1.msra.mxu0 %v1363
        %1817 = vmatprep.subr.mxu0 %v1372
        %1818 = vmatpush1.msra.mxu0 %v1371
        %1819 = vmatprep.subr.mxu0 %v1380
        %1820 = vmatpush1.msra.mxu0 %v1379
        %1821 = vmatprep.subr.mxu0 %v1388
        %1822 = vmatpush1.msra.mxu0 %v1387
        %1823 = vmatprep.subr.mxu0 %v1396
        %1824 = vmatpush1.msra.mxu0 %v1395
        %1825 = vmatprep.subr.mxu0 %v1404
        %1826 = vmatpush1.msra.mxu0 %v1403
        %1827 = vmatprep.subr.mxu0 %v1412
        %1828 = vmatpush1.msra.mxu0 %v1411
        %1829 = vmatprep.subr.mxu0 %v1420
        %1830 = vmatpush1.msra.mxu0 %v1419
        %1831 = vmatprep.subr.mxu0 %v1428
        %1832 = vmatpush1.msra.mxu0 %v1427
        %1833 = vmatprep.subr.mxu0 %v1436
        %1834 = vmatpush1.msra.mxu0 %v1435
        %1835 = vmatprep.subr.mxu0 %v1444
        %1836 = vmatpush1.msra.mxu0 %v1443
        %1837 = vmatprep.subr.mxu0 %v1452
        %1838 = vmatpush1.msra.mxu0 %v1451
        %1839 = vmatprep.mubr.f32.mxu0 %v1187
        %1840 = vmatmul.mubr.f32.gmra.mrb[0].mxu0 %v1186
        %v1841 = vpop.f32.mrb[0].mxu0
        %v1842 = vadd.f32 0.0, %v1841
        %v1843 = vpop.f32.mrb[0].mxu0
        %v1844 = vadd.f32 0.0, %v1843
        %1845 = vmatprep.mubr.f32.mxu0 %v1190
        %1846 = vmatmul.mubr.f32.gmra.mrb[0].mxu0 %v1189
        %v1847 = vpop.f32.mrb[0].mxu0
        %v1848 = vadd.f32 0.0, %v1847
        %v1849 = vpop.f32.mrb[0].mxu0
        %v1850 = vadd.f32 0.0, %v1849
        %1851 = vmatprep.mubr.f32.mxu0 %v1193
        %1852 = vmatmul.mubr.f32.gmra.mrb[0].mxu0 %v1192
        %v1853 = vpop.f32.mrb[0].mxu0
        %v1854 = vadd.f32 0.0, %v1853
        %v1855 = vpop.f32.mrb[0].mxu0
        %v1856 = vadd.f32 0.0, %v1855
        %1857 = vmatprep.mubr.f32.mxu0 %v1196
        %1858 = vmatmul.mubr.f32.gmra.mrb[0].mxu0 %v1195
        %v1859 = vpop.f32.mrb[0].mxu0
        %v1860 = vadd.f32 0.0, %v1859
        %v1861 = vpop.f32.mrb[0].mxu0
        %v1862 = vadd.f32 0.0, %v1861
        %1863 = vmatprep.mubr.f32.mxu0 %v1199
        %1864 = vmatmul.mubr.f32.gmra.mrb[0].mxu0 %v1198
        %v1865 = vpop.f32.mrb[0].mxu0
        %v1866 = vadd.f32 0.0, %v1865
        %v1867 = vpop.f32.mrb[0].mxu0
        %1868 = vdwg.mxu0
        %1869 = vmatprep.subr.mxu0 %v1460
        %1870 = vmatpush1.msra.mxu0 %v1459
        %1871 = vmatprep.subr.mxu0 %v1468
        %1872 = vmatpush1.msra.mxu0 %v1467
        %1873 = vmatprep.subr.mxu0 %v1476
        %1874 = vmatpush1.msra.mxu0 %v1475
        %1875 = vmatprep.subr.mxu0 %v1484
        %1876 = vmatpush1.msra.mxu0 %v1483
        %1877 = vmatprep.subr.mxu0 %v1492
        %1878 = vmatpush1.msra.mxu0 %v1491
        %1879 = vmatprep.subr.mxu0 %v1500
        %1880 = vmatpush1.msra.mxu0 %v1499
        %1881 = vmatprep.subr.mxu0 %v1508
        %1882 = vmatpush1.msra.mxu0 %v1507
        %1883 = vmatprep.subr.mxu0 %v1516
        %1884 = vmatpush1.msra.mxu0 %v1515
        %1885 = vmatprep.subr.mxu0 %v1524
        %1886 = vmatpush1.msra.mxu0 %v1523
        %1887 = vmatprep.subr.mxu0 %v1532
        %1888 = vmatpush1.msra.mxu0 %v1531
        %1889 = vmatprep.subr.mxu0 %v1540
        %1890 = vmatpush1.msra.mxu0 %v1539
        %1891 = vmatprep.subr.mxu0 %v1548
        %1892 = vmatpush1.msra.mxu0 %v1547
        %1893 = vmatprep.subr.mxu0 %v1556
        %1894 = vmatpush1.msra.mxu0 %v1555
        %1895 = vmatprep.subr.mxu0 %v1564
        %1896 = vmatpush1.msra.mxu0 %v1563
        %1897 = vmatprep.subr.mxu0 %v1572
        %1898 = vmatpush1.msra.mxu0 %v1571
        %1899 = vmatprep.subr.mxu0 %v1580
        %1900 = vmatpush1.msra.mxu0 %v1579
        %1901 = vmatprep.subr.mxu0 0.0
        %1902 = vmatpush1.msra.mxu0 0.0
        %1903 = vmatprep.subr.mxu0 0.0
        %1904 = vmatpush1.msra.mxu0 0.0
        %1905 = vmatprep.subr.mxu0 0.0
        %1906 = vmatpush1.msra.mxu0 0.0
        %1907 = vmatprep.subr.mxu0 0.0
        %1908 = vmatpush1.msra.mxu0 0.0
        %1909 = vmatprep.subr.mxu0 0.0
        %1910 = vmatpush1.msra.mxu0 0.0
        %1911 = vmatprep.subr.mxu0 0.0
        %1912 = vmatpush1.msra.mxu0 0.0
        %1913 = vmatprep.subr.mxu0 0.0
        %1914 = vmatpush1.msra.mxu0 0.0
        %1915 = vmatprep.subr.mxu0 0.0
        %1916 = vmatpush1.msra.mxu0 0.0
        %1917 = vmatprep.subr.mxu0 0.0
        %1918 = vmatpush1.msra.mxu0 0.0
        %1919 = vmatprep.subr.mxu0 0.0
        %1920 = vmatpush1.msra.mxu0 0.0
        %1921 = vmatprep.subr.mxu0 0.0
        %1922 = vmatpush1.msra.mxu0 0.0
        %1923 = vmatprep.subr.mxu0 0.0
        %1924 = vmatpush1.msra.mxu0 0.0
        %1925 = vmatprep.subr.mxu0 0.0
        %1926 = vmatpush1.msra.mxu0 0.0
        %1927 = vmatprep.subr.mxu0 0.0
        %1928 = vmatpush1.msra.mxu0 0.0
        %1929 = vmatprep.subr.mxu0 0.0
        %1930 = vmatpush1.msra.mxu0 0.0
        %1931 = vmatprep.subr.mxu0 0.0
        %1932 = vmatpush1.msra.mxu0 0.0
        %1933 = vmatprep.mubr.f32.mxu0 0.0
        %1934 = vmatmul.mubr.f32.gmra.mrb[0].mxu0 %v1188
        %v1935 = vpop.f32.mrb[0].mxu0
        %v1936 = vadd.f32 %v1842, %v1935
        %v1937 = vpop.f32.mrb[0].mxu0
        %v1938 = vadd.f32 %v1844, %v1937
        %1939 = vmatprep.mubr.f32.mxu0 0.0
        %1940 = vmatmul.mubr.f32.gmra.mrb[0].mxu0 %v1191
        %v1941 = vpop.f32.mrb[0].mxu0
        %v1942 = vadd.f32 %v1848, %v1941
        %v1943 = vpop.f32.mrb[0].mxu0
        %v1944 = vadd.f32 %v1850, %v1943
        %1945 = vmatprep.mubr.f32.mxu0 0.0
        %1946 = vmatmul.mubr.f32.gmra.mrb[0].mxu0 %v1194
        %v1947 = vpop.f32.mrb[0].mxu0
        %v1948 = vadd.f32 %v1854, %v1947
        %v1949 = vpop.f32.mrb[0].mxu0
        %v1950 = vadd.f32 %v1856, %v1949
        %1951 = vmatprep.mubr.f32.mxu0 0.0
        %1952 = vmatmul.mubr.f32.gmra.mrb[0].mxu0 %v1197
        %v1953 = vpop.f32.mrb[0].mxu0
        %v1954 = vadd.f32 %v1860, %v1953
        %v1955 = vpop.f32.mrb[0].mxu0
        %v1956 = vadd.f32 %v1862, %v1955
        %1957 = vmatprep.mubr.f32.mxu0 0.0
        %1958 = vmatmul.mubr.f32.gmra.mrb[0].mxu0 %v1200
        %v1959 = vpop.f32.mrb[0].mxu0
        %v1960 = vadd.f32 %v1866, %v1959
        %v1961 = vpop.f32.mrb[0].mxu0
        %1962 = vdwg.mxu0
        %1963 = vmatprep.subr.mxu0 %v1206
        %1964 = vmatpush1.msra.mxu0 %v1205
        %1965 = vmatprep.subr.mxu0 %v1214
        %1966 = vmatpush1.msra.mxu0 %v1213
        %1967 = vmatprep.subr.mxu0 %v1222
        %1968 = vmatpush1.msra.mxu0 %v1221
        %1969 = vmatprep.subr.mxu0 %v1230
        %1970 = vmatpush1.msra.mxu0 %v1229
        %1971 = vmatprep.subr.mxu0 %v1238
        %1972 = vmatpush1.msra.mxu0 %v1237
        %1973 = vmatprep.subr.mxu0 %v1246
        %1974 = vmatpush1.msra.mxu0 %v1245
        %1975 = vmatprep.subr.mxu0 %v1254
        %1976 = vmatpush1.msra.mxu0 %v1253
        %1977 = vmatprep.subr.mxu0 %v1262
        %1978 = vmatpush1.msra.mxu0 %v1261
        %1979 = vmatprep.subr.mxu0 %v1270
        %1980 = vmatpush1.msra.mxu0 %v1269
        %1981 = vmatprep.subr.mxu0 %v1278
        %1982 = vmatpush1.msra.mxu0 %v1277
        %1983 = vmatprep.subr.mxu0 %v1286
        %1984 = vmatpush1.msra.mxu0 %v1285
        %1985 = vmatprep.subr.mxu0 %v1294
        %1986 = vmatpush1.msra.mxu0 %v1293
        %1987 = vmatprep.subr.mxu0 %v1302
        %1988 = vmatpush1.msra.mxu0 %v1301
        %1989 = vmatprep.subr.mxu0 %v1310
        %1990 = vmatpush1.msra.mxu0 %v1309
        %1991 = vmatprep.subr.mxu0 %v1318
        %1992 = vmatpush1.msra.mxu0 %v1317
        %1993 = vmatprep.subr.mxu0 %v1326
        %1994 = vmatpush1.msra.mxu0 %v1325
        %1995 = vmatprep.subr.mxu0 %v1334
        %1996 = vmatpush1.msra.mxu0 %v1333
        %1997 = vmatprep.subr.mxu0 %v1342
        %1998 = vmatpush1.msra.mxu0 %v1341
        %1999 = vmatprep.subr.mxu0 %v1350
        %2000 = vmatpush1.msra.mxu0 %v1349
        %2001 = vmatprep.subr.mxu0 %v1358
        %2002 = vmatpush1.msra.mxu0 %v1357
        %2003 = vmatprep.subr.mxu0 %v1366
        %2004 = vmatpush1.msra.mxu0 %v1365
        %2005 = vmatprep.subr.mxu0 %v1374
        %2006 = vmatpush1.msra.mxu0 %v1373
        %2007 = vmatprep.subr.mxu0 %v1382
        %2008 = vmatpush1.msra.mxu0 %v1381
        %2009 = vmatprep.subr.mxu0 %v1390
        %2010 = vmatpush1.msra.mxu0 %v1389
        %2011 = vmatprep.subr.mxu0 %v1398
        %2012 = vmatpush1.msra.mxu0 %v1397
        %2013 = vmatprep.subr.mxu0 %v1406
        %2014 = vmatpush1.msra.mxu0 %v1405
        %2015 = vmatprep.subr.mxu0 %v1414
        %2016 = vmatpush1.msra.mxu0 %v1413
        %2017 = vmatprep.subr.mxu0 %v1422
        %2018 = vmatpush1.msra.mxu0 %v1421
        %2019 = vmatprep.subr.mxu0 %v1430
        %2020 = vmatpush1.msra.mxu0 %v1429
        %2021 = vmatprep.subr.mxu0 %v1438
        %2022 = vmatpush1.msra.mxu0 %v1437
        %2023 = vmatprep.subr.mxu0 %v1446
        %2024 = vmatpush1.msra.mxu0 %v1445
        %2025 = vmatprep.subr.mxu0 %v1454
        %2026 = vmatpush1.msra.mxu0 %v1453
        %2027 = vmatprep.mubr.f32.mxu0 %v1187
        %2028 = vmatmul.mubr.f32.gmra.mrb[0].mxu0 %v1186
        %v2029 = vpop.f32.mrb[0].mxu0
        %v2030 = vadd.f32 0.0, %v2029
        %v2031 = vpop.f32.mrb[0].mxu0
        %v2032 = vadd.f32 0.0, %v2031
        %2033 = vmatprep.mubr.f32.mxu0 %v1190
        %2034 = vmatmul.mubr.f32.gmra.mrb[0].mxu0 %v1189
        %v2035 = vpop.f32.mrb[0].mxu0
        %v2036 = vadd.f32 0.0, %v2035
        %v2037 = vpop.f32.mrb[0].mxu0
        %v2038 = vadd.f32 0.0, %v2037
        %2039 = vmatprep.mubr.f32.mxu0 %v1193
        %2040 = vmatmul.mubr.f32.gmra.mrb[0].mxu0 %v1192
        %v2041 = vpop.f32.mrb[0].mxu0
        %v2042 = vadd.f32 0.0, %v2041
        %v2043 = vpop.f32.mrb[0].mxu0
        %v2044 = vadd.f32 0.0, %v2043
        %2045 = vmatprep.mubr.f32.mxu0 %v1196
        %2046 = vmatmul.mubr.f32.gmra.mrb[0].mxu0 %v1195
        %v2047 = vpop.f32.mrb[0].mxu0
        %v2048 = vadd.f32 0.0, %v2047
        %v2049 = vpop.f32.mrb[0].mxu0
        %v2050 = vadd.f32 0.0, %v2049
        %2051 = vmatprep.mubr.f32.mxu0 %v1199
        %2052 = vmatmul.mubr.f32.gmra.mrb[0].mxu0 %v1198
        %v2053 = vpop.f32.mrb[0].mxu0
        %v2054 = vadd.f32 0.0, %v2053
        %v2055 = vpop.f32.mrb[0].mxu0
        %v2056 = vadd.f32 0.0, %v2055
        %2057 = vdwg.mxu0
        %2058 = vmatprep.subr.mxu0 %v1462
        %2059 = vmatpush1.msra.mxu0 %v1461
        %2060 = vmatprep.subr.mxu0 %v1470
        %2061 = vmatpush1.msra.mxu0 %v1469
        %2062 = vmatprep.subr.mxu0 %v1478
        %2063 = vmatpush1.msra.mxu0 %v1477
        %2064 = vmatprep.subr.mxu0 %v1486
        %2065 = vmatpush1.msra.mxu0 %v1485
        %2066 = vmatprep.subr.mxu0 %v1494
        %2067 = vmatpush1.msra.mxu0 %v1493
        %2068 = vmatprep.subr.mxu0 %v1502
        %2069 = vmatpush1.msra.mxu0 %v1501
        %2070 = vmatprep.subr.mxu0 %v1510
        %2071 = vmatpush1.msra.mxu0 %v1509
        %2072 = vmatprep.subr.mxu0 %v1518
        %2073 = vmatpush1.msra.mxu0 %v1517
        %2074 = vmatprep.subr.mxu0 %v1526
        %2075 = vmatpush1.msra.mxu0 %v1525
        %2076 = vmatprep.subr.mxu0 %v1534
        %2077 = vmatpush1.msra.mxu0 %v1533
        %2078 = vmatprep.subr.mxu0 %v1542
        %2079 = vmatpush1.msra.mxu0 %v1541
        %2080 = vmatprep.subr.mxu0 %v1550
        %2081 = vmatpush1.msra.mxu0 %v1549
        %2082 = vmatprep.subr.mxu0 %v1558
        %2083 = vmatpush1.msra.mxu0 %v1557
        %2084 = vmatprep.subr.mxu0 %v1566
        %2085 = vmatpush1.msra.mxu0 %v1565
        %2086 = vmatprep.subr.mxu0 %v1574
        %2087 = vmatpush1.msra.mxu0 %v1573
        %2088 = vmatprep.subr.mxu0 %v1582
        %2089 = vmatpush1.msra.mxu0 %v1581
        %2090 = vmatprep.subr.mxu0 0.0
        %2091 = vmatpush1.msra.mxu0 0.0
        %2092 = vmatprep.subr.mxu0 0.0
        %2093 = vmatpush1.msra.mxu0 0.0
        %2094 = vmatprep.subr.mxu0 0.0
        %2095 = vmatpush1.msra.mxu0 0.0
        %2096 = vmatprep.subr.mxu0 0.0
        %2097 = vmatpush1.msra.mxu0 0.0
        %2098 = vmatprep.subr.mxu0 0.0
        %2099 = vmatpush1.msra.mxu0 0.0
        %2100 = vmatprep.subr.mxu0 0.0
        %2101 = vmatpush1.msra.mxu0 0.0
        %2102 = vmatprep.subr.mxu0 0.0
        %2103 = vmatpush1.msra.mxu0 0.0
        %2104 = vmatprep.subr.mxu0 0.0
        %2105 = vmatpush1.msra.mxu0 0.0
        %2106 = vmatprep.subr.mxu0 0.0
        %2107 = vmatpush1.msra.mxu0 0.0
        %2108 = vmatprep.subr.mxu0 0.0
        %2109 = vmatpush1.msra.mxu0 0.0
        %2110 = vmatprep.subr.mxu0 0.0
        %2111 = vmatpush1.msra.mxu0 0.0
        %2112 = vmatprep.subr.mxu0 0.0
        %2113 = vmatpush1.msra.mxu0 0.0
        %2114 = vmatprep.subr.mxu0 0.0
        %2115 = vmatpush1.msra.mxu0 0.0
        %2116 = vmatprep.subr.mxu0 0.0
        %2117 = vmatpush1.msra.mxu0 0.0
        %2118 = vmatprep.subr.mxu0 0.0
        %2119 = vmatpush1.msra.mxu0 0.0
        %2120 = vmatprep.subr.mxu0 0.0
        %2121 = vmatpush1.msra.mxu0 0.0
        %2122 = vmatprep.mubr.f32.mxu0 0.0
        %2123 = vmatmul.mubr.f32.gmra.mrb[0].mxu0 %v1188
        %v2124 = vpop.f32.mrb[0].mxu0
        %v2125 = vadd.f32 %v2030, %v2124
        %v2126 = vpop.f32.mrb[0].mxu0
        %v2127 = vadd.f32 %v2032, %v2126
        %2128 = vmatprep.mubr.f32.mxu0 0.0
        %2129 = vmatmul.mubr.f32.gmra.mrb[0].mxu0 %v1191
        %v2130 = vpop.f32.mrb[0].mxu0
        %v2131 = vadd.f32 %v2036, %v2130
        %v2132 = vpop.f32.mrb[0].mxu0
        %v2133 = vadd.f32 %v2038, %v2132
        %2134 = vmatprep.mubr.f32.mxu0 0.0
        %2135 = vmatmul.mubr.f32.gmra.mrb[0].mxu0 %v1194
        %v2136 = vpop.f32.mrb[0].mxu0
        %v2137 = vadd.f32 %v2042, %v2136
        %v2138 = vpop.f32.mrb[0].mxu0
        %v2139 = vadd.f32 %v2044, %v2138
        %2140 = vmatprep.mubr.f32.mxu0 0.0
        %2141 = vmatmul.mubr.f32.gmra.mrb[0].mxu0 %v1197
        %v2142 = vpop.f32.mrb[0].mxu0
        %v2143 = vadd.f32 %v2048, %v2142
        %v2144 = vpop.f32.mrb[0].mxu0
        %v2145 = vadd.f32 %v2050, %v2144
        %2146 = vmatprep.mubr.f32.mxu0 0.0
        %2147 = vmatmul.mubr.f32.gmra.mrb[0].mxu0 %v1200
        %v2148 = vpop.f32.mrb[0].mxu0
        %v2149 = vadd.f32 %v2054, %v2148
        %v2150 = vpop.f32.mrb[0].mxu0
        %v2151 = vadd.f32 %v2056, %v2150
        %2152 = vdwg.mxu0
        %2153 = vmatprep.subr.mxu0 %v1208
        %2154 = vmatpush1.msra.mxu0 %v1207
        %2155 = vmatprep.subr.mxu0 %v1216
        %2156 = vmatpush1.msra.mxu0 %v1215
        %2157 = vmatprep.subr.mxu0 %v1224
        %2158 = vmatpush1.msra.mxu0 %v1223
        %2159 = vmatprep.subr.mxu0 %v1232
        %2160 = vmatpush1.msra.mxu0 %v1231
        %2161 = vmatprep.subr.mxu0 %v1240
        %2162 = vmatpush1.msra.mxu0 %v1239
        %2163 = vmatprep.subr.mxu0 %v1248
        %2164 = vmatpush1.msra.mxu0 %v1247
        %2165 = vmatprep.subr.mxu0 %v1256
        %2166 = vmatpush1.msra.mxu0 %v1255
        %2167 = vmatprep.subr.mxu0 %v1264
        %2168 = vmatpush1.msra.mxu0 %v1263
        %2169 = vmatprep.subr.mxu0 %v1272
        %2170 = vmatpush1.msra.mxu0 %v1271
        %2171 = vmatprep.subr.mxu0 %v1280
        %2172 = vmatpush1.msra.mxu0 %v1279
        %2173 = vmatprep.subr.mxu0 %v1288
        %2174 = vmatpush1.msra.mxu0 %v1287
        %2175 = vmatprep.subr.mxu0 %v1296
        %2176 = vmatpush1.msra.mxu0 %v1295
        %2177 = vmatprep.subr.mxu0 %v1304
        %2178 = vmatpush1.msra.mxu0 %v1303
        %2179 = vmatprep.subr.mxu0 %v1312
        %2180 = vmatpush1.msra.mxu0 %v1311
        %2181 = vmatprep.subr.mxu0 %v1320
        %2182 = vmatpush1.msra.mxu0 %v1319
        %2183 = vmatprep.subr.mxu0 %v1328
        %2184 = vmatpush1.msra.mxu0 %v1327
        %2185 = vmatprep.subr.mxu0 %v1336
        %2186 = vmatpush1.msra.mxu0 %v1335
        %2187 = vmatprep.subr.mxu0 %v1344
        %2188 = vmatpush1.msra.mxu0 %v1343
        %2189 = vmatprep.subr.mxu0 %v1352
        %2190 = vmatpush1.msra.mxu0 %v1351
        %2191 = vmatprep.subr.mxu0 %v1360
        %2192 = vmatpush1.msra.mxu0 %v1359
        %2193 = vmatprep.subr.mxu0 %v1368
        %2194 = vmatpush1.msra.mxu0 %v1367
        %2195 = vmatprep.subr.mxu0 %v1376
        %2196 = vmatpush1.msra.mxu0 %v1375
        %2197 = vmatprep.subr.mxu0 %v1384
        %2198 = vmatpush1.msra.mxu0 %v1383
        %2199 = vmatprep.subr.mxu0 %v1392
        %2200 = vmatpush1.msra.mxu0 %v1391
        %2201 = vmatprep.subr.mxu0 %v1400
        %2202 = vmatpush1.msra.mxu0 %v1399
        %2203 = vmatprep.subr.mxu0 %v1408
        %2204 = vmatpush1.msra.mxu0 %v1407
        %2205 = vmatprep.subr.mxu0 %v1416
        %2206 = vmatpush1.msra.mxu0 %v1415
        %2207 = vmatprep.subr.mxu0 %v1424
        %2208 = vmatpush1.msra.mxu0 %v1423
        %2209 = vmatprep.subr.mxu0 %v1432
        %2210 = vmatpush1.msra.mxu0 %v1431
        %2211 = vmatprep.subr.mxu0 %v1440
        %2212 = vmatpush1.msra.mxu0 %v1439
        %2213 = vmatprep.subr.mxu0 %v1448
        %2214 = vmatpush1.msra.mxu0 %v1447
        %2215 = vmatprep.subr.mxu0 %v1456
        %2216 = vmatpush1.msra.mxu0 %v1455
        %2217 = vmatprep.mubr.f32.mxu0 %v1187
        %2218 = vmatmul.mubr.f32.gmra.mrb[0].mxu0 %v1186
        %v2219 = vpop.f32.mrb[0].mxu0
        %v2220 = vadd.f32 0.0, %v2219
        %v2221 = vpop.f32.mrb[0].mxu0
        %2222 = vmatprep.mubr.f32.mxu0 %v1190
        %2223 = vmatmul.mubr.f32.gmra.mrb[0].mxu0 %v1189
        %v2224 = vpop.f32.mrb[0].mxu0
        %v2225 = vadd.f32 0.0, %v2224
        %v2226 = vpop.f32.mrb[0].mxu0
        %v2227 = vadd.f32 0.0, %v2226
        %2228 = vmatprep.mubr.f32.mxu0 %v1193
        %2229 = vmatmul.mubr.f32.gmra.mrb[0].mxu0 %v1192
        %v2230 = vpop.f32.mrb[0].mxu0
        %v2231 = vadd.f32 0.0, %v2230
        %v2232 = vpop.f32.mrb[0].mxu0
        %v2233 = vadd.f32 0.0, %v2232
        %2234 = vmatprep.mubr.f32.mxu0 %v1196
        %2235 = vmatmul.mubr.f32.gmra.mrb[0].mxu0 %v1195
        %v2236 = vpop.f32.mrb[0].mxu0
        %v2237 = vadd.f32 0.0, %v2236
        %v2238 = vpop.f32.mrb[0].mxu0
        %v2239 = vadd.f32 0.0, %v2238
        %2240 = vmatprep.mubr.f32.mxu0 %v1199
        %2241 = vmatmul.mubr.f32.gmra.mrb[0].mxu0 %v1198
        %v2242 = vpop.f32.mrb[0].mxu0
        %v2243 = vadd.f32 0.0, %v2242
        %v2244 = vpop.f32.mrb[0].mxu0
        %v2245 = vadd.f32 0.0, %v2244
        %2246 = vdwg.mxu0
        %2247 = vmatprep.subr.mxu0 %v1464
        %2248 = vmatpush1.msra.mxu0 %v1463
        %2249 = vmatprep.subr.mxu0 %v1472
        %2250 = vmatpush1.msra.mxu0 %v1471
        %2251 = vmatprep.subr.mxu0 %v1480
        %2252 = vmatpush1.msra.mxu0 %v1479
        %2253 = vmatprep.subr.mxu0 %v1488
        %2254 = vmatpush1.msra.mxu0 %v1487
        %2255 = vmatprep.subr.mxu0 %v1496
        %2256 = vmatpush1.msra.mxu0 %v1495
        %2257 = vmatprep.subr.mxu0 %v1504
        %2258 = vmatpush1.msra.mxu0 %v1503
        %2259 = vmatprep.subr.mxu0 %v1512
        %2260 = vmatpush1.msra.mxu0 %v1511
        %2261 = vmatprep.subr.mxu0 %v1520
        %2262 = vmatpush1.msra.mxu0 %v1519
        %2263 = vmatprep.subr.mxu0 %v1528
        %2264 = vmatpush1.msra.mxu0 %v1527
        %2265 = vmatprep.subr.mxu0 %v1536
        %2266 = vmatpush1.msra.mxu0 %v1535
        %2267 = vmatprep.subr.mxu0 %v1544
        %2268 = vmatpush1.msra.mxu0 %v1543
        %2269 = vmatprep.subr.mxu0 %v1552
        %2270 = vmatpush1.msra.mxu0 %v1551
        %2271 = vmatprep.subr.mxu0 %v1560
        %2272 = vmatpush1.msra.mxu0 %v1559
        %2273 = vmatprep.subr.mxu0 %v1568
        %2274 = vmatpush1.msra.mxu0 %v1567
        %2275 = vmatprep.subr.mxu0 %v1576
        %2276 = vmatpush1.msra.mxu0 %v1575
        %2277 = vmatprep.subr.mxu0 %v1584
        %2278 = vmatpush1.msra.mxu0 %v1583
        %2279 = vmatprep.subr.mxu0 0.0
        %2280 = vmatpush1.msra.mxu0 0.0
        %2281 = vmatprep.subr.mxu0 0.0
        %2282 = vmatpush1.msra.mxu0 0.0
        %2283 = vmatprep.subr.mxu0 0.0
        %2284 = vmatpush1.msra.mxu0 0.0
        %2285 = vmatprep.subr.mxu0 0.0
        %2286 = vmatpush1.msra.mxu0 0.0
        %2287 = vmatprep.subr.mxu0 0.0
        %2288 = vmatpush1.msra.mxu0 0.0
        %2289 = vmatprep.subr.mxu0 0.0
        %2290 = vmatpush1.msra.mxu0 0.0
        %2291 = vmatprep.subr.mxu0 0.0
        %2292 = vmatpush1.msra.mxu0 0.0
        %2293 = vmatprep.subr.mxu0 0.0
        %2294 = vmatpush1.msra.mxu0 0.0
        %2295 = vmatprep.subr.mxu0 0.0
        %2296 = vmatpush1.msra.mxu0 0.0
        %2297 = vmatprep.subr.mxu0 0.0
        %2298 = vmatpush1.msra.mxu0 0.0
        %2299 = vmatprep.subr.mxu0 0.0
        %2300 = vmatpush1.msra.mxu0 0.0
        %2301 = vmatprep.subr.mxu0 0.0
        %2302 = vmatpush1.msra.mxu0 0.0
        %2303 = vmatprep.subr.mxu0 0.0
        %2304 = vmatpush1.msra.mxu0 0.0
        %2305 = vmatprep.subr.mxu0 0.0
        %2306 = vmatpush1.msra.mxu0 0.0
        %2307 = vmatprep.subr.mxu0 0.0
        %2308 = vmatpush1.msra.mxu0 0.0
        %2309 = vmatprep.subr.mxu0 0.0
        %2310 = vmatpush1.msra.mxu0 0.0
        %2311 = vmatprep.mubr.f32.mxu0 0.0
        %2312 = vmatmul.mubr.f32.gmra.mrb[0].mxu0 %v1188
        %v2313 = vpop.f32.mrb[0].mxu0
        %v2314 = vadd.f32 %v2220, %v2313
        %v2315 = vpop.f32.mrb[0].mxu0
        %2316 = vmatprep.mubr.f32.mxu0 0.0
        %2317 = vmatmul.mubr.f32.gmra.mrb[0].mxu0 %v1191
        %v2318 = vpop.f32.mrb[0].mxu0
        %v2319 = vadd.f32 %v2225, %v2318
        %v2320 = vpop.f32.mrb[0].mxu0
        %v2321 = vadd.f32 %v2227, %v2320
        %2322 = vmatprep.mubr.f32.mxu0 0.0
        %2323 = vmatmul.mubr.f32.gmra.mrb[0].mxu0 %v1194
        %v2324 = vpop.f32.mrb[0].mxu0
        %v2325 = vadd.f32 %v2231, %v2324
        %v2326 = vpop.f32.mrb[0].mxu0
        %v2327 = vadd.f32 %v2233, %v2326
        %2328 = vmatprep.mubr.f32.mxu0 0.0
        %2329 = vmatmul.mubr.f32.gmra.mrb[0].mxu0 %v1197
        %v2330 = vpop.f32.mrb[0].mxu0
        %v2331 = vadd.f32 %v2237, %v2330
        %v2332 = vpop.f32.mrb[0].mxu0
        %v2333 = vadd.f32 %v2239, %v2332
        %2334 = vmatprep.mubr.f32.mxu0 0.0
        %2335 = vmatmul.mubr.f32.gmra.mrb[0].mxu0 %v1200
        %v2336 = vpop.f32.mrb[0].mxu0
        %v2337 = vadd.f32 %v2243, %v2336
        %v2338 = vpop.f32.mrb[0].mxu0
        %v2339 = vadd.f32 %v2245, %v2338
        %2340 = vdwg.mxu0
        %v2341 = vld [vmem:[#allocation11] sm:$0xf]
        %v2343 = vlaneseq
        %v2344 = vshrl.u32 %v2343, 7
        %v2345 = vsub.s32 0, %v2344
        %v2346 = vrot.slane %v2341, %v2345
        %v2347 = vlaneseq
        %v2348 = vshrl.u32 %v2347, 7
        %v2349 = vsub.s32 1, %v2348
        %v2350 = vrot.slane %v2341, %v2349
        %v2351 = vlaneseq
        %v2352 = vshrl.u32 %v2351, 7
        %v2353 = vsub.s32 2, %v2352
        %v2354 = vrot.slane %v2341, %v2353
        %v2355 = vlaneseq
        %v2356 = vshrl.u32 %v2355, 7
        %v2357 = vsub.s32 3, %v2356
        %v2358 = vrot.slane %v2341, %v2357
        %v2363 = vadd.f32 %v1747, %v2346
        %v2364 = vadd.f32 %v1749, %v2350
        %v2365 = vadd.f32 %v1936, %v2354
        %v2366 = vadd.f32 %v1938, %v2358
        %v2367 = vadd.f32 %v1753, %v2346
        %v2368 = vadd.f32 %v1755, %v2350
        %v2369 = vadd.f32 %v1942, %v2354
        %v2370 = vadd.f32 %v1944, %v2358
        %v2371 = vadd.f32 %v1759, %v2346
        %v2372 = vadd.f32 %v1761, %v2350
        %v2373 = vadd.f32 %v1948, %v2354
        %v2374 = vadd.f32 %v1950, %v2358
        %v2375 = vadd.f32 %v1765, %v2346
        %v2376 = vadd.f32 %v1767, %v2350
        %v2377 = vadd.f32 %v1954, %v2354
        %v2378 = vadd.f32 %v1956, %v2358
        %v2379 = vadd.f32 %v1771, %v2346
        %v2380 = vadd.f32 %v1773, %v2350
        %v2381 = vadd.f32 %v1960, %v2354
        %v2382 = vld [vmem:[#allocation12] sm:$0xf]
        %v2384 = vlaneseq
        %v2385 = vshrl.u32 %v2384, 7
        %v2386 = vsub.s32 0, %v2385
        %v2387 = vrot.slane %v2382, %v2386
        %v2388 = vlaneseq
        %v2389 = vshrl.u32 %v2388, 7
        %v2390 = vsub.s32 1, %v2389
        %v2391 = vrot.slane %v2382, %v2390
        %v2392 = vlaneseq
        %v2393 = vshrl.u32 %v2392, 7
        %v2394 = vsub.s32 2, %v2393
        %v2395 = vrot.slane %v2382, %v2394
        %v2396 = vlaneseq
        %v2397 = vshrl.u32 %v2396, 7
        %v2398 = vsub.s32 3, %v2397
        %v2399 = vrot.slane %v2382, %v2398
        %v2404 = vadd.f32 %v2125, %v2387
        %v2405 = vadd.f32 %v2127, %v2391
        %v2406 = vadd.f32 %v2314, %v2395
        %v2407 = vadd.f32 %v2131, %v2387
        %v2408 = vadd.f32 %v2133, %v2391
        %v2409 = vadd.f32 %v2319, %v2395
        %v2410 = vadd.f32 %v2321, %v2399
        %v2411 = vadd.f32 %v2137, %v2387
        %v2412 = vadd.f32 %v2139, %v2391
        %v2413 = vadd.f32 %v2325, %v2395
        %v2414 = vadd.f32 %v2327, %v2399
        %v2415 = vadd.f32 %v2143, %v2387
        %v2416 = vadd.f32 %v2145, %v2391
        %v2417 = vadd.f32 %v2331, %v2395
        %v2418 = vadd.f32 %v2333, %v2399
        %v2419 = vadd.f32 %v2149, %v2387
        %v2420 = vadd.f32 %v2151, %v2391
        %v2421 = vadd.f32 %v2337, %v2395
        %v2422 = vadd.f32 %v2339, %v2399
        %v2423 = vld [vmem:[#allocation9] sm:$0xff]
        %v2424 = vld [vmem:[#allocation9 + $0x8] sm:$0xff]
        %v2425 = vld [vmem:[#allocation9 + $0x10] sm:$0xff]
        %v2426 = vld [vmem:[#allocation9 + $0x18] sm:$0xff]
        %v2427 = vld [vmem:[#allocation9 + $0x20] sm:$0xff]
        %v2428 = vld [vmem:[#allocation9 + $0x28] sm:$0xff]
        %v2429 = vld [vmem:[#allocation9 + $0x30] sm:$0xff]
        %v2430 = vld [vmem:[#allocation9 + $0x38] sm:$0xff]
        %v2431 = vld [vmem:[#allocation9 + $0x40] sm:$0xff]
        %v2432 = vld [vmem:[#allocation9 + $0x48] sm:$0xff]
        %v2433 = vld [vmem:[#allocation9 + $0x50] sm:$0xff]
        %v2434 = vld [vmem:[#allocation9 + $0x58] sm:$0xff]
        %v2435 = vld [vmem:[#allocation9 + $0x60] sm:$0xff]
        %v2436 = vld [vmem:[#allocation9 + $0x68] sm:$0xff]
        %v2437 = vld [vmem:[#allocation9 + $0x70] sm:$0xff]
        %v2438 = vld [vmem:[#allocation9 + $0x78] sm:$0xff]
        %v2439 = vld [vmem:[#allocation9 + $0x80] sm:$0xff]
        %v2440 = vld [vmem:[#allocation9 + $0x88] sm:$0xff]
        %v2441 = vld [vmem:[#allocation9 + $0x90] sm:$0xff]
        %v2442 = vld [vmem:[#allocation9 + $0x98] sm:$0xff]
        %v2443 = vld [vmem:[#allocation9 + $0xa0] sm:$0xff]
        %v2444 = vld [vmem:[#allocation9 + $0xa8] sm:$0xff]
        %v2445 = vld [vmem:[#allocation9 + $0xb0] sm:$0xff]
        %v2446 = vld [vmem:[#allocation9 + $0xb8] sm:$0xff]
        %v2447 = vld [vmem:[#allocation9 + $0xc0] sm:$0xff]
        %v2448 = vld [vmem:[#allocation9 + $0xc8] sm:$0xff]
        %v2449 = vld [vmem:[#allocation9 + $0xd0] sm:$0xff]
        %v2450 = vld [vmem:[#allocation9 + $0xd8] sm:$0xff]
        %v2451 = vld [vmem:[#allocation9 + $0xe0] sm:$0xff]
        %v2452 = vld [vmem:[#allocation9 + $0xe8] sm:$0xff]
        %v2453 = vld [vmem:[#allocation9 + $0xf0] sm:$0xff]
        %v2454 = vld [vmem:[#allocation9 + $0xf8] sm:$0xff]
        %v2455 = vld [vmem:[#allocation9 + $0x100] sm:$0xff]
        %v2456 = vld [vmem:[#allocation9 + $0x108] sm:$0xff]
        %v2457 = vld [vmem:[#allocation9 + $0x110] sm:$0xff]
        %v2458 = vld [vmem:[#allocation9 + $0x118] sm:$0xff]
        %v2459 = vld [vmem:[#allocation9 + $0x120] sm:$0xff]
        %v2460 = vld [vmem:[#allocation9 + $0x128] sm:$0xff]
        %v2461 = vld [vmem:[#allocation9 + $0x130] sm:$0xff]
        %v2462 = vld [vmem:[#allocation9 + $0x138] sm:$0xff]
        %v2463 = vld [vmem:[#allocation9 + $0x140] sm:$0xff]
        %v2464 = vld [vmem:[#allocation9 + $0x148] sm:$0xff]
        %v2465 = vld [vmem:[#allocation9 + $0x150] sm:$0xff]
        %v2466 = vld [vmem:[#allocation9 + $0x158] sm:$0xff]
        %v2467 = vld [vmem:[#allocation9 + $0x160] sm:$0xff]
        %v2468 = vld [vmem:[#allocation9 + $0x168] sm:$0xff]
        %v2469 = vld [vmem:[#allocation9 + $0x170] sm:$0xff]
        %v2470 = vld [vmem:[#allocation9 + $0x178] sm:$0xff]
        %v2471 = vld [vmem:[#allocation9 + $0x180] sm:$0xff]
        %v2472 = vld [vmem:[#allocation9 + $0x188] sm:$0xff]
        %v2473 = vld [vmem:[#allocation9 + $0x190] sm:$0xff]
        %v2474 = vld [vmem:[#allocation9 + $0x198] sm:$0xff]
        %v2475 = vld [vmem:[#allocation9 + $0x1a0] sm:$0xff]
        %v2476 = vld [vmem:[#allocation9 + $0x1a8] sm:$0xff]
        %v2477 = vld [vmem:[#allocation9 + $0x1b0] sm:$0xff]
        %v2478 = vld [vmem:[#allocation9 + $0x1b8] sm:$0xff]
        %v2479 = vld [vmem:[#allocation9 + $0x1c0] sm:$0xff]
        %v2480 = vld [vmem:[#allocation9 + $0x1c8] sm:$0xff]
        %v2481 = vld [vmem:[#allocation9 + $0x1d0] sm:$0xff]
        %v2482 = vld [vmem:[#allocation9 + $0x1d8] sm:$0xff]
        %v2483 = vld [vmem:[#allocation9 + $0x1e0] sm:$0xff]
        %v2484 = vld [vmem:[#allocation9 + $0x1e8] sm:$0xff]
        %v2485 = vld [vmem:[#allocation9 + $0x1f0] sm:$0xff]
        %v2486 = vld [vmem:[#allocation9 + $0x1f8] sm:$0xff]
        %v2487 = vld [vmem:[#allocation9 + $0x200] sm:$0xff]
        %v2488 = vld [vmem:[#allocation9 + $0x208] sm:$0xff]
        %v2489 = vld [vmem:[#allocation9 + $0x210] sm:$0xff]
        %v2490 = vld [vmem:[#allocation9 + $0x218] sm:$0xff]
        %v2491 = vld [vmem:[#allocation9 + $0x220] sm:$0xff]
        %v2492 = vld [vmem:[#allocation9 + $0x228] sm:$0xff]
        %v2493 = vld [vmem:[#allocation9 + $0x230] sm:$0xff]
        %v2494 = vld [vmem:[#allocation9 + $0x238] sm:$0xff]
        %v2495 = vld [vmem:[#allocation9 + $0x240] sm:$0xff]
        %v2496 = vld [vmem:[#allocation9 + $0x248] sm:$0xff]
        %v2497 = vld [vmem:[#allocation9 + $0x250] sm:$0xff]
        %v2498 = vld [vmem:[#allocation9 + $0x258] sm:$0xff]
        %v2499 = vld [vmem:[#allocation9 + $0x260] sm:$0xff]
        %v2500 = vld [vmem:[#allocation9 + $0x268] sm:$0xff]
        %v2501 = vld [vmem:[#allocation9 + $0x270] sm:$0xff]
        %v2502 = vld [vmem:[#allocation9 + $0x278] sm:$0xff]
        %v2503 = vld [vmem:[#allocation9 + $0x280] sm:$0xff]
        %v2504 = vld [vmem:[#allocation9 + $0x288] sm:$0xff]
        %v2505 = vld [vmem:[#allocation9 + $0x290] sm:$0xff]
        %v2506 = vld [vmem:[#allocation9 + $0x298] sm:$0xff]
        %v2507 = vld [vmem:[#allocation9 + $0x2a0] sm:$0xff]
        %v2508 = vld [vmem:[#allocation9 + $0x2a8] sm:$0xff]
        %v2509 = vld [vmem:[#allocation9 + $0x2b0] sm:$0xff]
        %v2510 = vld [vmem:[#allocation9 + $0x2b8] sm:$0xff]
        %v2511 = vld [vmem:[#allocation9 + $0x2c0] sm:$0xff]
        %v2512 = vld [vmem:[#allocation9 + $0x2c8] sm:$0xff]
        %v2513 = vld [vmem:[#allocation9 + $0x2d0] sm:$0xff]
        %v2514 = vld [vmem:[#allocation9 + $0x2d8] sm:$0xff]
        %v2515 = vld [vmem:[#allocation9 + $0x2e0] sm:$0xff]
        %v2516 = vld [vmem:[#allocation9 + $0x2e8] sm:$0xff]
        %v2517 = vld [vmem:[#allocation9 + $0x2f0] sm:$0xff]
        %v2518 = vld [vmem:[#allocation9 + $0x2f8] sm:$0xff]
        %v2519 = vld [vmem:[#allocation9 + $0x300] sm:$0xff]
        %v2520 = vld [vmem:[#allocation9 + $0x308] sm:$0xff]
        %v2521 = vld [vmem:[#allocation9 + $0x310] sm:$0xff]
        %v2522 = vld [vmem:[#allocation9 + $0x318] sm:$0xff]
        %v2523 = vld [vmem:[#allocation9 + $0x320] sm:$0xff]
        %v2524 = vld [vmem:[#allocation9 + $0x328] sm:$0xff]
        %v2525 = vld [vmem:[#allocation9 + $0x330] sm:$0xff]
        %v2526 = vld [vmem:[#allocation9 + $0x338] sm:$0xff]
        %v2527 = vld [vmem:[#allocation9 + $0x340] sm:$0xff]
        %v2528 = vld [vmem:[#allocation9 + $0x348] sm:$0xff]
        %v2529 = vld [vmem:[#allocation9 + $0x350] sm:$0xff]
        %v2530 = vld [vmem:[#allocation9 + $0x358] sm:$0xff]
        %v2531 = vld [vmem:[#allocation9 + $0x360] sm:$0xff]
        %v2532 = vld [vmem:[#allocation9 + $0x368] sm:$0xff]
        %v2533 = vld [vmem:[#allocation9 + $0x370] sm:$0xff]
        %v2534 = vld [vmem:[#allocation9 + $0x378] sm:$0xff]
        %v2535 = vld [vmem:[#allocation9 + $0x380] sm:$0xff]
        %v2536 = vld [vmem:[#allocation9 + $0x388] sm:$0xff]
        %v2537 = vld [vmem:[#allocation9 + $0x390] sm:$0xff]
        %v2538 = vld [vmem:[#allocation9 + $0x398] sm:$0xff]
        %v2539 = vld [vmem:[#allocation9 + $0x3a0] sm:$0xff]
        %v2540 = vld [vmem:[#allocation9 + $0x3a8] sm:$0xff]
        %v2541 = vld [vmem:[#allocation9 + $0x3b0] sm:$0xff]
        %v2542 = vld [vmem:[#allocation9 + $0x3b8] sm:$0xff]
        %v2543 = vld [vmem:[#allocation9 + $0x3c0] sm:$0xff]
        %v2544 = vld [vmem:[#allocation9 + $0x3c8] sm:$0xff]
        %v2545 = vld [vmem:[#allocation9 + $0x3d0] sm:$0xff]
        %v2546 = vld [vmem:[#allocation9 + $0x3d8] sm:$0xff]
        %v2547 = vld [vmem:[#allocation9 + $0x3e0] sm:$0xff]
        %v2548 = vld [vmem:[#allocation9 + $0x3e8] sm:$0xff]
        %v2549 = vld [vmem:[#allocation9 + $0x3f0] sm:$0xff]
        %v2550 = vld [vmem:[#allocation9 + $0x3f8] sm:$0xff]
        %v2551 = vld [vmem:[#allocation9 + $0x400] sm:$0xff]
        %v2552 = vld [vmem:[#allocation9 + $0x408] sm:$0xff]
        %v2553 = vld [vmem:[#allocation9 + $0x410] sm:$0xff]
        %v2554 = vld [vmem:[#allocation9 + $0x418] sm:$0xff]
        %v2555 = vld [vmem:[#allocation9 + $0x420] sm:$0xff]
        %v2556 = vld [vmem:[#allocation9 + $0x428] sm:$0xff]
        %v2557 = vld [vmem:[#allocation9 + $0x430] sm:$0xff]
        %v2558 = vld [vmem:[#allocation9 + $0x438] sm:$0xff]
        %v2559 = vld [vmem:[#allocation9 + $0x440] sm:$0xff]
        %v2560 = vld [vmem:[#allocation9 + $0x448] sm:$0xff]
        %v2561 = vld [vmem:[#allocation9 + $0x450] sm:$0xff]
        %v2562 = vld [vmem:[#allocation9 + $0x458] sm:$0xff]
        %v2563 = vld [vmem:[#allocation9 + $0x460] sm:$0xff]
        %v2564 = vld [vmem:[#allocation9 + $0x468] sm:$0xff]
        %v2565 = vld [vmem:[#allocation9 + $0x470] sm:$0xff]
        %v2566 = vld [vmem:[#allocation9 + $0x478] sm:$0xff]
        %v2567 = vld [vmem:[#allocation9 + $0x480] sm:$0xff]
        %v2568 = vld [vmem:[#allocation9 + $0x488] sm:$0xff]
        %v2569 = vld [vmem:[#allocation9 + $0x490] sm:$0xff]
        %v2570 = vld [vmem:[#allocation9 + $0x498] sm:$0xff]
        %v2571 = vld [vmem:[#allocation9 + $0x4a0] sm:$0xff]
        %v2572 = vld [vmem:[#allocation9 + $0x4a8] sm:$0xff]
        %v2573 = vld [vmem:[#allocation9 + $0x4b0] sm:$0xff]
        %v2574 = vld [vmem:[#allocation9 + $0x4b8] sm:$0xff]
        %v2575 = vld [vmem:[#allocation9 + $0x4c0] sm:$0xff]
        %v2576 = vld [vmem:[#allocation9 + $0x4c8] sm:$0xff]
        %v2577 = vld [vmem:[#allocation9 + $0x4d0] sm:$0xff]
        %v2578 = vld [vmem:[#allocation9 + $0x4d8] sm:$0xff]
        %v2579 = vld [vmem:[#allocation9 + $0x4e0] sm:$0xff]
        %v2580 = vld [vmem:[#allocation9 + $0x4e8] sm:$0xff]
        %v2581 = vld [vmem:[#allocation9 + $0x4f0] sm:$0xff]
        %v2582 = vld [vmem:[#allocation9 + $0x4f8] sm:$0xff]
        %v2583 = vld [vmem:[#allocation9 + $0x500] sm:$0xff]
        %v2584 = vld [vmem:[#allocation9 + $0x508] sm:$0xff]
        %v2585 = vld [vmem:[#allocation9 + $0x510] sm:$0xff]
        %v2586 = vld [vmem:[#allocation9 + $0x518] sm:$0xff]
        %v2587 = vld [vmem:[#allocation9 + $0x520] sm:$0xff]
        %v2588 = vld [vmem:[#allocation9 + $0x528] sm:$0xff]
        %v2589 = vld [vmem:[#allocation9 + $0x530] sm:$0xff]
        %v2590 = vld [vmem:[#allocation9 + $0x538] sm:$0xff]
        %v2591 = vld [vmem:[#allocation9 + $0x540] sm:$0xff]
        %v2592 = vld [vmem:[#allocation9 + $0x548] sm:$0xff]
        %v2593 = vld [vmem:[#allocation9 + $0x550] sm:$0xff]
        %v2594 = vld [vmem:[#allocation9 + $0x558] sm:$0xff]
        %v2595 = vld [vmem:[#allocation9 + $0x560] sm:$0xff]
        %v2596 = vld [vmem:[#allocation9 + $0x568] sm:$0xff]
        %v2597 = vld [vmem:[#allocation9 + $0x570] sm:$0xff]
        %v2598 = vld [vmem:[#allocation9 + $0x578] sm:$0xff]
        %v2599 = vld [vmem:[#allocation9 + $0x580] sm:$0xff]
        %v2600 = vld [vmem:[#allocation9 + $0x588] sm:$0xff]
        %v2601 = vld [vmem:[#allocation9 + $0x590] sm:$0xff]
        %v2602 = vld [vmem:[#allocation9 + $0x598] sm:$0xff]
        %v2603 = vld [vmem:[#allocation9 + $0x5a0] sm:$0xff]
        %v2604 = vld [vmem:[#allocation9 + $0x5a8] sm:$0xff]
        %v2605 = vld [vmem:[#allocation9 + $0x5b0] sm:$0xff]
        %v2606 = vld [vmem:[#allocation9 + $0x5b8] sm:$0xff]
        %v2607 = vld [vmem:[#allocation9 + $0x5c0] sm:$0xff]
        %v2608 = vld [vmem:[#allocation9 + $0x5c8] sm:$0xff]
        %v2609 = vld [vmem:[#allocation9 + $0x5d0] sm:$0xff]
        %v2610 = vld [vmem:[#allocation9 + $0x5d8] sm:$0xff]
        %v2611 = vld [vmem:[#allocation9 + $0x5e0] sm:$0xff]
        %v2612 = vld [vmem:[#allocation9 + $0x5e8] sm:$0xff]
        %v2613 = vld [vmem:[#allocation9 + $0x5f0] sm:$0xff]
        %v2614 = vld [vmem:[#allocation9 + $0x5f8] sm:$0xff]
        %v2615 = vld [vmem:[#allocation9 + $0x600] sm:$0xff]
        %v2616 = vld [vmem:[#allocation9 + $0x608] sm:$0xff]
        %v2617 = vld [vmem:[#allocation9 + $0x610] sm:$0xff]
        %v2618 = vld [vmem:[#allocation9 + $0x618] sm:$0xff]
        %v2619 = vld [vmem:[#allocation9 + $0x620] sm:$0xff]
        %v2620 = vld [vmem:[#allocation9 + $0x628] sm:$0xff]
        %v2621 = vld [vmem:[#allocation9 + $0x630] sm:$0xff]
        %v2622 = vld [vmem:[#allocation9 + $0x638] sm:$0xff]
        %v2623 = vld [vmem:[#allocation9 + $0x640] sm:$0xff]
        %v2624 = vld [vmem:[#allocation9 + $0x648] sm:$0xff]
        %v2625 = vld [vmem:[#allocation9 + $0x650] sm:$0xff]
        %v2626 = vld [vmem:[#allocation9 + $0x658] sm:$0xff]
        %v2627 = vld [vmem:[#allocation9 + $0x660] sm:$0xff]
        %v2628 = vld [vmem:[#allocation9 + $0x668] sm:$0xff]
        %v2629 = vld [vmem:[#allocation9 + $0x670] sm:$0xff]
        %v2630 = vld [vmem:[#allocation9 + $0x678] sm:$0xff]
        %v2631 = vld [vmem:[#allocation9 + $0x680] sm:$0xff]
        %v2632 = vld [vmem:[#allocation9 + $0x688] sm:$0xff]
        %v2633 = vld [vmem:[#allocation9 + $0x690] sm:$0xff]
        %v2634 = vld [vmem:[#allocation9 + $0x698] sm:$0xff]
        %v2635 = vld [vmem:[#allocation9 + $0x6a0] sm:$0xff]
        %v2636 = vld [vmem:[#allocation9 + $0x6a8] sm:$0xff]
        %v2637 = vld [vmem:[#allocation9 + $0x6b0] sm:$0xff]
        %v2638 = vld [vmem:[#allocation9 + $0x6b8] sm:$0xff]
        %v2639 = vld [vmem:[#allocation9 + $0x6c0] sm:$0xff]
        %v2640 = vld [vmem:[#allocation9 + $0x6c8] sm:$0xff]
        %v2641 = vld [vmem:[#allocation9 + $0x6d0] sm:$0xff]
        %v2642 = vld [vmem:[#allocation9 + $0x6d8] sm:$0xff]
        %v2643 = vld [vmem:[#allocation9 + $0x6e0] sm:$0xff]
        %v2644 = vld [vmem:[#allocation9 + $0x6e8] sm:$0xff]
        %v2645 = vld [vmem:[#allocation9 + $0x6f0] sm:$0xff]
        %v2646 = vld [vmem:[#allocation9 + $0x6f8] sm:$0xff]
        %v2647 = vld [vmem:[#allocation9 + $0x700] sm:$0xff]
        %v2648 = vld [vmem:[#allocation9 + $0x708] sm:$0xff]
        %v2649 = vld [vmem:[#allocation9 + $0x710] sm:$0xff]
        %v2650 = vld [vmem:[#allocation9 + $0x718] sm:$0xff]
        %v2651 = vld [vmem:[#allocation9 + $0x720] sm:$0xff]
        %v2652 = vld [vmem:[#allocation9 + $0x728] sm:$0xff]
        %v2653 = vld [vmem:[#allocation9 + $0x730] sm:$0xff]
        %v2654 = vld [vmem:[#allocation9 + $0x738] sm:$0xff]
        %v2655 = vld [vmem:[#allocation9 + $0x740] sm:$0xff]
        %v2656 = vld [vmem:[#allocation9 + $0x748] sm:$0xff]
        %v2657 = vld [vmem:[#allocation9 + $0x750] sm:$0xff]
        %v2658 = vld [vmem:[#allocation9 + $0x758] sm:$0xff]
        %v2659 = vld [vmem:[#allocation9 + $0x760] sm:$0xff]
        %v2660 = vld [vmem:[#allocation9 + $0x768] sm:$0xff]
        %v2661 = vld [vmem:[#allocation9 + $0x770] sm:$0xff]
        %v2662 = vld [vmem:[#allocation9 + $0x778] sm:$0xff]
        %v2663 = vld [vmem:[#allocation9 + $0x780] sm:$0xff]
        %v2664 = vld [vmem:[#allocation9 + $0x788] sm:$0xff]
        %v2665 = vld [vmem:[#allocation9 + $0x790] sm:$0xff]
        %v2666 = vld [vmem:[#allocation9 + $0x798] sm:$0xff]
        %v2667 = vld [vmem:[#allocation9 + $0x7a0] sm:$0xff]
        %v2668 = vld [vmem:[#allocation9 + $0x7a8] sm:$0xff]
        %v2669 = vld [vmem:[#allocation9 + $0x7b0] sm:$0xff]
        %v2670 = vld [vmem:[#allocation9 + $0x7b8] sm:$0xff]
        %v2671 = vld [vmem:[#allocation9 + $0x7c0] sm:$0xff]
        %v2672 = vld [vmem:[#allocation9 + $0x7c8] sm:$0xff]
        %v2673 = vld [vmem:[#allocation9 + $0x7d0] sm:$0xff]
        %v2674 = vld [vmem:[#allocation9 + $0x7d8] sm:$0xff]
        %v2675 = vld [vmem:[#allocation9 + $0x7e0] sm:$0xff]
        %v2676 = vld [vmem:[#allocation9 + $0x7e8] sm:$0xff]
        %v2677 = vld [vmem:[#allocation9 + $0x7f0] sm:$0xff]
        %v2678 = vld [vmem:[#allocation9 + $0x7f8] sm:$0xff]
        %2679 = vmatprep.subr.mxu0 %v2424
        %2680 = vmatpush1.msra.mxu0 %v2423
        %2681 = vmatprep.subr.mxu0 %v2432
        %2682 = vmatpush1.msra.mxu0 %v2431
        %2683 = vmatprep.subr.mxu0 %v2440
        %2684 = vmatpush1.msra.mxu0 %v2439
        %2685 = vmatprep.subr.mxu0 %v2448
        %2686 = vmatpush1.msra.mxu0 %v2447
        %2687 = vmatprep.subr.mxu0 %v2456
        %2688 = vmatpush1.msra.mxu0 %v2455
        %2689 = vmatprep.subr.mxu0 %v2464
        %2690 = vmatpush1.msra.mxu0 %v2463
        %2691 = vmatprep.subr.mxu0 %v2472
        %2692 = vmatpush1.msra.mxu0 %v2471
        %2693 = vmatprep.subr.mxu0 %v2480
        %2694 = vmatpush1.msra.mxu0 %v2479
        %2695 = vmatprep.subr.mxu0 %v2488
        %2696 = vmatpush1.msra.mxu0 %v2487
        %2697 = vmatprep.subr.mxu0 %v2496
        %2698 = vmatpush1.msra.mxu0 %v2495
        %2699 = vmatprep.subr.mxu0 %v2504
        %2700 = vmatpush1.msra.mxu0 %v2503
        %2701 = vmatprep.subr.mxu0 %v2512
        %2702 = vmatpush1.msra.mxu0 %v2511
        %2703 = vmatprep.subr.mxu0 %v2520
        %2704 = vmatpush1.msra.mxu0 %v2519
        %2705 = vmatprep.subr.mxu0 %v2528
        %2706 = vmatpush1.msra.mxu0 %v2527
        %2707 = vmatprep.subr.mxu0 %v2536
        %2708 = vmatpush1.msra.mxu0 %v2535
        %2709 = vmatprep.subr.mxu0 %v2544
        %2710 = vmatpush1.msra.mxu0 %v2543
        %2711 = vmatprep.subr.mxu0 %v2552
        %2712 = vmatpush1.msra.mxu0 %v2551
        %2713 = vmatprep.subr.mxu0 %v2560
        %2714 = vmatpush1.msra.mxu0 %v2559
        %2715 = vmatprep.subr.mxu0 %v2568
        %2716 = vmatpush1.msra.mxu0 %v2567
        %2717 = vmatprep.subr.mxu0 %v2576
        %2718 = vmatpush1.msra.mxu0 %v2575
        %2719 = vmatprep.subr.mxu0 %v2584
        %2720 = vmatpush1.msra.mxu0 %v2583
        %2721 = vmatprep.subr.mxu0 %v2592
        %2722 = vmatpush1.msra.mxu0 %v2591
        %2723 = vmatprep.subr.mxu0 %v2600
        %2724 = vmatpush1.msra.mxu0 %v2599
        %2725 = vmatprep.subr.mxu0 %v2608
        %2726 = vmatpush1.msra.mxu0 %v2607
        %2727 = vmatprep.subr.mxu0 %v2616
        %2728 = vmatpush1.msra.mxu0 %v2615
        %2729 = vmatprep.subr.mxu0 %v2624
        %2730 = vmatpush1.msra.mxu0 %v2623
        %2731 = vmatprep.subr.mxu0 %v2632
        %2732 = vmatpush1.msra.mxu0 %v2631
        %2733 = vmatprep.subr.mxu0 %v2640
        %2734 = vmatpush1.msra.mxu0 %v2639
        %2735 = vmatprep.subr.mxu0 %v2648
        %2736 = vmatpush1.msra.mxu0 %v2647
        %2737 = vmatprep.subr.mxu0 %v2656
        %2738 = vmatpush1.msra.mxu0 %v2655
        %2739 = vmatprep.subr.mxu0 %v2664
        %2740 = vmatpush1.msra.mxu0 %v2663
        %2741 = vmatprep.subr.mxu0 %v2672
        %2742 = vmatpush1.msra.mxu0 %v2671
        %2743 = vmatprep.mubr.f32.mxu0 0.0
        %2744 = vmatmul.mubr.f32.gmra.mrb[0].mxu0 0.0
        %v2745 = vpop.f32.mrb[0].mxu0
        %v2746 = vadd.f32 0.0, %v2745
        %v2747 = vpop.f32.mrb[0].mxu0
        %v2748 = vadd.f32 0.0, %v2747
        %2749 = vdwg.mxu0
        %2750 = vmatprep.subr.mxu0 %v2426
        %2751 = vmatpush1.msra.mxu0 %v2425
        %2752 = vmatprep.subr.mxu0 %v2434
        %2753 = vmatpush1.msra.mxu0 %v2433
        %2754 = vmatprep.subr.mxu0 %v2442
        %2755 = vmatpush1.msra.mxu0 %v2441
        %2756 = vmatprep.subr.mxu0 %v2450
        %2757 = vmatpush1.msra.mxu0 %v2449
        %2758 = vmatprep.subr.mxu0 %v2458
        %2759 = vmatpush1.msra.mxu0 %v2457
        %2760 = vmatprep.subr.mxu0 %v2466
        %2761 = vmatpush1.msra.mxu0 %v2465
        %2762 = vmatprep.subr.mxu0 %v2474
        %2763 = vmatpush1.msra.mxu0 %v2473
        %2764 = vmatprep.subr.mxu0 %v2482
        %2765 = vmatpush1.msra.mxu0 %v2481
        %2766 = vmatprep.subr.mxu0 %v2490
        %2767 = vmatpush1.msra.mxu0 %v2489
        %2768 = vmatprep.subr.mxu0 %v2498
        %2769 = vmatpush1.msra.mxu0 %v2497
        %2770 = vmatprep.subr.mxu0 %v2506
        %2771 = vmatpush1.msra.mxu0 %v2505
        %2772 = vmatprep.subr.mxu0 %v2514
        %2773 = vmatpush1.msra.mxu0 %v2513
        %2774 = vmatprep.subr.mxu0 %v2522
        %2775 = vmatpush1.msra.mxu0 %v2521
        %2776 = vmatprep.subr.mxu0 %v2530
        %2777 = vmatpush1.msra.mxu0 %v2529
        %2778 = vmatprep.subr.mxu0 %v2538
        %2779 = vmatpush1.msra.mxu0 %v2537
        %2780 = vmatprep.subr.mxu0 %v2546
        %2781 = vmatpush1.msra.mxu0 %v2545
        %2782 = vmatprep.subr.mxu0 %v2554
        %2783 = vmatpush1.msra.mxu0 %v2553
        %2784 = vmatprep.subr.mxu0 %v2562
        %2785 = vmatpush1.msra.mxu0 %v2561
        %2786 = vmatprep.subr.mxu0 %v2570
        %2787 = vmatpush1.msra.mxu0 %v2569
        %2788 = vmatprep.subr.mxu0 %v2578
        %2789 = vmatpush1.msra.mxu0 %v2577
        %2790 = vmatprep.subr.mxu0 %v2586
        %2791 = vmatpush1.msra.mxu0 %v2585
        %2792 = vmatprep.subr.mxu0 %v2594
        %2793 = vmatpush1.msra.mxu0 %v2593
        %2794 = vmatprep.subr.mxu0 %v2602
        %2795 = vmatpush1.msra.mxu0 %v2601
        %2796 = vmatprep.subr.mxu0 %v2610
        %2797 = vmatpush1.msra.mxu0 %v2609
        %2798 = vmatprep.subr.mxu0 %v2618
        %2799 = vmatpush1.msra.mxu0 %v2617
        %2800 = vmatprep.subr.mxu0 %v2626
        %2801 = vmatpush1.msra.mxu0 %v2625
        %2802 = vmatprep.subr.mxu0 %v2634
        %2803 = vmatpush1.msra.mxu0 %v2633
        %2804 = vmatprep.subr.mxu0 %v2642
        %2805 = vmatpush1.msra.mxu0 %v2641
        %2806 = vmatprep.subr.mxu0 %v2650
        %2807 = vmatpush1.msra.mxu0 %v2649
        %2808 = vmatprep.subr.mxu0 %v2658
        %2809 = vmatpush1.msra.mxu0 %v2657
        %2810 = vmatprep.subr.mxu0 %v2666
        %2811 = vmatpush1.msra.mxu0 %v2665
        %2812 = vmatprep.subr.mxu0 %v2674
        %2813 = vmatpush1.msra.mxu0 %v2673
        %2814 = vmatprep.mubr.f32.mxu0 0.0
        %2815 = vmatmul.mubr.f32.gmra.mrb[0].mxu0 0.0
        %v2816 = vpop.f32.mrb[0].mxu0
        %v2817 = vadd.f32 0.0, %v2816
        %v2818 = vpop.f32.mrb[0].mxu0
        %v2819 = vadd.f32 0.0, %v2818
        %2820 = vdwg.mxu0
        %2821 = vmatprep.subr.mxu0 %v2428
        %2822 = vmatpush1.msra.mxu0 %v2427
        %2823 = vmatprep.subr.mxu0 %v2436
        %2824 = vmatpush1.msra.mxu0 %v2435
        %2825 = vmatprep.subr.mxu0 %v2444
        %2826 = vmatpush1.msra.mxu0 %v2443
        %2827 = vmatprep.subr.mxu0 %v2452
        %2828 = vmatpush1.msra.mxu0 %v2451
        %2829 = vmatprep.subr.mxu0 %v2460
        %2830 = vmatpush1.msra.mxu0 %v2459
        %2831 = vmatprep.subr.mxu0 %v2468
        %2832 = vmatpush1.msra.mxu0 %v2467
        %2833 = vmatprep.subr.mxu0 %v2476
        %2834 = vmatpush1.msra.mxu0 %v2475
        %2835 = vmatprep.subr.mxu0 %v2484
        %2836 = vmatpush1.msra.mxu0 %v2483
        %2837 = vmatprep.subr.mxu0 %v2492
        %2838 = vmatpush1.msra.mxu0 %v2491
        %2839 = vmatprep.subr.mxu0 %v2500
        %2840 = vmatpush1.msra.mxu0 %v2499
        %2841 = vmatprep.subr.mxu0 %v2508
        %2842 = vmatpush1.msra.mxu0 %v2507
        %2843 = vmatprep.subr.mxu0 %v2516
        %2844 = vmatpush1.msra.mxu0 %v2515
        %2845 = vmatprep.subr.mxu0 %v2524
        %2846 = vmatpush1.msra.mxu0 %v2523
        %2847 = vmatprep.subr.mxu0 %v2532
        %2848 = vmatpush1.msra.mxu0 %v2531
        %2849 = vmatprep.subr.mxu0 %v2540
        %2850 = vmatpush1.msra.mxu0 %v2539
        %2851 = vmatprep.subr.mxu0 %v2548
        %2852 = vmatpush1.msra.mxu0 %v2547
        %2853 = vmatprep.subr.mxu0 %v2556
        %2854 = vmatpush1.msra.mxu0 %v2555
        %2855 = vmatprep.subr.mxu0 %v2564
        %2856 = vmatpush1.msra.mxu0 %v2563
        %2857 = vmatprep.subr.mxu0 %v2572
        %2858 = vmatpush1.msra.mxu0 %v2571
        %2859 = vmatprep.subr.mxu0 %v2580
        %2860 = vmatpush1.msra.mxu0 %v2579
        %2861 = vmatprep.subr.mxu0 %v2588
        %2862 = vmatpush1.msra.mxu0 %v2587
        %2863 = vmatprep.subr.mxu0 %v2596
        %2864 = vmatpush1.msra.mxu0 %v2595
        %2865 = vmatprep.subr.mxu0 %v2604
        %2866 = vmatpush1.msra.mxu0 %v2603
        %2867 = vmatprep.subr.mxu0 %v2612
        %2868 = vmatpush1.msra.mxu0 %v2611
        %2869 = vmatprep.subr.mxu0 %v2620
        %2870 = vmatpush1.msra.mxu0 %v2619
        %2871 = vmatprep.subr.mxu0 %v2628
        %2872 = vmatpush1.msra.mxu0 %v2627
        %2873 = vmatprep.subr.mxu0 %v2636
        %2874 = vmatpush1.msra.mxu0 %v2635
        %2875 = vmatprep.subr.mxu0 %v2644
        %2876 = vmatpush1.msra.mxu0 %v2643
        %2877 = vmatprep.subr.mxu0 %v2652
        %2878 = vmatpush1.msra.mxu0 %v2651
        %2879 = vmatprep.subr.mxu0 %v2660
        %2880 = vmatpush1.msra.mxu0 %v2659
        %2881 = vmatprep.subr.mxu0 %v2668
        %2882 = vmatpush1.msra.mxu0 %v2667
        %2883 = vmatprep.subr.mxu0 %v2676
        %2884 = vmatpush1.msra.mxu0 %v2675
        %2885 = vmatprep.mubr.f32.mxu0 0.0
        %2886 = vmatmul.mubr.f32.gmra.mrb[0].mxu0 0.0
        %v2887 = vpop.f32.mrb[0].mxu0
        %v2888 = vadd.f32 0.0, %v2887
        %v2889 = vpop.f32.mrb[0].mxu0
        %v2890 = vadd.f32 0.0, %v2889
        %2891 = vdwg.mxu0
        %2892 = vmatprep.subr.mxu0 %v2430
        %2893 = vmatpush1.msra.mxu0 %v2429
        %2894 = vmatprep.subr.mxu0 %v2438
        %2895 = vmatpush1.msra.mxu0 %v2437
        %2896 = vmatprep.subr.mxu0 %v2446
        %2897 = vmatpush1.msra.mxu0 %v2445
        %2898 = vmatprep.subr.mxu0 %v2454
        %2899 = vmatpush1.msra.mxu0 %v2453
        %2900 = vmatprep.subr.mxu0 %v2462
        %2901 = vmatpush1.msra.mxu0 %v2461
        %2902 = vmatprep.subr.mxu0 %v2470
        %2903 = vmatpush1.msra.mxu0 %v2469
        %2904 = vmatprep.subr.mxu0 %v2478
        %2905 = vmatpush1.msra.mxu0 %v2477
        %2906 = vmatprep.subr.mxu0 %v2486
        %2907 = vmatpush1.msra.mxu0 %v2485
        %2908 = vmatprep.subr.mxu0 %v2494
        %2909 = vmatpush1.msra.mxu0 %v2493
        %2910 = vmatprep.subr.mxu0 %v2502
        %2911 = vmatpush1.msra.mxu0 %v2501
        %2912 = vmatprep.subr.mxu0 %v2510
        %2913 = vmatpush1.msra.mxu0 %v2509
        %2914 = vmatprep.subr.mxu0 %v2518
        %2915 = vmatpush1.msra.mxu0 %v2517
        %2916 = vmatprep.subr.mxu0 %v2526
        %2917 = vmatpush1.msra.mxu0 %v2525
        %2918 = vmatprep.subr.mxu0 %v2534
        %2919 = vmatpush1.msra.mxu0 %v2533
        %2920 = vmatprep.subr.mxu0 %v2542
        %2921 = vmatpush1.msra.mxu0 %v2541
        %2922 = vmatprep.subr.mxu0 %v2550
        %2923 = vmatpush1.msra.mxu0 %v2549
        %2924 = vmatprep.subr.mxu0 %v2558
        %2925 = vmatpush1.msra.mxu0 %v2557
        %2926 = vmatprep.subr.mxu0 %v2566
        %2927 = vmatpush1.msra.mxu0 %v2565
        %2928 = vmatprep.subr.mxu0 %v2574
        %2929 = vmatpush1.msra.mxu0 %v2573
        %2930 = vmatprep.subr.mxu0 %v2582
        %2931 = vmatpush1.msra.mxu0 %v2581
        %2932 = vmatprep.subr.mxu0 %v2590
        %2933 = vmatpush1.msra.mxu0 %v2589
        %2934 = vmatprep.subr.mxu0 %v2598
        %2935 = vmatpush1.msra.mxu0 %v2597
        %2936 = vmatprep.subr.mxu0 %v2606
        %2937 = vmatpush1.msra.mxu0 %v2605
        %2938 = vmatprep.subr.mxu0 %v2614
        %2939 = vmatpush1.msra.mxu0 %v2613
        %2940 = vmatprep.subr.mxu0 %v2622
        %2941 = vmatpush1.msra.mxu0 %v2621
        %2942 = vmatprep.subr.mxu0 %v2630
        %2943 = vmatpush1.msra.mxu0 %v2629
        %2944 = vmatprep.subr.mxu0 %v2638
        %2945 = vmatpush1.msra.mxu0 %v2637
        %2946 = vmatprep.subr.mxu0 %v2646
        %2947 = vmatpush1.msra.mxu0 %v2645
        %2948 = vmatprep.subr.mxu0 %v2654
        %2949 = vmatpush1.msra.mxu0 %v2653
        %2950 = vmatprep.subr.mxu0 %v2662
        %2951 = vmatpush1.msra.mxu0 %v2661
        %2952 = vmatprep.subr.mxu0 %v2670
        %2953 = vmatpush1.msra.mxu0 %v2669
        %2954 = vmatprep.subr.mxu0 %v2678
        %2955 = vmatpush1.msra.mxu0 %v2677
        %2956 = vmatprep.mubr.f32.mxu0 0.0
        %2957 = vmatmul.mubr.f32.gmra.mrb[0].mxu0 0.0
        %v2958 = vpop.f32.mrb[0].mxu0
        %v2959 = vadd.f32 0.0, %v2958
        %v2960 = vpop.f32.mrb[0].mxu0
        %v2961 = vadd.f32 0.0, %v2960
        %2962 = vdwg.mxu0
        %v2963 = vadd.f32 %v2363, %v2746
        %v2964 = vadd.f32 %v2364, %v2748
        %v2965 = vadd.f32 %v2365, %v2817
        %v2966 = vadd.f32 %v2366, %v2819
        %v2967 = vadd.f32 %v2419, %v2888
        %v2968 = vadd.f32 %v2420, %v2890
        %v2969 = vadd.f32 %v2421, %v2959
        %v2970 = vadd.f32 %v2422, %v2961
        %v2971 = vxor.u32 %v2963, 2147483648
        %v2972 = vmul.f32 %v2971, 1.442695
        %v2973 = vpow.pop %v2972
        %v2974 = vadd.f32 %v2973, 1.0
        %v2975 = vrcp.pop %v2974
        %v2976 = vmul.f32 1.0, %v2975
        %v2977 = vxor.u32 %v2964, 2147483648
        %v2978 = vmul.f32 %v2977, 1.442695
        %v2979 = vpow.pop %v2978
        %v2980 = vadd.f32 %v2979, 1.0
        %v2981 = vrcp.pop %v2980
        %v2982 = vmul.f32 1.0, %v2981
        %v2983 = vtanh.pop %v2965
        %v2984 = vxor.u32 %v2966, 2147483648
        %v2985 = vmul.f32 %v2984, 1.442695
        %v2986 = vpow.pop %v2985
        %v2987 = vadd.f32 %v2986, 1.0
        %v2988 = vrcp.pop %v2987
        %v2989 = vmul.f32 1.0, %v2988
        %v2990 = vxor.u32 %v2967, 2147483648
        %v2991 = vmul.f32 %v2990, 1.442695
        %v2992 = vpow.pop %v2991
        %v2993 = vadd.f32 %v2992, 1.0
        %v2994 = vrcp.pop %v2993
        %v2995 = vmul.f32 1.0, %v2994
        %v2996 = vxor.u32 %v2968, 2147483648
        %v2997 = vmul.f32 %v2996, 1.442695
        %v2998 = vpow.pop %v2997
        %v2999 = vadd.f32 %v2998, 1.0
        %v3000 = vrcp.pop %v2999
        %v3001 = vmul.f32 1.0, %v3000
        %v3002 = vtanh.pop %v2969
        %v3003 = vxor.u32 %v2970, 2147483648
        %v3004 = vmul.f32 %v3003, 1.442695
        %v3005 = vpow.pop %v3004
        %v3006 = vadd.f32 %v3005, 1.0
        %v3007 = vrcp.pop %v3006
        %v3008 = vmul.f32 1.0, %v3007
        %v3009 = vmul.f32 %v2982, 0.0
        %v3010 = vmul.f32 %v2976, %v2983
        %v3011 = vadd.f32 %v3009, %v3010
        %v3012 = vmul.f32 %v3001, 0.0
        %v3013 = vmul.f32 %v2995, %v3002
        %v3014 = vadd.f32 %v3012, %v3013
        %v3015 = vtanh.pop %v3011
        %v3016 = vmul.f32 %v2989, %v3015
        %v3017 = vtanh.pop %v3014
        %v3018 = vmul.f32 %v3008, %v3017
        %3019 = vmatprep.subr.mxu0 %v2424
        %3020 = vmatpush1.msra.mxu0 %v2423
        %3021 = vmatprep.subr.mxu0 %v2432
        %3022 = vmatpush1.msra.mxu0 %v2431
        %3023 = vmatprep.subr.mxu0 %v2440
        %3024 = vmatpush1.msra.mxu0 %v2439
        %3025 = vmatprep.subr.mxu0 %v2448
        %3026 = vmatpush1.msra.mxu0 %v2447
        %3027 = vmatprep.subr.mxu0 %v2456
        %3028 = vmatpush1.msra.mxu0 %v2455
        %3029 = vmatprep.subr.mxu0 %v2464
        %3030 = vmatpush1.msra.mxu0 %v2463
        %3031 = vmatprep.subr.mxu0 %v2472
        %3032 = vmatpush1.msra.mxu0 %v2471
        %3033 = vmatprep.subr.mxu0 %v2480
        %3034 = vmatpush1.msra.mxu0 %v2479
        %3035 = vmatprep.subr.mxu0 %v2488
        %3036 = vmatpush1.msra.mxu0 %v2487
        %3037 = vmatprep.subr.mxu0 %v2496
        %3038 = vmatpush1.msra.mxu0 %v2495
        %3039 = vmatprep.subr.mxu0 %v2504
        %3040 = vmatpush1.msra.mxu0 %v2503
        %3041 = vmatprep.subr.mxu0 %v2512
        %3042 = vmatpush1.msra.mxu0 %v2511
        %3043 = vmatprep.subr.mxu0 %v2520
        %3044 = vmatpush1.msra.mxu0 %v2519
        %3045 = vmatprep.subr.mxu0 %v2528
        %3046 = vmatpush1.msra.mxu0 %v2527
        %3047 = vmatprep.subr.mxu0 %v2536
        %3048 = vmatpush1.msra.mxu0 %v2535
        %3049 = vmatprep.subr.mxu0 %v2544
        %3050 = vmatpush1.msra.mxu0 %v2543
        %3051 = vmatprep.subr.mxu0 %v2552
        %3052 = vmatpush1.msra.mxu0 %v2551
        %3053 = vmatprep.subr.mxu0 %v2560
        %3054 = vmatpush1.msra.mxu0 %v2559
        %3055 = vmatprep.subr.mxu0 %v2568
        %3056 = vmatpush1.msra.mxu0 %v2567
        %3057 = vmatprep.subr.mxu0 %v2576
        %3058 = vmatpush1.msra.mxu0 %v2575
        %3059 = vmatprep.subr.mxu0 %v2584
        %3060 = vmatpush1.msra.mxu0 %v2583
        %3061 = vmatprep.subr.mxu0 %v2592
        %3062 = vmatpush1.msra.mxu0 %v2591
        %3063 = vmatprep.subr.mxu0 %v2600
        %3064 = vmatpush1.msra.mxu0 %v2599
        %3065 = vmatprep.subr.mxu0 %v2608
        %3066 = vmatpush1.msra.mxu0 %v2607
        %3067 = vmatprep.subr.mxu0 %v2616
        %3068 = vmatpush1.msra.mxu0 %v2615
        %3069 = vmatprep.subr.mxu0 %v2624
        %3070 = vmatpush1.msra.mxu0 %v2623
        %3071 = vmatprep.subr.mxu0 %v2632
        %3072 = vmatpush1.msra.mxu0 %v2631
        %3073 = vmatprep.subr.mxu0 %v2640
        %3074 = vmatpush1.msra.mxu0 %v2639
        %3075 = vmatprep.subr.mxu0 %v2648
        %3076 = vmatpush1.msra.mxu0 %v2647
        %3077 = vmatprep.subr.mxu0 %v2656
        %3078 = vmatpush1.msra.mxu0 %v2655
        %3079 = vmatprep.subr.mxu0 %v2664
        %3080 = vmatpush1.msra.mxu0 %v2663
        %3081 = vmatprep.subr.mxu0 %v2672
        %3082 = vmatpush1.msra.mxu0 %v2671
        %3083 = vmatprep.mubr.f32.mxu0 %v3018
        %3084 = vmatmul.mubr.f32.gmra.mrb[0].mxu0 %v3016
        %v3085 = vpop.f32.mrb[0].mxu0
        %v3086 = vadd.f32 0.0, %v3085
        %v3087 = vpop.f32.mrb[0].mxu0
        %v3088 = vadd.f32 0.0, %v3087
        %3089 = vdwg.mxu0
        %3090 = vmatprep.subr.mxu0 %v2426
        %3091 = vmatpush1.msra.mxu0 %v2425
        %3092 = vmatprep.subr.mxu0 %v2434
        %3093 = vmatpush1.msra.mxu0 %v2433
        %3094 = vmatprep.subr.mxu0 %v2442
        %3095 = vmatpush1.msra.mxu0 %v2441
        %3096 = vmatprep.subr.mxu0 %v2450
        %3097 = vmatpush1.msra.mxu0 %v2449
        %3098 = vmatprep.subr.mxu0 %v2458
        %3099 = vmatpush1.msra.mxu0 %v2457
        %3100 = vmatprep.subr.mxu0 %v2466
        %3101 = vmatpush1.msra.mxu0 %v2465
        %3102 = vmatprep.subr.mxu0 %v2474
        %3103 = vmatpush1.msra.mxu0 %v2473
        %3104 = vmatprep.subr.mxu0 %v2482
        %3105 = vmatpush1.msra.mxu0 %v2481
        %3106 = vmatprep.subr.mxu0 %v2490
        %3107 = vmatpush1.msra.mxu0 %v2489
        %3108 = vmatprep.subr.mxu0 %v2498
        %3109 = vmatpush1.msra.mxu0 %v2497
        %3110 = vmatprep.subr.mxu0 %v2506
        %3111 = vmatpush1.msra.mxu0 %v2505
        %3112 = vmatprep.subr.mxu0 %v2514
        %3113 = vmatpush1.msra.mxu0 %v2513
        %3114 = vmatprep.subr.mxu0 %v2522
        %3115 = vmatpush1.msra.mxu0 %v2521
        %3116 = vmatprep.subr.mxu0 %v2530
        %3117 = vmatpush1.msra.mxu0 %v2529
        %3118 = vmatprep.subr.mxu0 %v2538
        %3119 = vmatpush1.msra.mxu0 %v2537
        %3120 = vmatprep.subr.mxu0 %v2546
        %3121 = vmatpush1.msra.mxu0 %v2545
        %3122 = vmatprep.subr.mxu0 %v2554
        %3123 = vmatpush1.msra.mxu0 %v2553
        %3124 = vmatprep.subr.mxu0 %v2562
        %3125 = vmatpush1.msra.mxu0 %v2561
        %3126 = vmatprep.subr.mxu0 %v2570
        %3127 = vmatpush1.msra.mxu0 %v2569
        %3128 = vmatprep.subr.mxu0 %v2578
        %3129 = vmatpush1.msra.mxu0 %v2577
        %3130 = vmatprep.subr.mxu0 %v2586
        %3131 = vmatpush1.msra.mxu0 %v2585
        %3132 = vmatprep.subr.mxu0 %v2594
        %3133 = vmatpush1.msra.mxu0 %v2593
        %3134 = vmatprep.subr.mxu0 %v2602
        %3135 = vmatpush1.msra.mxu0 %v2601
        %3136 = vmatprep.subr.mxu0 %v2610
        %3137 = vmatpush1.msra.mxu0 %v2609
        %3138 = vmatprep.subr.mxu0 %v2618
        %3139 = vmatpush1.msra.mxu0 %v2617
        %3140 = vmatprep.subr.mxu0 %v2626
        %3141 = vmatpush1.msra.mxu0 %v2625
        %3142 = vmatprep.subr.mxu0 %v2634
        %3143 = vmatpush1.msra.mxu0 %v2633
        %3144 = vmatprep.subr.mxu0 %v2642
        %3145 = vmatpush1.msra.mxu0 %v2641
        %3146 = vmatprep.subr.mxu0 %v2650
        %3147 = vmatpush1.msra.mxu0 %v2649
        %3148 = vmatprep.subr.mxu0 %v2658
        %3149 = vmatpush1.msra.mxu0 %v2657
        %3150 = vmatprep.subr.mxu0 %v2666
        %3151 = vmatpush1.msra.mxu0 %v2665
        %3152 = vmatprep.subr.mxu0 %v2674
        %3153 = vmatpush1.msra.mxu0 %v2673
        %3154 = vmatprep.mubr.f32.mxu0 %v3018
        %3155 = vmatmul.mubr.f32.gmra.mrb[0].mxu0 %v3016
        %v3156 = vpop.f32.mrb[0].mxu0
        %v3157 = vadd.f32 0.0, %v3156
        %v3158 = vpop.f32.mrb[0].mxu0
        %v3159 = vadd.f32 0.0, %v3158
        %3160 = vdwg.mxu0
        %3161 = vmatprep.subr.mxu0 %v2428
        %3162 = vmatpush1.msra.mxu0 %v2427
        %3163 = vmatprep.subr.mxu0 %v2436
        %3164 = vmatpush1.msra.mxu0 %v2435
        %3165 = vmatprep.subr.mxu0 %v2444
        %3166 = vmatpush1.msra.mxu0 %v2443
        %3167 = vmatprep.subr.mxu0 %v2452
        %3168 = vmatpush1.msra.mxu0 %v2451
        %3169 = vmatprep.subr.mxu0 %v2460
        %3170 = vmatpush1.msra.mxu0 %v2459
        %3171 = vmatprep.subr.mxu0 %v2468
        %3172 = vmatpush1.msra.mxu0 %v2467
        %3173 = vmatprep.subr.mxu0 %v2476
        %3174 = vmatpush1.msra.mxu0 %v2475
        %3175 = vmatprep.subr.mxu0 %v2484
        %3176 = vmatpush1.msra.mxu0 %v2483
        %3177 = vmatprep.subr.mxu0 %v2492
        %3178 = vmatpush1.msra.mxu0 %v2491
        %3179 = vmatprep.subr.mxu0 %v2500
        %3180 = vmatpush1.msra.mxu0 %v2499
        %3181 = vmatprep.subr.mxu0 %v2508
        %3182 = vmatpush1.msra.mxu0 %v2507
        %3183 = vmatprep.subr.mxu0 %v2516
        %3184 = vmatpush1.msra.mxu0 %v2515
        %3185 = vmatprep.subr.mxu0 %v2524
        %3186 = vmatpush1.msra.mxu0 %v2523
        %3187 = vmatprep.subr.mxu0 %v2532
        %3188 = vmatpush1.msra.mxu0 %v2531
        %3189 = vmatprep.subr.mxu0 %v2540
        %3190 = vmatpush1.msra.mxu0 %v2539
        %3191 = vmatprep.subr.mxu0 %v2548
        %3192 = vmatpush1.msra.mxu0 %v2547
        %3193 = vmatprep.subr.mxu0 %v2556
        %3194 = vmatpush1.msra.mxu0 %v2555
        %3195 = vmatprep.subr.mxu0 %v2564
        %3196 = vmatpush1.msra.mxu0 %v2563
        %3197 = vmatprep.subr.mxu0 %v2572
        %3198 = vmatpush1.msra.mxu0 %v2571
        %3199 = vmatprep.subr.mxu0 %v2580
        %3200 = vmatpush1.msra.mxu0 %v2579
        %3201 = vmatprep.subr.mxu0 %v2588
        %3202 = vmatpush1.msra.mxu0 %v2587
        %3203 = vmatprep.subr.mxu0 %v2596
        %3204 = vmatpush1.msra.mxu0 %v2595
        %3205 = vmatprep.subr.mxu0 %v2604
        %3206 = vmatpush1.msra.mxu0 %v2603
        %3207 = vmatprep.subr.mxu0 %v2612
        %3208 = vmatpush1.msra.mxu0 %v2611
        %3209 = vmatprep.subr.mxu0 %v2620
        %3210 = vmatpush1.msra.mxu0 %v2619
        %3211 = vmatprep.subr.mxu0 %v2628
        %3212 = vmatpush1.msra.mxu0 %v2627
        %3213 = vmatprep.subr.mxu0 %v2636
        %3214 = vmatpush1.msra.mxu0 %v2635
        %3215 = vmatprep.subr.mxu0 %v2644
        %3216 = vmatpush1.msra.mxu0 %v2643
        %3217 = vmatprep.subr.mxu0 %v2652
        %3218 = vmatpush1.msra.mxu0 %v2651
        %3219 = vmatprep.subr.mxu0 %v2660
        %3220 = vmatpush1.msra.mxu0 %v2659
        %3221 = vmatprep.subr.mxu0 %v2668
        %3222 = vmatpush1.msra.mxu0 %v2667
        %3223 = vmatprep.subr.mxu0 %v2676
        %3224 = vmatpush1.msra.mxu0 %v2675
        %3225 = vmatprep.mubr.f32.mxu0 %v3018
        %3226 = vmatmul.mubr.f32.gmra.mrb[0].mxu0 %v3016
        %v3227 = vpop.f32.mrb[0].mxu0
        %v3228 = vadd.f32 0.0, %v3227
        %v3229 = vpop.f32.mrb[0].mxu0
        %v3230 = vadd.f32 0.0, %v3229
        %3231 = vdwg.mxu0
        %3232 = vmatprep.subr.mxu0 %v2430
        %3233 = vmatpush1.msra.mxu0 %v2429
        %3234 = vmatprep.subr.mxu0 %v2438
        %3235 = vmatpush1.msra.mxu0 %v2437
        %3236 = vmatprep.subr.mxu0 %v2446
        %3237 = vmatpush1.msra.mxu0 %v2445
        %3238 = vmatprep.subr.mxu0 %v2454
        %3239 = vmatpush1.msra.mxu0 %v2453
        %3240 = vmatprep.subr.mxu0 %v2462
        %3241 = vmatpush1.msra.mxu0 %v2461
        %3242 = vmatprep.subr.mxu0 %v2470
        %3243 = vmatpush1.msra.mxu0 %v2469
        %3244 = vmatprep.subr.mxu0 %v2478
        %3245 = vmatpush1.msra.mxu0 %v2477
        %3246 = vmatprep.subr.mxu0 %v2486
        %3247 = vmatpush1.msra.mxu0 %v2485
        %3248 = vmatprep.subr.mxu0 %v2494
        %3249 = vmatpush1.msra.mxu0 %v2493
        %3250 = vmatprep.subr.mxu0 %v2502
        %3251 = vmatpush1.msra.mxu0 %v2501
        %3252 = vmatprep.subr.mxu0 %v2510
        %3253 = vmatpush1.msra.mxu0 %v2509
        %3254 = vmatprep.subr.mxu0 %v2518
        %3255 = vmatpush1.msra.mxu0 %v2517
        %3256 = vmatprep.subr.mxu0 %v2526
        %3257 = vmatpush1.msra.mxu0 %v2525
        %3258 = vmatprep.subr.mxu0 %v2534
        %3259 = vmatpush1.msra.mxu0 %v2533
        %3260 = vmatprep.subr.mxu0 %v2542
        %3261 = vmatpush1.msra.mxu0 %v2541
        %3262 = vmatprep.subr.mxu0 %v2550
        %3263 = vmatpush1.msra.mxu0 %v2549
        %3264 = vmatprep.subr.mxu0 %v2558
        %3265 = vmatpush1.msra.mxu0 %v2557
        %3266 = vmatprep.subr.mxu0 %v2566
        %3267 = vmatpush1.msra.mxu0 %v2565
        %3268 = vmatprep.subr.mxu0 %v2574
        %3269 = vmatpush1.msra.mxu0 %v2573
        %3270 = vmatprep.subr.mxu0 %v2582
        %3271 = vmatpush1.msra.mxu0 %v2581
        %3272 = vmatprep.subr.mxu0 %v2590
        %3273 = vmatpush1.msra.mxu0 %v2589
        %3274 = vmatprep.subr.mxu0 %v2598
        %3275 = vmatpush1.msra.mxu0 %v2597
        %3276 = vmatprep.subr.mxu0 %v2606
        %3277 = vmatpush1.msra.mxu0 %v2605
        %3278 = vmatprep.subr.mxu0 %v2614
        %3279 = vmatpush1.msra.mxu0 %v2613
        %3280 = vmatprep.subr.mxu0 %v2622
        %3281 = vmatpush1.msra.mxu0 %v2621
        %3282 = vmatprep.subr.mxu0 %v2630
        %3283 = vmatpush1.msra.mxu0 %v2629
        %3284 = vmatprep.subr.mxu0 %v2638
        %3285 = vmatpush1.msra.mxu0 %v2637
        %3286 = vmatprep.subr.mxu0 %v2646
        %3287 = vmatpush1.msra.mxu0 %v2645
        %3288 = vmatprep.subr.mxu0 %v2654
        %3289 = vmatpush1.msra.mxu0 %v2653
        %3290 = vmatprep.subr.mxu0 %v2662
        %3291 = vmatpush1.msra.mxu0 %v2661
        %3292 = vmatprep.subr.mxu0 %v2670
        %3293 = vmatpush1.msra.mxu0 %v2669
        %3294 = vmatprep.subr.mxu0 %v2678
        %3295 = vmatpush1.msra.mxu0 %v2677
        %3296 = vmatprep.mubr.f32.mxu0 %v3018
        %3297 = vmatmul.mubr.f32.gmra.mrb[0].mxu0 %v3016
        %v3298 = vpop.f32.mrb[0].mxu0
        %v3299 = vadd.f32 0.0, %v3298
        %v3300 = vpop.f32.mrb[0].mxu0
        %v3301 = vadd.f32 0.0, %v3300
        %3302 = vdwg.mxu0
        %v3303 = vadd.f32 %v2367, %v3086
        %v3304 = vadd.f32 %v2368, %v3088
        %v3305 = vadd.f32 %v2369, %v3157
        %v3306 = vadd.f32 %v2370, %v3159
        %v3307 = vadd.f32 %v2415, %v3228
        %v3308 = vadd.f32 %v2416, %v3230
        %v3309 = vadd.f32 %v2417, %v3299
        %v3310 = vadd.f32 %v2418, %v3301
        %v3311 = vxor.u32 %v3303, 2147483648
        %v3312 = vmul.f32 %v3311, 1.442695
        %v3313 = vpow.pop %v3312
        %v3314 = vadd.f32 %v3313, 1.0
        %v3315 = vrcp.pop %v3314
        %v3316 = vmul.f32 1.0, %v3315
        %v3317 = vxor.u32 %v3304, 2147483648
        %v3318 = vmul.f32 %v3317, 1.442695
        %v3319 = vpow.pop %v3318
        %v3320 = vadd.f32 %v3319, 1.0
        %v3321 = vrcp.pop %v3320
        %v3322 = vmul.f32 1.0, %v3321
        %v3323 = vtanh.pop %v3305
        %v3324 = vxor.u32 %v3306, 2147483648
        %v3325 = vmul.f32 %v3324, 1.442695
        %v3326 = vpow.pop %v3325
        %v3327 = vadd.f32 %v3326, 1.0
        %v3328 = vrcp.pop %v3327
        %v3329 = vmul.f32 1.0, %v3328
        %v3330 = vxor.u32 %v3307, 2147483648
        %v3331 = vmul.f32 %v3330, 1.442695
        %v3332 = vpow.pop %v3331
        %v3333 = vadd.f32 %v3332, 1.0
        %v3334 = vrcp.pop %v3333
        %v3335 = vmul.f32 1.0, %v3334
        %v3336 = vxor.u32 %v3308, 2147483648
        %v3337 = vmul.f32 %v3336, 1.442695
        %v3338 = vpow.pop %v3337
        %v3339 = vadd.f32 %v3338, 1.0
        %v3340 = vrcp.pop %v3339
        %v3341 = vmul.f32 1.0, %v3340
        %v3342 = vtanh.pop %v3309
        %v3343 = vxor.u32 %v3310, 2147483648
        %v3344 = vmul.f32 %v3343, 1.442695
        %v3345 = vpow.pop %v3344
        %v3346 = vadd.f32 %v3345, 1.0
        %v3347 = vrcp.pop %v3346
        %v3348 = vmul.f32 1.0, %v3347
        %v3349 = vmul.f32 %v3322, %v3011
        %v3350 = vmul.f32 %v3316, %v3323
        %v3351 = vadd.f32 %v3349, %v3350
        %v3352 = vmul.f32 %v3341, %v3014
        %v3353 = vmul.f32 %v3335, %v3342
        %v3354 = vadd.f32 %v3352, %v3353
        %v3355 = vtanh.pop %v3351
        %v3356 = vmul.f32 %v3329, %v3355
        %v3357 = vtanh.pop %v3354
        %v3358 = vmul.f32 %v3348, %v3357
        %3359 = vmatprep.subr.mxu0 %v2424
        %3360 = vmatpush1.msra.mxu0 %v2423
        %3361 = vmatprep.subr.mxu0 %v2432
        %3362 = vmatpush1.msra.mxu0 %v2431
        %3363 = vmatprep.subr.mxu0 %v2440
        %3364 = vmatpush1.msra.mxu0 %v2439
        %3365 = vmatprep.subr.mxu0 %v2448
        %3366 = vmatpush1.msra.mxu0 %v2447
        %3367 = vmatprep.subr.mxu0 %v2456
        %3368 = vmatpush1.msra.mxu0 %v2455
        %3369 = vmatprep.subr.mxu0 %v2464
        %3370 = vmatpush1.msra.mxu0 %v2463
        %3371 = vmatprep.subr.mxu0 %v2472
        %3372 = vmatpush1.msra.mxu0 %v2471
        %3373 = vmatprep.subr.mxu0 %v2480
        %3374 = vmatpush1.msra.mxu0 %v2479
        %3375 = vmatprep.subr.mxu0 %v2488
        %3376 = vmatpush1.msra.mxu0 %v2487
        %3377 = vmatprep.subr.mxu0 %v2496
        %3378 = vmatpush1.msra.mxu0 %v2495
        %3379 = vmatprep.subr.mxu0 %v2504
        %3380 = vmatpush1.msra.mxu0 %v2503
        %3381 = vmatprep.subr.mxu0 %v2512
        %3382 = vmatpush1.msra.mxu0 %v2511
        %3383 = vmatprep.subr.mxu0 %v2520
        %3384 = vmatpush1.msra.mxu0 %v2519
        %3385 = vmatprep.subr.mxu0 %v2528
        %3386 = vmatpush1.msra.mxu0 %v2527
        %3387 = vmatprep.subr.mxu0 %v2536
        %3388 = vmatpush1.msra.mxu0 %v2535
        %3389 = vmatprep.subr.mxu0 %v2544
        %3390 = vmatpush1.msra.mxu0 %v2543
        %3391 = vmatprep.subr.mxu0 %v2552
        %3392 = vmatpush1.msra.mxu0 %v2551
        %3393 = vmatprep.subr.mxu0 %v2560
        %3394 = vmatpush1.msra.mxu0 %v2559
        %3395 = vmatprep.subr.mxu0 %v2568
        %3396 = vmatpush1.msra.mxu0 %v2567
        %3397 = vmatprep.subr.mxu0 %v2576
        %3398 = vmatpush1.msra.mxu0 %v2575
        %3399 = vmatprep.subr.mxu0 %v2584
        %3400 = vmatpush1.msra.mxu0 %v2583
        %3401 = vmatprep.subr.mxu0 %v2592
        %3402 = vmatpush1.msra.mxu0 %v2591
        %3403 = vmatprep.subr.mxu0 %v2600
        %3404 = vmatpush1.msra.mxu0 %v2599
        %3405 = vmatprep.subr.mxu0 %v2608
        %3406 = vmatpush1.msra.mxu0 %v2607
        %3407 = vmatprep.subr.mxu0 %v2616
        %3408 = vmatpush1.msra.mxu0 %v2615
        %3409 = vmatprep.subr.mxu0 %v2624
        %3410 = vmatpush1.msra.mxu0 %v2623
        %3411 = vmatprep.subr.mxu0 %v2632
        %3412 = vmatpush1.msra.mxu0 %v2631
        %3413 = vmatprep.subr.mxu0 %v2640
        %3414 = vmatpush1.msra.mxu0 %v2639
        %3415 = vmatprep.subr.mxu0 %v2648
        %3416 = vmatpush1.msra.mxu0 %v2647
        %3417 = vmatprep.subr.mxu0 %v2656
        %3418 = vmatpush1.msra.mxu0 %v2655
        %3419 = vmatprep.subr.mxu0 %v2664
        %3420 = vmatpush1.msra.mxu0 %v2663
        %3421 = vmatprep.subr.mxu0 %v2672
        %3422 = vmatpush1.msra.mxu0 %v2671
        %3423 = vmatprep.mubr.f32.mxu0 %v3358
        %3424 = vmatmul.mubr.f32.gmra.mrb[0].mxu0 %v3356
        %v3425 = vpop.f32.mrb[0].mxu0
        %v3426 = vadd.f32 0.0, %v3425
        %v3427 = vpop.f32.mrb[0].mxu0
        %v3428 = vadd.f32 0.0, %v3427
        %3429 = vdwg.mxu0
        %3430 = vmatprep.subr.mxu0 %v2426
        %3431 = vmatpush1.msra.mxu0 %v2425
        %3432 = vmatprep.subr.mxu0 %v2434
        %3433 = vmatpush1.msra.mxu0 %v2433
        %3434 = vmatprep.subr.mxu0 %v2442
        %3435 = vmatpush1.msra.mxu0 %v2441
        %3436 = vmatprep.subr.mxu0 %v2450
        %3437 = vmatpush1.msra.mxu0 %v2449
        %3438 = vmatprep.subr.mxu0 %v2458
        %3439 = vmatpush1.msra.mxu0 %v2457
        %3440 = vmatprep.subr.mxu0 %v2466
        %3441 = vmatpush1.msra.mxu0 %v2465
        %3442 = vmatprep.subr.mxu0 %v2474
        %3443 = vmatpush1.msra.mxu0 %v2473
        %3444 = vmatprep.subr.mxu0 %v2482
        %3445 = vmatpush1.msra.mxu0 %v2481
        %3446 = vmatprep.subr.mxu0 %v2490
        %3447 = vmatpush1.msra.mxu0 %v2489
        %3448 = vmatprep.subr.mxu0 %v2498
        %3449 = vmatpush1.msra.mxu0 %v2497
        %3450 = vmatprep.subr.mxu0 %v2506
        %3451 = vmatpush1.msra.mxu0 %v2505
        %3452 = vmatprep.subr.mxu0 %v2514
        %3453 = vmatpush1.msra.mxu0 %v2513
        %3454 = vmatprep.subr.mxu0 %v2522
        %3455 = vmatpush1.msra.mxu0 %v2521
        %3456 = vmatprep.subr.mxu0 %v2530
        %3457 = vmatpush1.msra.mxu0 %v2529
        %3458 = vmatprep.subr.mxu0 %v2538
        %3459 = vmatpush1.msra.mxu0 %v2537
        %3460 = vmatprep.subr.mxu0 %v2546
        %3461 = vmatpush1.msra.mxu0 %v2545
        %3462 = vmatprep.subr.mxu0 %v2554
        %3463 = vmatpush1.msra.mxu0 %v2553
        %3464 = vmatprep.subr.mxu0 %v2562
        %3465 = vmatpush1.msra.mxu0 %v2561
        %3466 = vmatprep.subr.mxu0 %v2570
        %3467 = vmatpush1.msra.mxu0 %v2569
        %3468 = vmatprep.subr.mxu0 %v2578
        %3469 = vmatpush1.msra.mxu0 %v2577
        %3470 = vmatprep.subr.mxu0 %v2586
        %3471 = vmatpush1.msra.mxu0 %v2585
        %3472 = vmatprep.subr.mxu0 %v2594
        %3473 = vmatpush1.msra.mxu0 %v2593
        %3474 = vmatprep.subr.mxu0 %v2602
        %3475 = vmatpush1.msra.mxu0 %v2601
        %3476 = vmatprep.subr.mxu0 %v2610
        %3477 = vmatpush1.msra.mxu0 %v2609
        %3478 = vmatprep.subr.mxu0 %v2618
        %3479 = vmatpush1.msra.mxu0 %v2617
        %3480 = vmatprep.subr.mxu0 %v2626
        %3481 = vmatpush1.msra.mxu0 %v2625
        %3482 = vmatprep.subr.mxu0 %v2634
        %3483 = vmatpush1.msra.mxu0 %v2633
        %3484 = vmatprep.subr.mxu0 %v2642
        %3485 = vmatpush1.msra.mxu0 %v2641
        %3486 = vmatprep.subr.mxu0 %v2650
        %3487 = vmatpush1.msra.mxu0 %v2649
        %3488 = vmatprep.subr.mxu0 %v2658
        %3489 = vmatpush1.msra.mxu0 %v2657
        %3490 = vmatprep.subr.mxu0 %v2666
        %3491 = vmatpush1.msra.mxu0 %v2665
        %3492 = vmatprep.subr.mxu0 %v2674
        %3493 = vmatpush1.msra.mxu0 %v2673
        %3494 = vmatprep.mubr.f32.mxu0 %v3358
        %3495 = vmatmul.mubr.f32.gmra.mrb[0].mxu0 %v3356
        %v3496 = vpop.f32.mrb[0].mxu0
        %v3497 = vadd.f32 0.0, %v3496
        %v3498 = vpop.f32.mrb[0].mxu0
        %v3499 = vadd.f32 0.0, %v3498
        %3500 = vdwg.mxu0
        %3501 = vmatprep.subr.mxu0 %v2428
        %3502 = vmatpush1.msra.mxu0 %v2427
        %3503 = vmatprep.subr.mxu0 %v2436
        %3504 = vmatpush1.msra.mxu0 %v2435
        %3505 = vmatprep.subr.mxu0 %v2444
        %3506 = vmatpush1.msra.mxu0 %v2443
        %3507 = vmatprep.subr.mxu0 %v2452
        %3508 = vmatpush1.msra.mxu0 %v2451
        %3509 = vmatprep.subr.mxu0 %v2460
        %3510 = vmatpush1.msra.mxu0 %v2459
        %3511 = vmatprep.subr.mxu0 %v2468
        %3512 = vmatpush1.msra.mxu0 %v2467
        %3513 = vmatprep.subr.mxu0 %v2476
        %3514 = vmatpush1.msra.mxu0 %v2475
        %3515 = vmatprep.subr.mxu0 %v2484
        %3516 = vmatpush1.msra.mxu0 %v2483
        %3517 = vmatprep.subr.mxu0 %v2492
        %3518 = vmatpush1.msra.mxu0 %v2491
        %3519 = vmatprep.subr.mxu0 %v2500
        %3520 = vmatpush1.msra.mxu0 %v2499
        %3521 = vmatprep.subr.mxu0 %v2508
        %3522 = vmatpush1.msra.mxu0 %v2507
        %3523 = vmatprep.subr.mxu0 %v2516
        %3524 = vmatpush1.msra.mxu0 %v2515
        %3525 = vmatprep.subr.mxu0 %v2524
        %3526 = vmatpush1.msra.mxu0 %v2523
        %3527 = vmatprep.subr.mxu0 %v2532
        %3528 = vmatpush1.msra.mxu0 %v2531
        %3529 = vmatprep.subr.mxu0 %v2540
        %3530 = vmatpush1.msra.mxu0 %v2539
        %3531 = vmatprep.subr.mxu0 %v2548
        %3532 = vmatpush1.msra.mxu0 %v2547
        %3533 = vmatprep.subr.mxu0 %v2556
        %3534 = vmatpush1.msra.mxu0 %v2555
        %3535 = vmatprep.subr.mxu0 %v2564
        %3536 = vmatpush1.msra.mxu0 %v2563
        %3537 = vmatprep.subr.mxu0 %v2572
        %3538 = vmatpush1.msra.mxu0 %v2571
        %3539 = vmatprep.subr.mxu0 %v2580
        %3540 = vmatpush1.msra.mxu0 %v2579
        %3541 = vmatprep.subr.mxu0 %v2588
        %3542 = vmatpush1.msra.mxu0 %v2587
        %3543 = vmatprep.subr.mxu0 %v2596
        %3544 = vmatpush1.msra.mxu0 %v2595
        %3545 = vmatprep.subr.mxu0 %v2604
        %3546 = vmatpush1.msra.mxu0 %v2603
        %3547 = vmatprep.subr.mxu0 %v2612
        %3548 = vmatpush1.msra.mxu0 %v2611
        %3549 = vmatprep.subr.mxu0 %v2620
        %3550 = vmatpush1.msra.mxu0 %v2619
        %3551 = vmatprep.subr.mxu0 %v2628
        %3552 = vmatpush1.msra.mxu0 %v2627
        %3553 = vmatprep.subr.mxu0 %v2636
        %3554 = vmatpush1.msra.mxu0 %v2635
        %3555 = vmatprep.subr.mxu0 %v2644
        %3556 = vmatpush1.msra.mxu0 %v2643
        %3557 = vmatprep.subr.mxu0 %v2652
        %3558 = vmatpush1.msra.mxu0 %v2651
        %3559 = vmatprep.subr.mxu0 %v2660
        %3560 = vmatpush1.msra.mxu0 %v2659
        %3561 = vmatprep.subr.mxu0 %v2668
        %3562 = vmatpush1.msra.mxu0 %v2667
        %3563 = vmatprep.subr.mxu0 %v2676
        %3564 = vmatpush1.msra.mxu0 %v2675
        %3565 = vmatprep.mubr.f32.mxu0 %v3358
        %3566 = vmatmul.mubr.f32.gmra.mrb[0].mxu0 %v3356
        %v3567 = vpop.f32.mrb[0].mxu0
        %v3568 = vadd.f32 0.0, %v3567
        %v3569 = vpop.f32.mrb[0].mxu0
        %v3570 = vadd.f32 0.0, %v3569
        %3571 = vdwg.mxu0
        %3572 = vmatprep.subr.mxu0 %v2430
        %3573 = vmatpush1.msra.mxu0 %v2429
        %3574 = vmatprep.subr.mxu0 %v2438
        %3575 = vmatpush1.msra.mxu0 %v2437
        %3576 = vmatprep.subr.mxu0 %v2446
        %3577 = vmatpush1.msra.mxu0 %v2445
        %3578 = vmatprep.subr.mxu0 %v2454
        %3579 = vmatpush1.msra.mxu0 %v2453
        %3580 = vmatprep.subr.mxu0 %v2462
        %3581 = vmatpush1.msra.mxu0 %v2461
        %3582 = vmatprep.subr.mxu0 %v2470
        %3583 = vmatpush1.msra.mxu0 %v2469
        %3584 = vmatprep.subr.mxu0 %v2478
        %3585 = vmatpush1.msra.mxu0 %v2477
        %3586 = vmatprep.subr.mxu0 %v2486
        %3587 = vmatpush1.msra.mxu0 %v2485
        %3588 = vmatprep.subr.mxu0 %v2494
        %3589 = vmatpush1.msra.mxu0 %v2493
        %3590 = vmatprep.subr.mxu0 %v2502
        %3591 = vmatpush1.msra.mxu0 %v2501
        %3592 = vmatprep.subr.mxu0 %v2510
        %3593 = vmatpush1.msra.mxu0 %v2509
        %3594 = vmatprep.subr.mxu0 %v2518
        %3595 = vmatpush1.msra.mxu0 %v2517
        %3596 = vmatprep.subr.mxu0 %v2526
        %3597 = vmatpush1.msra.mxu0 %v2525
        %3598 = vmatprep.subr.mxu0 %v2534
        %3599 = vmatpush1.msra.mxu0 %v2533
        %3600 = vmatprep.subr.mxu0 %v2542
        %3601 = vmatpush1.msra.mxu0 %v2541
        %3602 = vmatprep.subr.mxu0 %v2550
        %3603 = vmatpush1.msra.mxu0 %v2549
        %3604 = vmatprep.subr.mxu0 %v2558
        %3605 = vmatpush1.msra.mxu0 %v2557
        %3606 = vmatprep.subr.mxu0 %v2566
        %3607 = vmatpush1.msra.mxu0 %v2565
        %3608 = vmatprep.subr.mxu0 %v2574
        %3609 = vmatpush1.msra.mxu0 %v2573
        %3610 = vmatprep.subr.mxu0 %v2582
        %3611 = vmatpush1.msra.mxu0 %v2581
        %3612 = vmatprep.subr.mxu0 %v2590
        %3613 = vmatpush1.msra.mxu0 %v2589
        %3614 = vmatprep.subr.mxu0 %v2598
        %3615 = vmatpush1.msra.mxu0 %v2597
        %3616 = vmatprep.subr.mxu0 %v2606
        %3617 = vmatpush1.msra.mxu0 %v2605
        %3618 = vmatprep.subr.mxu0 %v2614
        %3619 = vmatpush1.msra.mxu0 %v2613
        %3620 = vmatprep.subr.mxu0 %v2622
        %3621 = vmatpush1.msra.mxu0 %v2621
        %3622 = vmatprep.subr.mxu0 %v2630
        %3623 = vmatpush1.msra.mxu0 %v2629
        %3624 = vmatprep.subr.mxu0 %v2638
        %3625 = vmatpush1.msra.mxu0 %v2637
        %3626 = vmatprep.subr.mxu0 %v2646
        %3627 = vmatpush1.msra.mxu0 %v2645
        %3628 = vmatprep.subr.mxu0 %v2654
        %3629 = vmatpush1.msra.mxu0 %v2653
        %3630 = vmatprep.subr.mxu0 %v2662
        %3631 = vmatpush1.msra.mxu0 %v2661
        %3632 = vmatprep.subr.mxu0 %v2670
        %3633 = vmatpush1.msra.mxu0 %v2669
        %3634 = vmatprep.subr.mxu0 %v2678
        %3635 = vmatpush1.msra.mxu0 %v2677
        %3636 = vmatprep.mubr.f32.mxu0 %v3358
        %3637 = vmatmul.mubr.f32.gmra.mrb[0].mxu0 %v3356
        %v3638 = vpop.f32.mrb[0].mxu0
        %v3639 = vadd.f32 0.0, %v3638
        %v3640 = vpop.f32.mrb[0].mxu0
        %v3641 = vadd.f32 0.0, %v3640
        %3642 = vdwg.mxu0
        %v3643 = vadd.f32 %v2371, %v3426
        %v3644 = vadd.f32 %v2372, %v3428
        %v3645 = vadd.f32 %v2373, %v3497
        %v3646 = vadd.f32 %v2374, %v3499
        %v3647 = vadd.f32 %v2411, %v3568
        %v3648 = vadd.f32 %v2412, %v3570
        %v3649 = vadd.f32 %v2413, %v3639
        %v3650 = vadd.f32 %v2414, %v3641
        %v3651 = vxor.u32 %v3643, 2147483648
        %v3652 = vmul.f32 %v3651, 1.442695
        %v3653 = vpow.pop %v3652
        %v3654 = vadd.f32 %v3653, 1.0
        %v3655 = vrcp.pop %v3654
        %v3656 = vmul.f32 1.0, %v3655
        %v3657 = vxor.u32 %v3644, 2147483648
        %v3658 = vmul.f32 %v3657, 1.442695
        %v3659 = vpow.pop %v3658
        %v3660 = vadd.f32 %v3659, 1.0
        %v3661 = vrcp.pop %v3660
        %v3662 = vmul.f32 1.0, %v3661
        %v3663 = vtanh.pop %v3645
        %v3664 = vxor.u32 %v3646, 2147483648
        %v3665 = vmul.f32 %v3664, 1.442695
        %v3666 = vpow.pop %v3665
        %v3667 = vadd.f32 %v3666, 1.0
        %v3668 = vrcp.pop %v3667
        %v3669 = vmul.f32 1.0, %v3668
        %v3670 = vxor.u32 %v3647, 2147483648
        %v3671 = vmul.f32 %v3670, 1.442695
        %v3672 = vpow.pop %v3671
        %v3673 = vadd.f32 %v3672, 1.0
        %v3674 = vrcp.pop %v3673
        %v3675 = vmul.f32 1.0, %v3674
        %v3676 = vxor.u32 %v3648, 2147483648
        %v3677 = vmul.f32 %v3676, 1.442695
        %v3678 = vpow.pop %v3677
        %v3679 = vadd.f32 %v3678, 1.0
        %v3680 = vrcp.pop %v3679
        %v3681 = vmul.f32 1.0, %v3680
        %v3682 = vtanh.pop %v3649
        %v3683 = vxor.u32 %v3650, 2147483648
        %v3684 = vmul.f32 %v3683, 1.442695
        %v3685 = vpow.pop %v3684
        %v3686 = vadd.f32 %v3685, 1.0
        %v3687 = vrcp.pop %v3686
        %v3688 = vmul.f32 1.0, %v3687
        %v3689 = vmul.f32 %v3662, %v3351
        %v3690 = vmul.f32 %v3656, %v3663
        %v3691 = vadd.f32 %v3689, %v3690
        %v3692 = vmul.f32 %v3681, %v3354
        %v3693 = vmul.f32 %v3675, %v3682
        %v3694 = vadd.f32 %v3692, %v3693
        %v3695 = vtanh.pop %v3691
        %v3696 = vmul.f32 %v3669, %v3695
        %v3697 = vtanh.pop %v3694
        %v3698 = vmul.f32 %v3688, %v3697
        %3699 = vmatprep.subr.mxu0 %v2424
        %3700 = vmatpush1.msra.mxu0 %v2423
        %3701 = vmatprep.subr.mxu0 %v2432
        %3702 = vmatpush1.msra.mxu0 %v2431
        %3703 = vmatprep.subr.mxu0 %v2440
        %3704 = vmatpush1.msra.mxu0 %v2439
        %3705 = vmatprep.subr.mxu0 %v2448
        %3706 = vmatpush1.msra.mxu0 %v2447
        %3707 = vmatprep.subr.mxu0 %v2456
        %3708 = vmatpush1.msra.mxu0 %v2455
        %3709 = vmatprep.subr.mxu0 %v2464
        %3710 = vmatpush1.msra.mxu0 %v2463
        %3711 = vmatprep.subr.mxu0 %v2472
        %3712 = vmatpush1.msra.mxu0 %v2471
        %3713 = vmatprep.subr.mxu0 %v2480
        %3714 = vmatpush1.msra.mxu0 %v2479
        %3715 = vmatprep.subr.mxu0 %v2488
        %3716 = vmatpush1.msra.mxu0 %v2487
        %3717 = vmatprep.subr.mxu0 %v2496
        %3718 = vmatpush1.msra.mxu0 %v2495
        %3719 = vmatprep.subr.mxu0 %v2504
        %3720 = vmatpush1.msra.mxu0 %v2503
        %3721 = vmatprep.subr.mxu0 %v2512
        %3722 = vmatpush1.msra.mxu0 %v2511
        %3723 = vmatprep.subr.mxu0 %v2520
        %3724 = vmatpush1.msra.mxu0 %v2519
        %3725 = vmatprep.subr.mxu0 %v2528
        %3726 = vmatpush1.msra.mxu0 %v2527
        %3727 = vmatprep.subr.mxu0 %v2536
        %3728 = vmatpush1.msra.mxu0 %v2535
        %3729 = vmatprep.subr.mxu0 %v2544
        %3730 = vmatpush1.msra.mxu0 %v2543
        %3731 = vmatprep.subr.mxu0 %v2552
        %3732 = vmatpush1.msra.mxu0 %v2551
        %3733 = vmatprep.subr.mxu0 %v2560
        %3734 = vmatpush1.msra.mxu0 %v2559
        %3735 = vmatprep.subr.mxu0 %v2568
        %3736 = vmatpush1.msra.mxu0 %v2567
        %3737 = vmatprep.subr.mxu0 %v2576
        %3738 = vmatpush1.msra.mxu0 %v2575
        %3739 = vmatprep.subr.mxu0 %v2584
        %3740 = vmatpush1.msra.mxu0 %v2583
        %3741 = vmatprep.subr.mxu0 %v2592
        %3742 = vmatpush1.msra.mxu0 %v2591
        %3743 = vmatprep.subr.mxu0 %v2600
        %3744 = vmatpush1.msra.mxu0 %v2599
        %3745 = vmatprep.subr.mxu0 %v2608
        %3746 = vmatpush1.msra.mxu0 %v2607
        %3747 = vmatprep.subr.mxu0 %v2616
        %3748 = vmatpush1.msra.mxu0 %v2615
        %3749 = vmatprep.subr.mxu0 %v2624
        %3750 = vmatpush1.msra.mxu0 %v2623
        %3751 = vmatprep.subr.mxu0 %v2632
        %3752 = vmatpush1.msra.mxu0 %v2631
        %3753 = vmatprep.subr.mxu0 %v2640
        %3754 = vmatpush1.msra.mxu0 %v2639
        %3755 = vmatprep.subr.mxu0 %v2648
        %3756 = vmatpush1.msra.mxu0 %v2647
        %3757 = vmatprep.subr.mxu0 %v2656
        %3758 = vmatpush1.msra.mxu0 %v2655
        %3759 = vmatprep.subr.mxu0 %v2664
        %3760 = vmatpush1.msra.mxu0 %v2663
        %3761 = vmatprep.subr.mxu0 %v2672
        %3762 = vmatpush1.msra.mxu0 %v2671
        %3763 = vmatprep.mubr.f32.mxu0 %v3698
        %3764 = vmatmul.mubr.f32.gmra.mrb[0].mxu0 %v3696
        %v3765 = vpop.f32.mrb[0].mxu0
        %v3766 = vadd.f32 0.0, %v3765
        %v3767 = vpop.f32.mrb[0].mxu0
        %v3768 = vadd.f32 0.0, %v3767
        %3769 = vdwg.mxu0
        %3770 = vmatprep.subr.mxu0 %v2426
        %3771 = vmatpush1.msra.mxu0 %v2425
        %3772 = vmatprep.subr.mxu0 %v2434
        %3773 = vmatpush1.msra.mxu0 %v2433
        %3774 = vmatprep.subr.mxu0 %v2442
        %3775 = vmatpush1.msra.mxu0 %v2441
        %3776 = vmatprep.subr.mxu0 %v2450
        %3777 = vmatpush1.msra.mxu0 %v2449
        %3778 = vmatprep.subr.mxu0 %v2458
        %3779 = vmatpush1.msra.mxu0 %v2457
        %3780 = vmatprep.subr.mxu0 %v2466
        %3781 = vmatpush1.msra.mxu0 %v2465
        %3782 = vmatprep.subr.mxu0 %v2474
        %3783 = vmatpush1.msra.mxu0 %v2473
        %3784 = vmatprep.subr.mxu0 %v2482
        %3785 = vmatpush1.msra.mxu0 %v2481
        %3786 = vmatprep.subr.mxu0 %v2490
        %3787 = vmatpush1.msra.mxu0 %v2489
        %3788 = vmatprep.subr.mxu0 %v2498
        %3789 = vmatpush1.msra.mxu0 %v2497
        %3790 = vmatprep.subr.mxu0 %v2506
        %3791 = vmatpush1.msra.mxu0 %v2505
        %3792 = vmatprep.subr.mxu0 %v2514
        %3793 = vmatpush1.msra.mxu0 %v2513
        %3794 = vmatprep.subr.mxu0 %v2522
        %3795 = vmatpush1.msra.mxu0 %v2521
        %3796 = vmatprep.subr.mxu0 %v2530
        %3797 = vmatpush1.msra.mxu0 %v2529
        %3798 = vmatprep.subr.mxu0 %v2538
        %3799 = vmatpush1.msra.mxu0 %v2537
        %3800 = vmatprep.subr.mxu0 %v2546
        %3801 = vmatpush1.msra.mxu0 %v2545
        %3802 = vmatprep.subr.mxu0 %v2554
        %3803 = vmatpush1.msra.mxu0 %v2553
        %3804 = vmatprep.subr.mxu0 %v2562
        %3805 = vmatpush1.msra.mxu0 %v2561
        %3806 = vmatprep.subr.mxu0 %v2570
        %3807 = vmatpush1.msra.mxu0 %v2569
        %3808 = vmatprep.subr.mxu0 %v2578
        %3809 = vmatpush1.msra.mxu0 %v2577
        %3810 = vmatprep.subr.mxu0 %v2586
        %3811 = vmatpush1.msra.mxu0 %v2585
        %3812 = vmatprep.subr.mxu0 %v2594
        %3813 = vmatpush1.msra.mxu0 %v2593
        %3814 = vmatprep.subr.mxu0 %v2602
        %3815 = vmatpush1.msra.mxu0 %v2601
        %3816 = vmatprep.subr.mxu0 %v2610
        %3817 = vmatpush1.msra.mxu0 %v2609
        %3818 = vmatprep.subr.mxu0 %v2618
        %3819 = vmatpush1.msra.mxu0 %v2617
        %3820 = vmatprep.subr.mxu0 %v2626
        %3821 = vmatpush1.msra.mxu0 %v2625
        %3822 = vmatprep.subr.mxu0 %v2634
        %3823 = vmatpush1.msra.mxu0 %v2633
        %3824 = vmatprep.subr.mxu0 %v2642
        %3825 = vmatpush1.msra.mxu0 %v2641
        %3826 = vmatprep.subr.mxu0 %v2650
        %3827 = vmatpush1.msra.mxu0 %v2649
        %3828 = vmatprep.subr.mxu0 %v2658
        %3829 = vmatpush1.msra.mxu0 %v2657
        %3830 = vmatprep.subr.mxu0 %v2666
        %3831 = vmatpush1.msra.mxu0 %v2665
        %3832 = vmatprep.subr.mxu0 %v2674
        %3833 = vmatpush1.msra.mxu0 %v2673
        %3834 = vmatprep.mubr.f32.mxu0 %v3698
        %3835 = vmatmul.mubr.f32.gmra.mrb[0].mxu0 %v3696
        %v3836 = vpop.f32.mrb[0].mxu0
        %v3837 = vadd.f32 0.0, %v3836
        %v3838 = vpop.f32.mrb[0].mxu0
        %v3839 = vadd.f32 0.0, %v3838
        %3840 = vdwg.mxu0
        %3841 = vmatprep.subr.mxu0 %v2428
        %3842 = vmatpush1.msra.mxu0 %v2427
        %3843 = vmatprep.subr.mxu0 %v2436
        %3844 = vmatpush1.msra.mxu0 %v2435
        %3845 = vmatprep.subr.mxu0 %v2444
        %3846 = vmatpush1.msra.mxu0 %v2443
        %3847 = vmatprep.subr.mxu0 %v2452
        %3848 = vmatpush1.msra.mxu0 %v2451
        %3849 = vmatprep.subr.mxu0 %v2460
        %3850 = vmatpush1.msra.mxu0 %v2459
        %3851 = vmatprep.subr.mxu0 %v2468
        %3852 = vmatpush1.msra.mxu0 %v2467
        %3853 = vmatprep.subr.mxu0 %v2476
        %3854 = vmatpush1.msra.mxu0 %v2475
        %3855 = vmatprep.subr.mxu0 %v2484
        %3856 = vmatpush1.msra.mxu0 %v2483
        %3857 = vmatprep.subr.mxu0 %v2492
        %3858 = vmatpush1.msra.mxu0 %v2491
        %3859 = vmatprep.subr.mxu0 %v2500
        %3860 = vmatpush1.msra.mxu0 %v2499
        %3861 = vmatprep.subr.mxu0 %v2508
        %3862 = vmatpush1.msra.mxu0 %v2507
        %3863 = vmatprep.subr.mxu0 %v2516
        %3864 = vmatpush1.msra.mxu0 %v2515
        %3865 = vmatprep.subr.mxu0 %v2524
        %3866 = vmatpush1.msra.mxu0 %v2523
        %3867 = vmatprep.subr.mxu0 %v2532
        %3868 = vmatpush1.msra.mxu0 %v2531
        %3869 = vmatprep.subr.mxu0 %v2540
        %3870 = vmatpush1.msra.mxu0 %v2539
        %3871 = vmatprep.subr.mxu0 %v2548
        %3872 = vmatpush1.msra.mxu0 %v2547
        %3873 = vmatprep.subr.mxu0 %v2556
        %3874 = vmatpush1.msra.mxu0 %v2555
        %3875 = vmatprep.subr.mxu0 %v2564
        %3876 = vmatpush1.msra.mxu0 %v2563
        %3877 = vmatprep.subr.mxu0 %v2572
        %3878 = vmatpush1.msra.mxu0 %v2571
        %3879 = vmatprep.subr.mxu0 %v2580
        %3880 = vmatpush1.msra.mxu0 %v2579
        %3881 = vmatprep.subr.mxu0 %v2588
        %3882 = vmatpush1.msra.mxu0 %v2587
        %3883 = vmatprep.subr.mxu0 %v2596
        %3884 = vmatpush1.msra.mxu0 %v2595
        %3885 = vmatprep.subr.mxu0 %v2604
        %3886 = vmatpush1.msra.mxu0 %v2603
        %3887 = vmatprep.subr.mxu0 %v2612
        %3888 = vmatpush1.msra.mxu0 %v2611
        %3889 = vmatprep.subr.mxu0 %v2620
        %3890 = vmatpush1.msra.mxu0 %v2619
        %3891 = vmatprep.subr.mxu0 %v2628
        %3892 = vmatpush1.msra.mxu0 %v2627
        %3893 = vmatprep.subr.mxu0 %v2636
        %3894 = vmatpush1.msra.mxu0 %v2635
        %3895 = vmatprep.subr.mxu0 %v2644
        %3896 = vmatpush1.msra.mxu0 %v2643
        %3897 = vmatprep.subr.mxu0 %v2652
        %3898 = vmatpush1.msra.mxu0 %v2651
        %3899 = vmatprep.subr.mxu0 %v2660
        %3900 = vmatpush1.msra.mxu0 %v2659
        %3901 = vmatprep.subr.mxu0 %v2668
        %3902 = vmatpush1.msra.mxu0 %v2667
        %3903 = vmatprep.subr.mxu0 %v2676
        %3904 = vmatpush1.msra.mxu0 %v2675
        %3905 = vmatprep.mubr.f32.mxu0 %v3698
        %3906 = vmatmul.mubr.f32.gmra.mrb[0].mxu0 %v3696
        %v3907 = vpop.f32.mrb[0].mxu0
        %v3908 = vadd.f32 0.0, %v3907
        %v3909 = vpop.f32.mrb[0].mxu0
        %v3910 = vadd.f32 0.0, %v3909
        %3911 = vdwg.mxu0
        %3912 = vmatprep.subr.mxu0 %v2430
        %3913 = vmatpush1.msra.mxu0 %v2429
        %3914 = vmatprep.subr.mxu0 %v2438
        %3915 = vmatpush1.msra.mxu0 %v2437
        %3916 = vmatprep.subr.mxu0 %v2446
        %3917 = vmatpush1.msra.mxu0 %v2445
        %3918 = vmatprep.subr.mxu0 %v2454
        %3919 = vmatpush1.msra.mxu0 %v2453
        %3920 = vmatprep.subr.mxu0 %v2462
        %3921 = vmatpush1.msra.mxu0 %v2461
        %3922 = vmatprep.subr.mxu0 %v2470
        %3923 = vmatpush1.msra.mxu0 %v2469
        %3924 = vmatprep.subr.mxu0 %v2478
        %3925 = vmatpush1.msra.mxu0 %v2477
        %3926 = vmatprep.subr.mxu0 %v2486
        %3927 = vmatpush1.msra.mxu0 %v2485
        %3928 = vmatprep.subr.mxu0 %v2494
        %3929 = vmatpush1.msra.mxu0 %v2493
        %3930 = vmatprep.subr.mxu0 %v2502
        %3931 = vmatpush1.msra.mxu0 %v2501
        %3932 = vmatprep.subr.mxu0 %v2510
        %3933 = vmatpush1.msra.mxu0 %v2509
        %3934 = vmatprep.subr.mxu0 %v2518
        %3935 = vmatpush1.msra.mxu0 %v2517
        %3936 = vmatprep.subr.mxu0 %v2526
        %3937 = vmatpush1.msra.mxu0 %v2525
        %3938 = vmatprep.subr.mxu0 %v2534
        %3939 = vmatpush1.msra.mxu0 %v2533
        %3940 = vmatprep.subr.mxu0 %v2542
        %3941 = vmatpush1.msra.mxu0 %v2541
        %3942 = vmatprep.subr.mxu0 %v2550
        %3943 = vmatpush1.msra.mxu0 %v2549
        %3944 = vmatprep.subr.mxu0 %v2558
        %3945 = vmatpush1.msra.mxu0 %v2557
        %3946 = vmatprep.subr.mxu0 %v2566
        %3947 = vmatpush1.msra.mxu0 %v2565
        %3948 = vmatprep.subr.mxu0 %v2574
        %3949 = vmatpush1.msra.mxu0 %v2573
        %3950 = vmatprep.subr.mxu0 %v2582
        %3951 = vmatpush1.msra.mxu0 %v2581
        %3952 = vmatprep.subr.mxu0 %v2590
        %3953 = vmatpush1.msra.mxu0 %v2589
        %3954 = vmatprep.subr.mxu0 %v2598
        %3955 = vmatpush1.msra.mxu0 %v2597
        %3956 = vmatprep.subr.mxu0 %v2606
        %3957 = vmatpush1.msra.mxu0 %v2605
        %3958 = vmatprep.subr.mxu0 %v2614
        %3959 = vmatpush1.msra.mxu0 %v2613
        %3960 = vmatprep.subr.mxu0 %v2622
        %3961 = vmatpush1.msra.mxu0 %v2621
        %3962 = vmatprep.subr.mxu0 %v2630
        %3963 = vmatpush1.msra.mxu0 %v2629
        %3964 = vmatprep.subr.mxu0 %v2638
        %3965 = vmatpush1.msra.mxu0 %v2637
        %3966 = vmatprep.subr.mxu0 %v2646
        %3967 = vmatpush1.msra.mxu0 %v2645
        %3968 = vmatprep.subr.mxu0 %v2654
        %3969 = vmatpush1.msra.mxu0 %v2653
        %3970 = vmatprep.subr.mxu0 %v2662
        %3971 = vmatpush1.msra.mxu0 %v2661
        %3972 = vmatprep.subr.mxu0 %v2670
        %3973 = vmatpush1.msra.mxu0 %v2669
        %3974 = vmatprep.subr.mxu0 %v2678
        %3975 = vmatpush1.msra.mxu0 %v2677
        %3976 = vmatprep.mubr.f32.mxu0 %v3698
        %3977 = vmatmul.mubr.f32.gmra.mrb[0].mxu0 %v3696
        %v3978 = vpop.f32.mrb[0].mxu0
        %v3979 = vadd.f32 0.0, %v3978
        %v3980 = vpop.f32.mrb[0].mxu0
        %v3981 = vadd.f32 0.0, %v3980
        %3982 = vdwg.mxu0
        %v3983 = vadd.f32 %v2375, %v3766
        %v3984 = vadd.f32 %v2376, %v3768
        %v3985 = vadd.f32 %v2377, %v3837
        %v3986 = vadd.f32 %v2378, %v3839
        %v3987 = vadd.f32 %v2407, %v3908
        %v3988 = vadd.f32 %v2408, %v3910
        %v3989 = vadd.f32 %v2409, %v3979
        %v3990 = vadd.f32 %v2410, %v3981
        %v3991 = vxor.u32 %v3983, 2147483648
        %v3992 = vmul.f32 %v3991, 1.442695
        %v3993 = vpow.pop %v3992
        %v3994 = vadd.f32 %v3993, 1.0
        %v3995 = vrcp.pop %v3994
        %v3996 = vmul.f32 1.0, %v3995
        %v3997 = vxor.u32 %v3984, 2147483648
        %v3998 = vmul.f32 %v3997, 1.442695
        %v3999 = vpow.pop %v3998
        %v4000 = vadd.f32 %v3999, 1.0
        %v4001 = vrcp.pop %v4000
        %v4002 = vmul.f32 1.0, %v4001
        %v4003 = vtanh.pop %v3985
        %v4004 = vxor.u32 %v3986, 2147483648
        %v4005 = vmul.f32 %v4004, 1.442695
        %v4006 = vpow.pop %v4005
        %v4007 = vadd.f32 %v4006, 1.0
        %v4008 = vrcp.pop %v4007
        %v4009 = vmul.f32 1.0, %v4008
        %v4010 = vxor.u32 %v3987, 2147483648
        %v4011 = vmul.f32 %v4010, 1.442695
        %v4012 = vpow.pop %v4011
        %v4013 = vadd.f32 %v4012, 1.0
        %v4014 = vrcp.pop %v4013
        %v4015 = vmul.f32 1.0, %v4014
        %v4016 = vxor.u32 %v3988, 2147483648
        %v4017 = vmul.f32 %v4016, 1.442695
        %v4018 = vpow.pop %v4017
        %v4019 = vadd.f32 %v4018, 1.0
        %v4020 = vrcp.pop %v4019
        %v4021 = vmul.f32 1.0, %v4020
        %v4022 = vtanh.pop %v3989
        %v4023 = vxor.u32 %v3990, 2147483648
        %v4024 = vmul.f32 %v4023, 1.442695
        %v4025 = vpow.pop %v4024
        %v4026 = vadd.f32 %v4025, 1.0
        %v4027 = vrcp.pop %v4026
        %v4028 = vmul.f32 1.0, %v4027
        %v4029 = vmul.f32 %v4002, %v3691
        %v4030 = vmul.f32 %v3996, %v4003
        %v4031 = vadd.f32 %v4029, %v4030
        %v4032 = vmul.f32 %v4021, %v3694
        %v4033 = vmul.f32 %v4015, %v4022
        %v4034 = vadd.f32 %v4032, %v4033
        %v4035 = vtanh.pop %v4031
        %v4036 = vmul.f32 %v4009, %v4035
        %v4037 = vtanh.pop %v4034
        %v4038 = vmul.f32 %v4028, %v4037
        %4039 = vmatprep.subr.mxu0 %v2424
        %4040 = vmatpush1.msra.mxu0 %v2423
        %4041 = vmatprep.subr.mxu0 %v2432
        %4042 = vmatpush1.msra.mxu0 %v2431
        %4043 = vmatprep.subr.mxu0 %v2440
        %4044 = vmatpush1.msra.mxu0 %v2439
        %4045 = vmatprep.subr.mxu0 %v2448
        %4046 = vmatpush1.msra.mxu0 %v2447
        %4047 = vmatprep.subr.mxu0 %v2456
        %4048 = vmatpush1.msra.mxu0 %v2455
        %4049 = vmatprep.subr.mxu0 %v2464
        %4050 = vmatpush1.msra.mxu0 %v2463
        %4051 = vmatprep.subr.mxu0 %v2472
        %4052 = vmatpush1.msra.mxu0 %v2471
        %4053 = vmatprep.subr.mxu0 %v2480
        %4054 = vmatpush1.msra.mxu0 %v2479
        %4055 = vmatprep.subr.mxu0 %v2488
        %4056 = vmatpush1.msra.mxu0 %v2487
        %4057 = vmatprep.subr.mxu0 %v2496
        %4058 = vmatpush1.msra.mxu0 %v2495
        %4059 = vmatprep.subr.mxu0 %v2504
        %4060 = vmatpush1.msra.mxu0 %v2503
        %4061 = vmatprep.subr.mxu0 %v2512
        %4062 = vmatpush1.msra.mxu0 %v2511
        %4063 = vmatprep.subr.mxu0 %v2520
        %4064 = vmatpush1.msra.mxu0 %v2519
        %4065 = vmatprep.subr.mxu0 %v2528
        %4066 = vmatpush1.msra.mxu0 %v2527
        %4067 = vmatprep.subr.mxu0 %v2536
        %4068 = vmatpush1.msra.mxu0 %v2535
        %4069 = vmatprep.subr.mxu0 %v2544
        %4070 = vmatpush1.msra.mxu0 %v2543
        %4071 = vmatprep.subr.mxu0 %v2552
        %4072 = vmatpush1.msra.mxu0 %v2551
        %4073 = vmatprep.subr.mxu0 %v2560
        %4074 = vmatpush1.msra.mxu0 %v2559
        %4075 = vmatprep.subr.mxu0 %v2568
        %4076 = vmatpush1.msra.mxu0 %v2567
        %4077 = vmatprep.subr.mxu0 %v2576
        %4078 = vmatpush1.msra.mxu0 %v2575
        %4079 = vmatprep.subr.mxu0 %v2584
        %4080 = vmatpush1.msra.mxu0 %v2583
        %4081 = vmatprep.subr.mxu0 %v2592
        %4082 = vmatpush1.msra.mxu0 %v2591
        %4083 = vmatprep.subr.mxu0 %v2600
        %4084 = vmatpush1.msra.mxu0 %v2599
        %4085 = vmatprep.subr.mxu0 %v2608
        %4086 = vmatpush1.msra.mxu0 %v2607
        %4087 = vmatprep.subr.mxu0 %v2616
        %4088 = vmatpush1.msra.mxu0 %v2615
        %4089 = vmatprep.subr.mxu0 %v2624
        %4090 = vmatpush1.msra.mxu0 %v2623
        %4091 = vmatprep.subr.mxu0 %v2632
        %4092 = vmatpush1.msra.mxu0 %v2631
        %4093 = vmatprep.subr.mxu0 %v2640
        %4094 = vmatpush1.msra.mxu0 %v2639
        %4095 = vmatprep.subr.mxu0 %v2648
        %4096 = vmatpush1.msra.mxu0 %v2647
        %4097 = vmatprep.subr.mxu0 %v2656
        %4098 = vmatpush1.msra.mxu0 %v2655
        %4099 = vmatprep.subr.mxu0 %v2664
        %4100 = vmatpush1.msra.mxu0 %v2663
        %4101 = vmatprep.subr.mxu0 %v2672
        %4102 = vmatpush1.msra.mxu0 %v2671
        %4103 = vmatprep.mubr.f32.mxu0 %v4038
        %4104 = vmatmul.mubr.f32.gmra.mrb[0].mxu0 %v4036
        %v4105 = vpop.f32.mrb[0].mxu0
        %v4106 = vadd.f32 0.0, %v4105
        %v4107 = vpop.f32.mrb[0].mxu0
        %v4108 = vadd.f32 0.0, %v4107
        %4109 = vdwg.mxu0
        %4110 = vmatprep.subr.mxu0 %v2426
        %4111 = vmatpush1.msra.mxu0 %v2425
        %4112 = vmatprep.subr.mxu0 %v2434
        %4113 = vmatpush1.msra.mxu0 %v2433
        %4114 = vmatprep.subr.mxu0 %v2442
        %4115 = vmatpush1.msra.mxu0 %v2441
        %4116 = vmatprep.subr.mxu0 %v2450
        %4117 = vmatpush1.msra.mxu0 %v2449
        %4118 = vmatprep.subr.mxu0 %v2458
        %4119 = vmatpush1.msra.mxu0 %v2457
        %4120 = vmatprep.subr.mxu0 %v2466
        %4121 = vmatpush1.msra.mxu0 %v2465
        %4122 = vmatprep.subr.mxu0 %v2474
        %4123 = vmatpush1.msra.mxu0 %v2473
        %4124 = vmatprep.subr.mxu0 %v2482
        %4125 = vmatpush1.msra.mxu0 %v2481
        %4126 = vmatprep.subr.mxu0 %v2490
        %4127 = vmatpush1.msra.mxu0 %v2489
        %4128 = vmatprep.subr.mxu0 %v2498
        %4129 = vmatpush1.msra.mxu0 %v2497
        %4130 = vmatprep.subr.mxu0 %v2506
        %4131 = vmatpush1.msra.mxu0 %v2505
        %4132 = vmatprep.subr.mxu0 %v2514
        %4133 = vmatpush1.msra.mxu0 %v2513
        %4134 = vmatprep.subr.mxu0 %v2522
        %4135 = vmatpush1.msra.mxu0 %v2521
        %4136 = vmatprep.subr.mxu0 %v2530
        %4137 = vmatpush1.msra.mxu0 %v2529
        %4138 = vmatprep.subr.mxu0 %v2538
        %4139 = vmatpush1.msra.mxu0 %v2537
        %4140 = vmatprep.subr.mxu0 %v2546
        %4141 = vmatpush1.msra.mxu0 %v2545
        %4142 = vmatprep.subr.mxu0 %v2554
        %4143 = vmatpush1.msra.mxu0 %v2553
        %4144 = vmatprep.subr.mxu0 %v2562
        %4145 = vmatpush1.msra.mxu0 %v2561
        %4146 = vmatprep.subr.mxu0 %v2570
        %4147 = vmatpush1.msra.mxu0 %v2569
        %4148 = vmatprep.subr.mxu0 %v2578
        %4149 = vmatpush1.msra.mxu0 %v2577
        %4150 = vmatprep.subr.mxu0 %v2586
        %4151 = vmatpush1.msra.mxu0 %v2585
        %4152 = vmatprep.subr.mxu0 %v2594
        %4153 = vmatpush1.msra.mxu0 %v2593
        %4154 = vmatprep.subr.mxu0 %v2602
        %4155 = vmatpush1.msra.mxu0 %v2601
        %4156 = vmatprep.subr.mxu0 %v2610
        %4157 = vmatpush1.msra.mxu0 %v2609
        %4158 = vmatprep.subr.mxu0 %v2618
        %4159 = vmatpush1.msra.mxu0 %v2617
        %4160 = vmatprep.subr.mxu0 %v2626
        %4161 = vmatpush1.msra.mxu0 %v2625
        %4162 = vmatprep.subr.mxu0 %v2634
        %4163 = vmatpush1.msra.mxu0 %v2633
        %4164 = vmatprep.subr.mxu0 %v2642
        %4165 = vmatpush1.msra.mxu0 %v2641
        %4166 = vmatprep.subr.mxu0 %v2650
        %4167 = vmatpush1.msra.mxu0 %v2649
        %4168 = vmatprep.subr.mxu0 %v2658
        %4169 = vmatpush1.msra.mxu0 %v2657
        %4170 = vmatprep.subr.mxu0 %v2666
        %4171 = vmatpush1.msra.mxu0 %v2665
        %4172 = vmatprep.subr.mxu0 %v2674
        %4173 = vmatpush1.msra.mxu0 %v2673
        %4174 = vmatprep.mubr.f32.mxu0 %v4038
        %4175 = vmatmul.mubr.f32.gmra.mrb[0].mxu0 %v4036
        %v4176 = vpop.f32.mrb[0].mxu0
        %v4177 = vadd.f32 0.0, %v4176
        %v4178 = vpop.f32.mrb[0].mxu0
        %4179 = vdwg.mxu0
        %4180 = vmatprep.subr.mxu0 %v2428
        %4181 = vmatpush1.msra.mxu0 %v2427
        %4182 = vmatprep.subr.mxu0 %v2436
        %4183 = vmatpush1.msra.mxu0 %v2435
        %4184 = vmatprep.subr.mxu0 %v2444
        %4185 = vmatpush1.msra.mxu0 %v2443
        %4186 = vmatprep.subr.mxu0 %v2452
        %4187 = vmatpush1.msra.mxu0 %v2451
        %4188 = vmatprep.subr.mxu0 %v2460
        %4189 = vmatpush1.msra.mxu0 %v2459
        %4190 = vmatprep.subr.mxu0 %v2468
        %4191 = vmatpush1.msra.mxu0 %v2467
        %4192 = vmatprep.subr.mxu0 %v2476
        %4193 = vmatpush1.msra.mxu0 %v2475
        %4194 = vmatprep.subr.mxu0 %v2484
        %4195 = vmatpush1.msra.mxu0 %v2483
        %4196 = vmatprep.subr.mxu0 %v2492
        %4197 = vmatpush1.msra.mxu0 %v2491
        %4198 = vmatprep.subr.mxu0 %v2500
        %4199 = vmatpush1.msra.mxu0 %v2499
        %4200 = vmatprep.subr.mxu0 %v2508
        %4201 = vmatpush1.msra.mxu0 %v2507
        %4202 = vmatprep.subr.mxu0 %v2516
        %4203 = vmatpush1.msra.mxu0 %v2515
        %4204 = vmatprep.subr.mxu0 %v2524
        %4205 = vmatpush1.msra.mxu0 %v2523
        %4206 = vmatprep.subr.mxu0 %v2532
        %4207 = vmatpush1.msra.mxu0 %v2531
        %4208 = vmatprep.subr.mxu0 %v2540
        %4209 = vmatpush1.msra.mxu0 %v2539
        %4210 = vmatprep.subr.mxu0 %v2548
        %4211 = vmatpush1.msra.mxu0 %v2547
        %4212 = vmatprep.subr.mxu0 %v2556
        %4213 = vmatpush1.msra.mxu0 %v2555
        %4214 = vmatprep.subr.mxu0 %v2564
        %4215 = vmatpush1.msra.mxu0 %v2563
        %4216 = vmatprep.subr.mxu0 %v2572
        %4217 = vmatpush1.msra.mxu0 %v2571
        %4218 = vmatprep.subr.mxu0 %v2580
        %4219 = vmatpush1.msra.mxu0 %v2579
        %4220 = vmatprep.subr.mxu0 %v2588
        %4221 = vmatpush1.msra.mxu0 %v2587
        %4222 = vmatprep.subr.mxu0 %v2596
        %4223 = vmatpush1.msra.mxu0 %v2595
        %4224 = vmatprep.subr.mxu0 %v2604
        %4225 = vmatpush1.msra.mxu0 %v2603
        %4226 = vmatprep.subr.mxu0 %v2612
        %4227 = vmatpush1.msra.mxu0 %v2611
        %4228 = vmatprep.subr.mxu0 %v2620
        %4229 = vmatpush1.msra.mxu0 %v2619
        %4230 = vmatprep.subr.mxu0 %v2628
        %4231 = vmatpush1.msra.mxu0 %v2627
        %4232 = vmatprep.subr.mxu0 %v2636
        %4233 = vmatpush1.msra.mxu0 %v2635
        %4234 = vmatprep.subr.mxu0 %v2644
        %4235 = vmatpush1.msra.mxu0 %v2643
        %4236 = vmatprep.subr.mxu0 %v2652
        %4237 = vmatpush1.msra.mxu0 %v2651
        %4238 = vmatprep.subr.mxu0 %v2660
        %4239 = vmatpush1.msra.mxu0 %v2659
        %4240 = vmatprep.subr.mxu0 %v2668
        %4241 = vmatpush1.msra.mxu0 %v2667
        %4242 = vmatprep.subr.mxu0 %v2676
        %4243 = vmatpush1.msra.mxu0 %v2675
        %4244 = vmatprep.mubr.f32.mxu0 %v4038
        %4245 = vmatmul.mubr.f32.gmra.mrb[0].mxu0 %v4036
        %v4246 = vpop.f32.mrb[0].mxu0
        %v4247 = vadd.f32 0.0, %v4246
        %v4248 = vpop.f32.mrb[0].mxu0
        %v4249 = vadd.f32 0.0, %v4248
        %4250 = vdwg.mxu0
        %4251 = vmatprep.subr.mxu0 %v2430
        %4252 = vmatpush1.msra.mxu0 %v2429
        %4253 = vmatprep.subr.mxu0 %v2438
        %4254 = vmatpush1.msra.mxu0 %v2437
        %4255 = vmatprep.subr.mxu0 %v2446
        %4256 = vmatpush1.msra.mxu0 %v2445
        %4257 = vmatprep.subr.mxu0 %v2454
        %4258 = vmatpush1.msra.mxu0 %v2453
        %4259 = vmatprep.subr.mxu0 %v2462
        %4260 = vmatpush1.msra.mxu0 %v2461
        %4261 = vmatprep.subr.mxu0 %v2470
        %4262 = vmatpush1.msra.mxu0 %v2469
        %4263 = vmatprep.subr.mxu0 %v2478
        %4264 = vmatpush1.msra.mxu0 %v2477
        %4265 = vmatprep.subr.mxu0 %v2486
        %4266 = vmatpush1.msra.mxu0 %v2485
        %4267 = vmatprep.subr.mxu0 %v2494
        %4268 = vmatpush1.msra.mxu0 %v2493
        %4269 = vmatprep.subr.mxu0 %v2502
        %4270 = vmatpush1.msra.mxu0 %v2501
        %4271 = vmatprep.subr.mxu0 %v2510
        %4272 = vmatpush1.msra.mxu0 %v2509
        %4273 = vmatprep.subr.mxu0 %v2518
        %4274 = vmatpush1.msra.mxu0 %v2517
        %4275 = vmatprep.subr.mxu0 %v2526
        %4276 = vmatpush1.msra.mxu0 %v2525
        %4277 = vmatprep.subr.mxu0 %v2534
        %4278 = vmatpush1.msra.mxu0 %v2533
        %4279 = vmatprep.subr.mxu0 %v2542
        %4280 = vmatpush1.msra.mxu0 %v2541
        %4281 = vmatprep.subr.mxu0 %v2550
        %4282 = vmatpush1.msra.mxu0 %v2549
        %4283 = vmatprep.subr.mxu0 %v2558
        %4284 = vmatpush1.msra.mxu0 %v2557
        %4285 = vmatprep.subr.mxu0 %v2566
        %4286 = vmatpush1.msra.mxu0 %v2565
        %4287 = vmatprep.subr.mxu0 %v2574
        %4288 = vmatpush1.msra.mxu0 %v2573
        %4289 = vmatprep.subr.mxu0 %v2582
        %4290 = vmatpush1.msra.mxu0 %v2581
        %4291 = vmatprep.subr.mxu0 %v2590
        %4292 = vmatpush1.msra.mxu0 %v2589
        %4293 = vmatprep.subr.mxu0 %v2598
        %4294 = vmatpush1.msra.mxu0 %v2597
        %4295 = vmatprep.subr.mxu0 %v2606
        %4296 = vmatpush1.msra.mxu0 %v2605
        %4297 = vmatprep.subr.mxu0 %v2614
        %4298 = vmatpush1.msra.mxu0 %v2613
        %4299 = vmatprep.subr.mxu0 %v2622
        %4300 = vmatpush1.msra.mxu0 %v2621
        %4301 = vmatprep.subr.mxu0 %v2630
        %4302 = vmatpush1.msra.mxu0 %v2629
        %4303 = vmatprep.subr.mxu0 %v2638
        %4304 = vmatpush1.msra.mxu0 %v2637
        %4305 = vmatprep.subr.mxu0 %v2646
        %4306 = vmatpush1.msra.mxu0 %v2645
        %4307 = vmatprep.subr.mxu0 %v2654
        %4308 = vmatpush1.msra.mxu0 %v2653
        %4309 = vmatprep.subr.mxu0 %v2662
        %4310 = vmatpush1.msra.mxu0 %v2661
        %4311 = vmatprep.subr.mxu0 %v2670
        %4312 = vmatpush1.msra.mxu0 %v2669
        %4313 = vmatprep.subr.mxu0 %v2678
        %4314 = vmatpush1.msra.mxu0 %v2677
        %4315 = vmatprep.mubr.f32.mxu0 %v4038
        %4316 = vmatmul.mubr.f32.gmra.mrb[0].mxu0 %v4036
        %v4317 = vpop.f32.mrb[0].mxu0
        %v4318 = vadd.f32 0.0, %v4317
        %v4319 = vpop.f32.mrb[0].mxu0
        %4320 = vdwg.mxu0
        %v4321 = vadd.f32 %v2379, %v4106
        %v4322 = vadd.f32 %v2380, %v4108
        %v4323 = vadd.f32 %v2381, %v4177
        %v4324 = vadd.f32 %v2404, %v4247
        %v4325 = vadd.f32 %v2405, %v4249
        %v4326 = vadd.f32 %v2406, %v4318
        %v4327 = vxor.u32 %v4321, 2147483648
        %v4328 = vmul.f32 %v4327, 1.442695
        %v4329 = vpow.pop %v4328
        %v4330 = vadd.f32 %v4329, 1.0
        %v4331 = vrcp.pop %v4330
        %v4332 = vmul.f32 1.0, %v4331
        %v4333 = vxor.u32 %v4322, 2147483648
        %v4334 = vmul.f32 %v4333, 1.442695
        %v4335 = vpow.pop %v4334
        %v4336 = vadd.f32 %v4335, 1.0
        %v4337 = vrcp.pop %v4336
        %v4338 = vmul.f32 1.0, %v4337
        %v4339 = vtanh.pop %v4323
        %v4340 = vxor.u32 %v4324, 2147483648
        %v4341 = vmul.f32 %v4340, 1.442695
        %v4342 = vpow.pop %v4341
        %v4343 = vadd.f32 %v4342, 1.0
        %v4344 = vrcp.pop %v4343
        %v4345 = vmul.f32 1.0, %v4344
        %v4346 = vxor.u32 %v4325, 2147483648
        %v4347 = vmul.f32 %v4346, 1.442695
        %v4348 = vpow.pop %v4347
        %v4349 = vadd.f32 %v4348, 1.0
        %v4350 = vrcp.pop %v4349
        %v4351 = vmul.f32 1.0, %v4350
        %v4352 = vtanh.pop %v4326
        %v4353 = vmul.f32 %v4338, %v4031
        %v4354 = vmul.f32 %v4332, %v4339
        %v4355 = vadd.f32 %v4353, %v4354
        %v4356 = vmul.f32 %v4351, %v4034
        %v4357 = vmul.f32 %v4345, %v4352
        %v4358 = vadd.f32 %v4356, %v4357
        %v4359 = vadd.f32 %v4355, %v4358
        %v4360 = vmul.f32 %v4359, 0.5
        %v4361 = vld [vmem:[#allocation14] sm:$0x1]
        %v4362 = vld [vmem:[#allocation2] sm:$0x1]
        %4364 = vset.pattern.permute.xlu0 0
        %4365 = vperm.xlu0 %4364, %v4362
        %v4366 = vpop.permute.xlu0 %4365
        %v4368 = vlaneseq
        %v4369 = vshrl.u32 %v4368, 7
        %v4370 = vsub.s32 0, %v4369
        %v4371 = vrot.slane %v4366, %v4370
        %4372 = vmatprep.subr.mxu0 0.0
        %4373 = vmatpush1.xpose.msra.mxu0 %v4360
        %4374 = vmatprep.subr.mxu0 0.0
        %4375 = vmatpush1.xpose.msra.mxu0 0.0
        %4376 = vmatprep.subr.mxu0 0.0
        %4377 = vmatpush1.xpose.msra.mxu0 0.0
        %4378 = vmatprep.subr.mxu0 0.0
        %4379 = vmatpush1.xpose.msra.mxu0 0.0
        %4380 = vmatprep.subr.mxu0 0.0
        %4381 = vmatpush1.xpose.msra.mxu0 0.0
        %4382 = vmatprep.subr.mxu0 0.0
        %4383 = vmatpush1.xpose.msra.mxu0 0.0
        %4384 = vmatprep.subr.mxu0 0.0
        %4385 = vmatpush1.xpose.msra.mxu0 0.0
        %4386 = vmatprep.subr.mxu0 0.0
        %4387 = vmatpush1.xpose.msra.mxu0 0.0
        %4388 = vmatprep.subr.mxu0 0.0
        %4389 = vmatpush1.xpose.msra.mxu0 0.0
        %4390 = vmatprep.subr.mxu0 0.0
        %4391 = vmatpush1.xpose.msra.mxu0 0.0
        %4392 = vmatprep.subr.mxu0 0.0
        %4393 = vmatpush1.xpose.msra.mxu0 0.0
        %4394 = vmatprep.subr.mxu0 0.0
        %4395 = vmatpush1.xpose.msra.mxu0 0.0
        %4396 = vmatprep.subr.mxu0 0.0
        %4397 = vmatpush1.xpose.msra.mxu0 0.0
        %4398 = vmatprep.subr.mxu0 0.0
        %4399 = vmatpush1.xpose.msra.mxu0 0.0
        %4400 = vmatprep.subr.mxu0 0.0
        %4401 = vmatpush1.xpose.msra.mxu0 0.0
        %4402 = vmatprep.subr.mxu0 0.0
        %4403 = vmatpush1.xpose.msra.mxu0 0.0
        %4404 = vmatprep.subr.mxu0 0.0
        %4405 = vmatpush1.xpose.msra.mxu0 0.0
        %4406 = vmatprep.subr.mxu0 0.0
        %4407 = vmatpush1.xpose.msra.mxu0 0.0
        %4408 = vmatprep.subr.mxu0 0.0
        %4409 = vmatpush1.xpose.msra.mxu0 0.0
        %4410 = vmatprep.subr.mxu0 0.0
        %4411 = vmatpush1.xpose.msra.mxu0 0.0
        %4412 = vmatprep.subr.mxu0 0.0
        %4413 = vmatpush1.xpose.msra.mxu0 0.0
        %4414 = vmatprep.subr.mxu0 0.0
        %4415 = vmatpush1.xpose.msra.mxu0 0.0
        %4416 = vmatprep.subr.mxu0 0.0
        %4417 = vmatpush1.xpose.msra.mxu0 0.0
        %4418 = vmatprep.subr.mxu0 0.0
        %4419 = vmatpush1.xpose.msra.mxu0 0.0
        %4420 = vmatprep.subr.mxu0 0.0
        %4421 = vmatpush1.xpose.msra.mxu0 0.0
        %4422 = vmatprep.subr.mxu0 0.0
        %4423 = vmatpush1.xpose.msra.mxu0 0.0
        %4424 = vmatprep.subr.mxu0 0.0
        %4425 = vmatpush1.xpose.msra.mxu0 0.0
        %4426 = vmatprep.subr.mxu0 0.0
        %4427 = vmatpush1.xpose.msra.mxu0 0.0
        %4428 = vmatprep.subr.mxu0 0.0
        %4429 = vmatpush1.xpose.msra.mxu0 0.0
        %4430 = vmatprep.subr.mxu0 0.0
        %4431 = vmatpush1.xpose.msra.mxu0 0.0
        %4432 = vmatprep.subr.mxu0 0.0
        %4433 = vmatpush1.xpose.msra.mxu0 0.0
        %4434 = vmatprep.subr.mxu0 0.0
        %4435 = vmatpush1.xpose.msra.mxu0 0.0
        %4436 = vmatprep.mubr.f32.mxu0 0.0
        %4437 = vmatmul.mubr.f32.gmra.mrb[0].mxu0 %v4361
        %v4438 = vpop.f32.mrb[0].mxu0
        %v4439 = vadd.f32 %v4371, %v4438
        %v4440 = vpop.f32.mrb[0].mxu0
        %4441 = vdwg.mxu0
        %vm4442 = vcmask 57344
        %4443 = vst.msk [vmem:[%s519] sm:$0x1] %vm4442, %v4439
        %p4444 = scmp.lt.s32.totalorder %s27, 1
        %s4445 = scalar_select %p4444, %s27, 1
        %s4446 = scalar_lea.vmem %s10, %s4445
        // Predicated region
        $region112: #{_net_pallas_batch.1} parent=78 // pred_check
          %p4447 = pneg %p265
        $region113: #{_net_pallas_batch.1} parent=78 // pred_check_branch
          %4449 = sbr.rel (%p4447) target = $region115
        $region114: #{_net_pallas_batch.1} parent=78 // pred_region
          _
        $region115: #{_net_pallas_batch.1} parent=78 // pred_fallthru
          _
      $region79: #{_net_pallas_batch.1} parent=5 // pred_fallthru
        _
      %p4450 = scmp.le.s32.totalorder 2, %s22
      // Predicated region
      $region116: #{_net_pallas_batch.1} parent=5 // pred_check
        %p4451 = pneg %p4450
      $region117: #{_net_pallas_batch.1} parent=5 // pred_check_branch
        %4453 = sbr.rel (%p4451) target = $region119
      $region118: #{_net_pallas_batch.1} parent=5 // pred_region
        %s4454 = ssub.s32 %s22, 2
        // Predicated region
        $region120: #{_net_pallas_batch.1} parent=118 // pred_check
          %p4455 = pneg %p271
        $region121: #{_net_pallas_batch.1} parent=118 // pred_check_branch
          %4457 = sbr.rel (%p4455) target = $region123
        $region122: #{_net_pallas_batch.1} parent=118 // pred_region
          %p4458 = scmp.lt.s32.totalorder %s28, 1
          %s4459 = scalar_select %p4458, %s28, 1
          %s4460 = scalar_lea.vmem %s10, %s4459
        $region123: #{_net_pallas_batch.1} parent=118 // pred_fallthru
          _
      $region119: #{_net_pallas_batch.1} parent=5 // pred_fallthru
        _
    $region6: #{_net_pallas_batch.1} parent=1 // loop_footer
      %s26 = sadd.s32 1, %s22
    $region7: #{_net_pallas_batch.1} parent=1 // loop_footer_branch
      %21 = sbr.rel target = $region3
    $region8: #{_net_pallas_batch.1} parent=1 // loop_exit
      _
    %4461 = vsyncpa [#allocation5], 1
    %s4462 = scalar_lea.sflag [#allocation5], 1
    %4463 = vsyncpa %s4462, 1
    %4464 = vsyncpa [#allocation7], 1
    %4465 = vsyncpa [#allocation10], 1
    %4466 = vsyncpa [#allocation13], 1

</llo_original>
